<compile_context>
chip_gen: v7x
topology: tpu7x:2x2x1
jax: 0.10.0
libtpu: 0.0.40
codegen_flags: <defaults>
</compile_context>

<pallas_src>
import functools

import jax
import jax.numpy as jnp
import numpy as np
from jax.experimental import pallas as pl
from jax.experimental.pallas import tpu as pltpu

_MIB = 1024 * 1024


# --------------------------------------------------------------------------
# Generation-aware VMEM budgeting (v5e/v6e: 128 MiB physical, v7x: 64 MiB).
# --------------------------------------------------------------------------

@functools.lru_cache(maxsize=1)
def _vmem_budget():
    """Returns (soft working-set budget, vmem_limit_bytes for CompilerParams)."""
    try:
        cap = int(getattr(pltpu.get_tpu_info(), "vmem_capacity_bytes", 0))
    except Exception:
        cap = 0
    if cap <= 0:
        cap = 64 * _MIB                     # conservative default: v7x per-TC VMEM
    # Leave ~32 MiB compiler headroom; cap at 100 MiB.
    limit = min(max(32 * _MIB, cap - 32 * _MIB), 100 * _MIB)
    budget = int(limit * 0.6)               # working-set target for tile sizing
    return budget, limit


def _round_up(v, m):
    return (v + m - 1) // m * m


# --------------------------------------------------------------------------
# Pallas kernels.
# --------------------------------------------------------------------------

def _mm_bias_act_kernel(x_ref, w_ref, b_ref, o_ref, acc_ref, *, apply_relu):
    """acc += x @ w over the K grid axis; bias(+ReLU) epilogue on the last step."""
    k = pl.program_id(1)

    @pl.when(k == 0)
    def _():
        acc_ref[...] = jnp.zeros_like(acc_ref)

    acc_ref[...] += jnp.dot(x_ref[...], w_ref[...],
                            preferred_element_type=jnp.float32)

    @pl.when(k == pl.num_programs(1) - 1)
    def _():
        y = acc_ref[...] + b_ref[...]
        if apply_relu:
            y = jnp.maximum(y, 0.0)
        o_ref[...] = y.astype(o_ref.dtype)


def _mm_bias_T_kernel(w_ref, x_ref, b_ref, o_ref):
    """o = w @ x + b with the large N dim on the 128-lane axis (dense stores)."""
    y = jnp.dot(w_ref[...], x_ref[...], preferred_element_type=jnp.float32)
    o_ref[...] = (y + b_ref[...]).astype(o_ref.dtype)


def _stats_reparam_kernel(x_ref, w_ref, b_ref, eps_ref,
                          mu_ref, lv_ref, z_ref, acc_ref, *, latent):
    """Fused mu/logvar head + reparameterization epilogue (exp -> EUP slot)."""
    k = pl.program_id(1)

    @pl.when(k == 0)
    def _():
        acc_ref[...] = jnp.zeros_like(acc_ref)

    acc_ref[...] += jnp.dot(x_ref[...], w_ref[...],
                            preferred_element_type=jnp.float32)

    @pl.when(k == pl.num_programs(1) - 1)
    def _():
        stats = acc_ref[...] + b_ref[...]
        mu = stats[:, :latent]
        logvar = stats[:, latent:]
        # std = exp(-1.5 * logvar), exactly as in the PyTorch source.
        z = mu + eps_ref[...] * jnp.exp(-1.5 * logvar)
        mu_ref[...] = mu.astype(mu_ref.dtype)
        lv_ref[...] = logvar.astype(lv_ref.dtype)
        z_ref[...] = z.astype(z_ref.dtype)


# --------------------------------------------------------------------------
# Tile-size selection.
# --------------------------------------------------------------------------

def _choose_block_k(k, c_out, budget, min_k_steps=1):
    """Split K when the double-buffered, lane-padded bf16 weight is too big."""
    if k % 128 != 0:
        return k, 1
    c_pad = _round_up(c_out, 128)
    cap = k
    if 2 * k * c_pad * 2 > budget // 2:
        cap = min(cap, max(128, (budget // 3) // (2 * c_pad * 2) // 128 * 128))
    if min_k_steps > 1:
        cap = min(cap, max(128, (k // min_k_steps) // 128 * 128))
    if cap >= k:
        return k, 1
    best, d = 128, 128
    while d <= cap:
        if k % d == 0:
            best = d
        d += 128
    return best, k // best


def _choose_block_n(n_rows, block_k, c_out, out_itemsize, budget, weight_bytes):
    """Row tile: large (amortize per-step overhead), exact divisor (no pad/slice),
    and >= 2 grid steps when N >= 32 so 2-TC chips (v7x) shard the work."""
    k_pad = _round_up(block_k, 128)
    c_pad = _round_up(c_out, 128)
    # double-buffered bf16 input + double-buffered output + f32 accumulator
    per_row = 2 * k_pad * 2 + 2 * c_pad * out_itemsize + c_pad * 4
    cap = max(16, (budget - weight_bytes) // per_row)
    if n_rows >= 32:
        cap = min(cap, _round_up(pl.cdiv(n_rows, 2), 16))
    cap = min(cap, 4096)
    if n_rows <= cap:
        return n_rows, False                   # single full block, no constraints
    best, d = 0, 16
    while d <= cap:
        if n_rows % d == 0:
            best = d
        d += 16
    if best:
        return best, False                     # exact tiling, no pad/slice copies
    return max(16, (cap // 16) * 16), True     # rare fallback: pad + slice


def _choose_block_lanes(n_cols, k, m, budget):
    """Lane tile for the transposed (lane-dense) GEMM.  n_cols % 128 == 0."""
    k_sub = _round_up(k, 16)
    m_sub = _round_up(m, 8)
    per_lane = 2 * k_sub * 2 + 2 * m_sub * 4
    cap = max(128, budget // per_lane // 128 * 128)
    if n_cols >= 256:
        cap = min(cap, _round_up(pl.cdiv(n_cols, 2), 128))   # 2-TC sharding
    cap = min(cap, 32768)
    best, d = 128, 128
    lim = min(cap, n_cols)
    while d <= lim:
        if n_cols % d == 0:
            best = d
        d += 128
    return best


# --------------------------------------------------------------------------
# Matmul wrappers.
# --------------------------------------------------------------------------

def matmul_bias_act(x, w, b_row, *, apply_relu, out_dtype, min_k_steps=1):
    """y = act(x @ w + b).  x:(N,K), w:(K,Cout) bf16, b:(1,Cout) f32."""
    x = x.astype(jnp.bfloat16)
    w = w.astype(jnp.bfloat16)
    n_rows, k = x.shape
    c_out = w.shape[1]
    budget, limit = _vmem_budget()
    block_k, k_steps = _choose_block_k(k, c_out, budget, min_k_steps)
    w_bytes = 2 * _round_up(block_k, 128) * _round_up(c_out, 128) * 2
    block_n, needs_pad = _choose_block_n(
        n_rows, block_k, c_out, np.dtype(out_dtype).itemsize, budget, w_bytes)
    n_padded = _round_up(n_rows, block_n) if needs_pad else n_rows
    if needs_pad:
        x = jnp.pad(x, ((0, n_padded - n_rows), (0, 0)))

    out = pl.pallas_call(
        functools.partial(_mm_bias_act_kernel, apply_relu=apply_relu),
        out_shape=jax.ShapeDtypeStruct((n_padded, c_out), out_dtype),
        grid=(n_padded // block_n, k_steps),
        in_specs=[
            pl.BlockSpec((block_n, block_k), lambda n, kk: (n, kk)),
            pl.BlockSpec((block_k, c_out), lambda n, kk: (kk, 0)),
            pl.BlockSpec((1, c_out), lambda n, kk: (0, 0)),
        ],
        out_specs=pl.BlockSpec((block_n, c_out), lambda n, kk: (n, 0)),
        scratch_shapes=[pltpu.VMEM((block_n, c_out), jnp.float32)],
        compiler_params=pltpu.CompilerParams(
            dimension_semantics=("parallel", "arbitrary"),
            vmem_limit_bytes=limit),
    )(x, w, b_row)
    return out[:n_rows] if needs_pad else out


def matmul_bias_T(w_T, x_T, b_col, *, out_dtype):
    """o = w_T @ x_T + b.  w_T:(M,K), x_T:(K,N) bf16, b:(M,1) f32, N % 128 == 0."""
    m, k = w_T.shape
    n_cols = x_T.shape[1]
    budget, limit = _vmem_budget()
    block_nl = _choose_block_lanes(n_cols, k, m, budget)
    return pl.pallas_call(
        _mm_bias_T_kernel,
        out_shape=jax.ShapeDtypeStruct((m, n_cols), out_dtype),
        grid=(n_cols // block_nl,),
        in_specs=[
            pl.BlockSpec((m, k), lambda n: (0, 0)),
            pl.BlockSpec((k, block_nl), lambda n: (0, n)),
            pl.BlockSpec((m, 1), lambda n: (0, 0)),
        ],
        out_specs=pl.BlockSpec((m, block_nl), lambda n: (0, n)),
        compiler_params=pltpu.CompilerParams(
            dimension_semantics=("parallel",),
            vmem_limit_bytes=limit),
    )(w_T.astype(jnp.bfloat16), x_T.astype(jnp.bfloat16), b_col)


def fc_stats_reparam(flat, w_stats, b_stats, eps, *, latent):
    """Fused encoder head: returns (mu f32, logvar f32, z bf16)."""
    flat = flat.astype(jnp.bfloat16)
    eps = eps.astype(jnp.float32)
    n_rows, k = flat.shape
    c_out = 2 * latent
    budget, limit = _vmem_budget()
    block_k, k_steps = _choose_block_k(k, c_out, budget)
    w_bytes = 2 * _round_up(block_k, 128) * _round_up(c_out, 128) * 2
    block_n, needs_pad = _choose_block_n(n_rows, block_k, c_out, 4, budget, w_bytes)
    n_padded = _round_up(n_rows, block_n) if needs_pad else n_rows
    if needs_pad:
        flat = jnp.pad(flat, ((0, n_padded - n_rows), (0, 0)))
        eps = jnp.pad(eps, ((0, n_padded - n_rows), (0, 0)))

    mu, logvar, z = pl.pallas_call(
        functools.partial(_stats_reparam_kernel, latent=latent),
        out_shape=(jax.ShapeDtypeStruct((n_padded, latent), jnp.float32),
                   jax.ShapeDtypeStruct((n_padded, latent), jnp.float32),
                   jax.ShapeDtypeStruct((n_padded, latent), jnp.bfloat16)),
        grid=(n_padded // block_n, k_steps),
        in_specs=[
            pl.BlockSpec((block_n, block_k), lambda n, kk: (n, kk)),
            pl.BlockSpec((block_k, c_out), lambda n, kk: (kk, 0)),
            pl.BlockSpec((1, c_out), lambda n, kk: (0, 0)),
            pl.BlockSpec((block_n, latent), lambda n, kk: (n, 0)),
        ],
        out_specs=(pl.BlockSpec((block_n, latent), lambda n, kk: (n, 0)),
                   pl.BlockSpec((block_n, latent), lambda n, kk: (n, 0)),
                   pl.BlockSpec((block_n, latent), lambda n, kk: (n, 0))),
        scratch_shapes=[pltpu.VMEM((block_n, c_out), jnp.float32)],
        compiler_params=pltpu.CompilerParams(
            dimension_semantics=("parallel", "arbitrary"),
            vmem_limit_bytes=limit),
    )(flat, w_stats, b_stats, eps)
    if needs_pad:
        mu, logvar, z = mu[:n_rows], logvar[:n_rows], z[:n_rows]
    return mu, logvar, z


# --------------------------------------------------------------------------
# Layer wrappers (tap gather = bf16 XLA glue; hot path = Pallas matmul).
# --------------------------------------------------------------------------

def conv_stride2(x_nhwc, w_mat, b_row):
    """Conv2d(k=3, s=2, p=1) + ReLU on bf16 NHWC input via im2col + one matmul."""
    B, H, W, Ci = x_nhwc.shape
    Ho, Wo = H // 2, W // 2
    xp = jnp.pad(x_nhwc, ((0, 0), (1, 1), (1, 1), (0, 0)))
    taps = [xp[:, kh:kh + H:2, kw:kw + W:2, :]
            for kh in range(3) for kw in range(3)]
    xcol = jnp.concatenate(taps, axis=-1).reshape(B * Ho * Wo, 9 * Ci)
    y = matmul_bias_act(xcol, w_mat, b_row, apply_relu=True,
                        out_dtype=jnp.bfloat16)
    return y.reshape(B, Ho, Wo, -1)


def deconv2x(x_nhwc, w_mat, b_row, *, apply_relu, out_dtype):
    """ConvTranspose2d(k=3, s=2, p=1, op=1), phase formulation, NHWC output."""
    B, H, W, Ci = x_nhwc.shape
    Co = w_mat.shape[1] // 4
    xp = jnp.pad(x_nhwc, ((0, 0), (0, 1), (0, 1), (0, 0)))    # bottom/right halo
    taps = [xp[:, dy:dy + H, dx:dx + W, :]
            for dy in range(2) for dx in range(2)]
    xcol = jnp.concatenate(taps, axis=-1).reshape(B * H * W, 4 * Ci)
    y = matmul_bias_act(xcol, w_mat, b_row, apply_relu=apply_relu,
                        out_dtype=out_dtype)
    y = y.reshape(B, H, W, 2, 2, Co)                           # (..., py, px, co)
    return y.transpose(0, 1, 3, 2, 4, 5).reshape(B, 2 * H, 2 * W, Co)


def deconv2x_final_nchw(x_nhwc, kp):
    """Final deconv, NCHW f32 output.  Lane-dense transposed GEMM when possible."""
    B, H, W, Ci = x_nhwc.shape
    N = B * H * W
    xp = jnp.pad(x_nhwc, ((0, 0), (0, 1), (0, 1), (0, 0)))
    if N % 128 == 0:
        Co = kp["d2_wT"].shape[0] // 4
        taps = jnp.stack([xp[:, dy:dy + H, dx:dx + W, :]
                          for dy in range(2) for dx in range(2)], axis=0)
        x_T = taps.transpose(0, 4, 1, 2, 3).reshape(4 * Ci, N)   # rows=(dy,dx,ci)
        o = matmul_bias_T(kp["d2_wT"], x_T, kp["d2_bT"], out_dtype=jnp.float32)
        y = o.reshape(2, 2, Co, B, H, W)                          # (py,px,co,b,h,w)
        return y.transpose(3, 2, 4, 0, 5, 1).reshape(B, Co, 2 * H, 2 * W)
    # Fallback (masked narrow stores) for odd spatial sizes.
    Co = kp["d2_w"].shape[1] // 4
    taps = [xp[:, dy:dy + H, dx:dx + W, :]
            for dy in range(2) for dx in range(2)]
    xcol = jnp.concatenate(taps, axis=-1).reshape(N, 4 * Ci)
    y = matmul_bias_act(xcol, kp["d2_w"], kp["d2_b"], apply_relu=False,
                        out_dtype=jnp.float32)
    y = y.reshape(B, H, W, 2, 2, Co)
    return y.transpose(0, 5, 1, 3, 2, 4).reshape(B, Co, 2 * H, 2 * W)


# --------------------------------------------------------------------------
# One-time parameter preparation (PyTorch layout -> kernel-ready layout).
# --------------------------------------------------------------------------

def _fold_conv_weight(w):
    """(Co, Ci, 3, 3) -> (9*Ci, Co), matching im2col tap order (kh, kw, ci)."""
    co = w.shape[0]
    return w.transpose(2, 3, 1, 0).reshape(-1, co)


def _fold_deconv_weight(w_t):
    """ConvTranspose weight (Ci, Co, 3, 3) -> phase-folded (4*Ci, 4*Co).

    Rows: 2x2 input neighbourhood (dy, dx) x Ci.  Cols: output phase (py, px) x Co.
    Entry = w_t[:, :, 1-2*dy+py, 1-2*dx+px] when that kernel index is valid, else 0.
    """
    Ci, Co = w_t.shape[0], w_t.shape[1]
    zeros = jnp.zeros((Ci, Co), w_t.dtype)
    rows = []
    for dy in range(2):
        for dx in range(2):
            cols = []
            for py in range(2):
                for px in range(2):
                    kh = 1 - 2 * dy + py
                    kw = 1 - 2 * dx + px
                    if 0 <= kh <= 2 and 0 <= kw <= 2:
                        cols.append(w_t[:, :, kh, kw])
                    else:
                        cols.append(zeros)
            rows.append(jnp.concatenate(cols, axis=1))
    return jnp.concatenate(rows, axis=0)


def prepare_params(p, height, width, n_features, latent_size):
    h8, w8 = height // 8, width // 8
    bf, f32 = jnp.bfloat16, jnp.float32

    def brow(b):
        return b.reshape(1, -1).astype(f32)

    def enc_fc_w(w):
        # (latent, 64*h8*w8) NCHW-ordered columns -> (h8*w8*64, latent) for the
        # NHWC flatten of the encoder feature map.
        return (w.reshape(-1, 64, h8, w8).transpose(2, 3, 1, 0)
                 .reshape(h8 * w8 * 64, -1).astype(bf))

    d2_w = _fold_deconv_weight(p["d2_w"])
    return {
        "c0_w": _fold_conv_weight(p["c0_w"]).astype(bf), "c0_b": brow(p["c0_b"]),
        "c1_w": _fold_conv_weight(p["c1_w"]).astype(bf), "c1_b": brow(p["c1_b"]),
        "c2_w": _fold_conv_weight(p["c2_w"]).astype(bf), "c2_b": brow(p["c2_b"]),
        "fc_stats_w": jnp.concatenate(
            [enc_fc_w(p["fc_mu_w"]), enc_fc_w(p["fc_logvar_w"])], axis=1),
        "fc_stats_b": jnp.concatenate(
            [p["fc_mu_b"], p["fc_logvar_b"]]).reshape(1, -1).astype(f32),
        "dfc_w": (p["dfc_w"].reshape(64, h8, w8, -1).transpose(1, 2, 0, 3)
                   .reshape(h8 * w8 * 64, -1).T.astype(bf)),
        "dfc_b": (p["dfc_b"].reshape(64, h8, w8).transpose(1, 2, 0)
                   .reshape(1, -1).astype(f32)),
        "d0_w": _fold_deconv_weight(p["d0_w"]).astype(bf),
        "d0_b": jnp.tile(p["d0_b"], 4).reshape(1, -1).astype(f32),
        "d1_w": _fold_deconv_weight(p["d1_w"]).astype(bf),
        "d1_b": jnp.tile(p["d1_b"], 4).reshape(1, -1).astype(f32),
        # Final deconv: both layouts (lane-dense transposed GEMM + fallback).
        "d2_w": d2_w.astype(bf),
        "d2_b": jnp.tile(p["d2_b"], 4).reshape(1, -1).astype(f32),
        "d2_wT": d2_w.T.astype(bf),
        "d2_bT": jnp.tile(p["d2_b"], 4).reshape(-1, 1).astype(f32),
    }


# --------------------------------------------------------------------------
# Full VAutoencoder forward (encoder -> reparameterize -> decoder).
# --------------------------------------------------------------------------

def vautoencoder_forward(x_nchw, kp, eps, *, height, width, latent_size):
    B = x_nchw.shape[0]
    h8, w8 = height // 8, width // 8

    # ---- encoder ----
    h = jnp.transpose(x_nchw.astype(jnp.bfloat16), (0, 2, 3, 1))      # NHWC bf16
    h = conv_stride2(h, kp["c0_w"], kp["c0_b"])
    h = conv_stride2(h, kp["c1_w"], kp["c1_b"])
    h = conv_stride2(h, kp["c2_w"], kp["c2_b"])
    flat = h.reshape(B, h8 * w8 * 64)                                 # NHWC flatten
    mu, logvar, z = fc_stats_reparam(flat, kp["fc_stats_w"], kp["fc_stats_b"],
                                     eps, latent=latent_size)

    # ---- decoder ----
    d = matmul_bias_act(z, kp["dfc_w"], kp["dfc_b"], apply_relu=True,
                        out_dtype=jnp.bfloat16)
    d = d.reshape(B, h8, w8, 64)                                      # already NHWC
    d = deconv2x(d, kp["d0_w"], kp["d0_b"], apply_relu=True,
                 out_dtype=jnp.bfloat16)
    d = deconv2x(d, kp["d1_w"], kp["d1_b"], apply_relu=True,
                 out_dtype=jnp.bfloat16)
    recon = deconv2x_final_nchw(d, kp)                                # f32 NCHW
    return recon, mu, logvar


# --------------------------------------------------------------------------
# Parameter init (mimics PyTorch default uniform init) and pure-JAX reference.
# --------------------------------------------------------------------------

def init_params(key, height, width, n_features, latent_size):
    h8, w8 = height // 8, width // 8
    fc_dim = 64 * h8 * w8
    keys = jax.random.split(key, 20)

    def u(k, shape, fan_in):
        bound = 1.0 / np.sqrt(fan_in)
        return jax.random.uniform(k, shape, jnp.float32, -bound, bound)

    return {
        "c0_w": u(keys[0], (16, n_features, 3, 3), n_features * 9),
        "c0_b": u(keys[1], (16,), n_features * 9),
        "c1_w": u(keys[2], (32, 16, 3, 3), 16 * 9),
        "c1_b": u(keys[3], (32,), 16 * 9),
        "c2_w": u(keys[4], (64, 32, 3, 3), 32 * 9),
        "c2_b": u(keys[5], (64,), 32 * 9),
        "fc_mu_w": u(keys[6], (latent_size, fc_dim), fc_dim),
        "fc_mu_b": u(keys[7], (latent_size,), fc_dim),
        "fc_logvar_w": u(keys[8], (latent_size, fc_dim), fc_dim),
        "fc_logvar_b": u(keys[9], (latent_size,), fc_dim),
        "dfc_w": u(keys[10], (fc_dim, latent_size), latent_size),
        "dfc_b": u(keys[11], (fc_dim,), latent_size),
        "d0_w": u(keys[12], (64, 32, 3, 3), 32 * 9),
        "d0_b": u(keys[13], (32,), 32 * 9),
        "d1_w": u(keys[14], (32, 16, 3, 3), 16 * 9),
        "d1_b": u(keys[15], (16,), 16 * 9),
        "d2_w": u(keys[16], (16, n_features, 3, 3), n_features * 9),
        "d2_b": u(keys[17], (n_features,), n_features * 9),
    }


def reference_forward(x_nchw, p, eps, height, width):
    """Pure-JAX reference using the same bf16-input / f32-accumulate numerics."""
    bf = jnp.bfloat16

    def conv(x, w, b):
        y = jax.lax.conv_general_dilated(
            x.astype(bf), w.astype(bf), window_strides=(2, 2),
            padding=((1, 1), (1, 1)),
            dimension_numbers=("NCHW", "OIHW", "NCHW"),
            preferred_element_type=jnp.float32)
        return y + b.reshape(1, -1, 1, 1)

    def deconv(x, w, b):
        w_conv = jnp.flip(w, axis=(2, 3)).transpose(1, 0, 2, 3)
        y = jax.lax.conv_general_dilated(
            x.astype(bf), w_conv.astype(bf), window_strides=(1, 1),
            padding=((1, 2), (1, 2)), lhs_dilation=(2, 2),
            dimension_numbers=("NCHW", "OIHW", "NCHW"),
            preferred_element_type=jnp.float32)
        return y + b.reshape(1, -1, 1, 1)

    def linear(x, w, b):
        return jnp.dot(x.astype(bf), w.T.astype(bf),
                       preferred_element_type=jnp.float32) + b

    B = x_nchw.shape[0]
    h = jax.nn.relu(conv(x_nchw, p["c0_w"], p["c0_b"]))
    h = jax.nn.relu(conv(h, p["c1_w"], p["c1_b"]))
    h = jax.nn.relu(conv(h, p["c2_w"], p["c2_b"]))
    flat = h.reshape(B, -1)
    mu = linear(flat, p["fc_mu_w"], p["fc_mu_b"])
    logvar = linear(flat, p["fc_logvar_w"], p["fc_logvar_b"])
    z = mu + eps * jnp.exp(-1.5 * logvar)      # std = exp(-1.5*logvar), per source
    d = jax.nn.relu(linear(z, p["dfc_w"], p["dfc_b"]))
    d = d.reshape(B, 64, height // 8, width // 8)
    d = jax.nn.relu(deconv(d, p["d0_w"], p["d0_b"]))
    d = jax.nn.relu(deconv(d, p["d1_w"], p["d1_b"]))
    recon = deconv(d, p["d2_w"], p["d2_b"])
    return recon, mu, logvar


if __name__ == "__main__":
    height, width, n_features, latent_size, batch = 16, 16, 4, 32, 2
    key = jax.random.PRNGKey(0)
    kx, kp_key, ke, k1, k2, k3 = jax.random.split(key, 6)
    x = jax.random.normal(kx, (batch, n_features, height, width), jnp.float32)
    eps = jax.random.normal(ke, (batch, latent_size), jnp.float32)
    params = init_params(kp_key, height, width, n_features, latent_size)
    kparams = prepare_params(params, height, width, n_features, latent_size)

    fwd = jax.jit(functools.partial(
        vautoencoder_forward, height=height, width=width, latent_size=latent_size))
    recon, mu, logvar = fwd(x, kparams, eps)
    recon = jax.block_until_ready(recon)

    assert recon.shape == (batch, n_features, height, width), recon.shape
    assert mu.shape == (batch, latent_size) and logvar.shape == (batch, latent_size)

    ref_recon, ref_mu, ref_logvar = reference_forward(x, params, eps, height, width)
    np.testing.assert_allclose(np.asarray(mu), np.asarray(ref_mu), rtol=2e-3, atol=2e-3)
    np.testing.assert_allclose(np.asarray(logvar), np.asarray(ref_logvar),
                               rtol=2e-3, atol=2e-3)
    np.testing.assert_allclose(np.asarray(recon), np.asarray(ref_recon),
                               rtol=2e-3, atol=2e-3)

    # Robustness self-tests for code paths not exercised at this small size:
    # (a) K-tiled accumulation (large FC weights), (b) pad/slice row fallback.
    xa = jax.random.normal(k1, (256, 512), jnp.float32)
    wa = jax.random.normal(k2, (512, 64), jnp.float32) / np.sqrt(512.0)
    ba = jax.random.normal(k3, (1, 64), jnp.float32)
    ya = matmul_bias_act(xa, wa, ba, apply_relu=True, out_dtype=jnp.float32,
                         min_k_steps=4)
    ya_ref = jnp.maximum(
        jnp.dot(xa.astype(jnp.bfloat16), wa.astype(jnp.bfloat16),
                preferred_element_type=jnp.float32) + ba, 0.0)
    np.testing.assert_allclose(np.asarray(ya), np.asarray(ya_ref),
                               rtol=1e-3, atol=1e-2)

    xb, wb, bb = xa[:40, :64], wa[:64, :32], ba[:, :32]
    yb = matmul_bias_act(xb, wb, bb, apply_relu=False, out_dtype=jnp.bfloat16)
    yb_ref = (jnp.dot(xb.astype(jnp.bfloat16), wb.astype(jnp.bfloat16),
                      preferred_element_type=jnp.float32) + bb)
    np.testing.assert_allclose(np.asarray(yb.astype(jnp.float32)),
                               np.asarray(yb_ref), rtol=1e-2, atol=1e-2)

    print("KERNEL_OK")
</pallas_src>

<mosaic_0001>
module attributes {stable_mosaic.version = 11 : i64} {
  func.func @_mm_bias_act_kernel(%arg0: i32, %arg1: i32, %arg2: memref<64x36xbf16, #tpu.memory_space<vmem>>, %arg3: memref<36x16xbf16, #tpu.memory_space<vmem>>, %arg4: memref<1x16xf32, #tpu.memory_space<vmem>>, %arg5: memref<64x16xbf16, #tpu.memory_space<vmem>>, %arg6: memref<64x16xf32, #tpu.memory_space<vmem>>) attributes {dimension_semantics = [#tpu.dimension_semantics<parallel>, #tpu.dimension_semantics<arbitrary>], iteration_bounds = array<i64: 2, 1>, scalar_prefetch = 0 : i64, scratch_operands = 1 : i64, tpu.core_type = #tpu.core_type<tc>, window_params = [{transform_indices = @transform_0, window_bounds = array<i64: 64, 36>}, {transform_indices = @transform_1, window_bounds = array<i64: 36, 16>}, {pipeline_mode = #tpu.pipeline_mode<synchronous>, transform_indices = @transform_2, window_bounds = array<i64: 1, 16>}, {transform_indices = @transform_3, window_bounds = array<i64: 64, 16>}]} {
    %c0_i32 = arith.constant 0 : i32
    %0 = arith.cmpi eq, %arg1, %c0_i32 : i32
    %1 = arith.extui %0 : i1 to i32
    %c0_i32_0 = arith.constant 0 : i32
    %2 = arith.cmpi ne, %1, %c0_i32_0 : i32
    scf.if %2 {
      %cst_10 = arith.constant 0.000000e+00 : f32
      %12 = vector.broadcast %cst_10 : f32 to vector<64x16xf32>
      %c0_11 = arith.constant 0 : index
      %c0_12 = arith.constant 0 : index
      %13 = vector.load %arg6[%c0_11, %c0_12] : memref<64x16xf32, #tpu.memory_space<vmem>>, vector<64x16xf32>
      tpu.vector_store %arg6[%c0_11, %c0_12], %12 {strides = array<i32>} : memref<64x16xf32, #tpu.memory_space<vmem>>, vector<64x16xf32>,
    } else {
    }
    %c0 = arith.constant 0 : index
    %c0_1 = arith.constant 0 : index
    %3 = vector.load %arg6[%c0, %c0_1] : memref<64x16xf32, #tpu.memory_space<vmem>>, vector<64x16xf32>
    %c0_2 = arith.constant 0 : index
    %c0_3 = arith.constant 0 : index
    %4 = vector.load %arg2[%c0_2, %c0_3] : memref<64x36xbf16, #tpu.memory_space<vmem>>, vector<64x36xbf16>
    %c0_4 = arith.constant 0 : index
    %c0_5 = arith.constant 0 : index
    %5 = vector.load %arg3[%c0_4, %c0_5] : memref<36x16xbf16, #tpu.memory_space<vmem>>, vector<36x16xbf16>
    %cst = arith.constant dense<0.000000e+00> : vector<64x16xf32>
    %6 = tpu.matmul %4, %5, %cst {dimension_numbers = #tpu.dot_dimension_numbers<[1], [0], [0], [1], [0, 0, 1, 1], [], []>} : vector<64x36xbf16>, vector<36x16xbf16>, vector<64x16xf32> -> vector<64x16xf32>
    %7 = arith.addf %3, %6 : vector<64x16xf32>
    %c0_6 = arith.constant 0 : index
    %c0_7 = arith.constant 0 : index
    %8 = vector.load %arg6[%c0_6, %c0_7] : memref<64x16xf32, #tpu.memory_space<vmem>>, vector<64x16xf32>
    tpu.vector_store %arg6[%c0_6, %c0_7], %7 {strides = array<i32>} : memref<64x16xf32, #tpu.memory_space<vmem>>, vector<64x16xf32>,
    %c0_i32_8 = arith.constant 0 : i32
    %9 = arith.cmpi eq, %arg1, %c0_i32_8 : i32
    %10 = arith.extui %9 : i1 to i32
    %c0_i32_9 = arith.constant 0 : i32
    %11 = arith.cmpi ne, %10, %c0_i32_9 : i32
    scf.if %11 {
      %c0_10 = arith.constant 0 : index
      %c0_11 = arith.constant 0 : index
      %12 = vector.load %arg6[%c0_10, %c0_11] : memref<64x16xf32, #tpu.memory_space<vmem>>, vector<64x16xf32>
      %c0_12 = arith.constant 0 : index
      %c0_13 = arith.constant 0 : index
      %13 = vector.load %arg4[%c0_12, %c0_13] : memref<1x16xf32, #tpu.memory_space<vmem>>, vector<1x16xf32>
      %14 = vector.broadcast %13 : vector<1x16xf32> to vector<64x16xf32>
      %15 = arith.addf %12, %14 : vector<64x16xf32>
      %cst_14 = arith.constant 0.000000e+00 : f32
      %16 = vector.broadcast %cst_14 : f32 to vector<64x16xf32>
      %17 = arith.maximumf %15, %16 : vector<64x16xf32>
      %18 = arith.truncf %17 : vector<64x16xf32> to vector<64x16xbf16>
      %c0_15 = arith.constant 0 : index
      %c0_16 = arith.constant 0 : index
      %19 = vector.load %arg5[%c0_15, %c0_16] : memref<64x16xbf16, #tpu.memory_space<vmem>>, vector<64x16xbf16>
      tpu.vector_store %arg5[%c0_15, %c0_16], %18 {strides = array<i32>} : memref<64x16xbf16, #tpu.memory_space<vmem>>, vector<64x16xbf16>,
    } else {
    }
    return
  }
  func.func @transform_0(%arg0: i32, %arg1: i32) -> (i32, i32) {
    %c0_i32 = arith.constant 0 : i32
    return %arg0, %arg1 : i32, i32
  }
  func.func @transform_1(%arg0: i32, %arg1: i32) -> (i32, i32) {
    %c0_i32 = arith.constant 0 : i32
    %c0_i32_0 = arith.constant 0 : i32
    return %arg1, %c0_i32 : i32, i32
  }
  func.func @transform_2(%arg0: i32, %arg1: i32) -> (i32, i32) {
    %c0_i32 = arith.constant 0 : i32
    %c0_i32_0 = arith.constant 0 : i32
    %c0_i32_1 = arith.constant 0 : i32
    return %c0_i32, %c0_i32_0 : i32, i32
  }
  func.func @transform_3(%arg0: i32, %arg1: i32) -> (i32, i32) {
    %c0_i32 = arith.constant 0 : i32
    %c0_i32_0 = arith.constant 0 : i32
    return %arg0, %c0_i32 : i32, i32
  }
}

module attributes {stable_mosaic.version = 11 : i64} {
  func.func @_mm_bias_act_kernel(%arg0: i32, %arg1: i32, %arg2: memref<16x144xbf16, #tpu.memory_space<vmem>>, %arg3: memref<144x32xbf16, #tpu.memory_space<vmem>>, %arg4: memref<1x32xf32, #tpu.memory_space<vmem>>, %arg5: memref<16x32xbf16, #tpu.memory_space<vmem>>, %arg6: memref<16x32xf32, #tpu.memory_space<vmem>>) attributes {dimension_semantics = [#tpu.dimension_semantics<parallel>, #tpu.dimension_semantics<arbitrary>], iteration_bounds = array<i64: 2, 1>, scalar_prefetch = 0 : i64, scratch_operands = 1 : i64, tpu.core_type = #tpu.core_type<tc>, window_params = [{transform_indices = @transform_0, window_bounds = array<i64: 16, 144>}, {transform_indices = @transform_1, window_bounds = array<i64: 144, 32>}, {pipeline_mode = #tpu.pipeline_mode<synchronous>, transform_indices = @transform_2, window_bounds = array<i64: 1, 32>}, {transform_indices = @transform_3, window_bounds = array<i64: 16, 32>}]} {
    %c0_i32 = arith.constant 0 : i32
    %0 = arith.cmpi eq, %arg1, %c0_i32 : i32
    %1 = arith.extui %0 : i1 to i32
    %c0_i32_0 = arith.constant 0 : i32
    %2 = arith.cmpi ne, %1, %c0_i32_0 : i32
    scf.if %2 {
      %cst_10 = arith.constant 0.000000e+00 : f32
      %12 = vector.broadcast %cst_10 : f32 to vector<16x32xf32>
      %c0_11 = arith.constant 0 : index
      %c0_12 = arith.constant 0 : index
      %13 = vector.load %arg6[%c0_11, %c0_12] : memref<16x32xf32, #tpu.memory_space<vmem>>, vector<16x32xf32>
      tpu.vector_store %arg6[%c0_11, %c0_12], %12 {strides = array<i32>} : memref<16x32xf32, #tpu.memory_space<vmem>>, vector<16x32xf32>,
    } else {
    }
    %c0 = arith.constant 0 : index
    %c0_1 = arith.constant 0 : index
    %3 = vector.load %arg6[%c0, %c0_1] : memref<16x32xf32, #tpu.memory_space<vmem>>, vector<16x32xf32>
    %c0_2 = arith.constant 0 : index
    %c0_3 = arith.constant 0 : index
    %4 = vector.load %arg2[%c0_2, %c0_3] : memref<16x144xbf16, #tpu.memory_space<vmem>>, vector<16x144xbf16>
    %c0_4 = arith.constant 0 : index
    %c0_5 = arith.constant 0 : index
    %5 = vector.load %arg3[%c0_4, %c0_5] : memref<144x32xbf16, #tpu.memory_space<vmem>>, vector<144x32xbf16>
    %cst = arith.constant dense<0.000000e+00> : vector<16x32xf32>
    %6 = tpu.matmul %4, %5, %cst {dimension_numbers = #tpu.dot_dimension_numbers<[1], [0], [0], [1], [0, 0, 1, 1], [], []>} : vector<16x144xbf16>, vector<144x32xbf16>, vector<16x32xf32> -> vector<16x32xf32>
    %7 = arith.addf %3, %6 : vector<16x32xf32>
    %c0_6 = arith.constant 0 : index
    %c0_7 = arith.constant 0 : index
    %8 = vector.load %arg6[%c0_6, %c0_7] : memref<16x32xf32, #tpu.memory_space<vmem>>, vector<16x32xf32>
    tpu.vector_store %arg6[%c0_6, %c0_7], %7 {strides = array<i32>} : memref<16x32xf32, #tpu.memory_space<vmem>>, vector<16x32xf32>,
    %c0_i32_8 = arith.constant 0 : i32
    %9 = arith.cmpi eq, %arg1, %c0_i32_8 : i32
    %10 = arith.extui %9 : i1 to i32
    %c0_i32_9 = arith.constant 0 : i32
    %11 = arith.cmpi ne, %10, %c0_i32_9 : i32
    scf.if %11 {
      %c0_10 = arith.constant 0 : index
      %c0_11 = arith.constant 0 : index
      %12 = vector.load %arg6[%c0_10, %c0_11] : memref<16x32xf32, #tpu.memory_space<vmem>>, vector<16x32xf32>
      %c0_12 = arith.constant 0 : index
      %c0_13 = arith.constant 0 : index
      %13 = vector.load %arg4[%c0_12, %c0_13] : memref<1x32xf32, #tpu.memory_space<vmem>>, vector<1x32xf32>
      %14 = vector.broadcast %13 : vector<1x32xf32> to vector<16x32xf32>
      %15 = arith.addf %12, %14 : vector<16x32xf32>
      %cst_14 = arith.constant 0.000000e+00 : f32
      %16 = vector.broadcast %cst_14 : f32 to vector<16x32xf32>
      %17 = arith.maximumf %15, %16 : vector<16x32xf32>
      %18 = arith.truncf %17 : vector<16x32xf32> to vector<16x32xbf16>
      %c0_15 = arith.constant 0 : index
      %c0_16 = arith.constant 0 : index
      %19 = vector.load %arg5[%c0_15, %c0_16] : memref<16x32xbf16, #tpu.memory_space<vmem>>, vector<16x32xbf16>
      tpu.vector_store %arg5[%c0_15, %c0_16], %18 {strides = array<i32>} : memref<16x32xbf16, #tpu.memory_space<vmem>>, vector<16x32xbf16>,
    } else {
    }
    return
  }
  func.func @transform_0(%arg0: i32, %arg1: i32) -> (i32, i32) {
    %c0_i32 = arith.constant 0 : i32
    return %arg0, %arg1 : i32, i32
  }
  func.func @transform_1(%arg0: i32, %arg1: i32) -> (i32, i32) {
    %c0_i32 = arith.constant 0 : i32
    %c0_i32_0 = arith.constant 0 : i32
    return %arg1, %c0_i32 : i32, i32
  }
  func.func @transform_2(%arg0: i32, %arg1: i32) -> (i32, i32) {
    %c0_i32 = arith.constant 0 : i32
    %c0_i32_0 = arith.constant 0 : i32
    %c0_i32_1 = arith.constant 0 : i32
    return %c0_i32, %c0_i32_0 : i32, i32
  }
  func.func @transform_3(%arg0: i32, %arg1: i32) -> (i32, i32) {
    %c0_i32 = arith.constant 0 : i32
    %c0_i32_0 = arith.constant 0 : i32
    return %arg0, %c0_i32 : i32, i32
  }
}

module attributes {stable_mosaic.version = 11 : i64} {
  func.func @_mm_bias_act_kernel(%arg0: i32, %arg1: i32, %arg2: memref<8x288xbf16, #tpu.memory_space<vmem>>, %arg3: memref<288x64xbf16, #tpu.memory_space<vmem>>, %arg4: memref<1x64xf32, #tpu.memory_space<vmem>>, %arg5: memref<8x64xbf16, #tpu.memory_space<vmem>>, %arg6: memref<8x64xf32, #tpu.memory_space<vmem>>) attributes {dimension_semantics = [#tpu.dimension_semantics<parallel>, #tpu.dimension_semantics<arbitrary>], iteration_bounds = array<i64: 1, 1>, scalar_prefetch = 0 : i64, scratch_operands = 1 : i64, tpu.core_type = #tpu.core_type<tc>, window_params = [{transform_indices = @transform_0, window_bounds = array<i64: 8, 288>}, {transform_indices = @transform_1, window_bounds = array<i64: 288, 64>}, {pipeline_mode = #tpu.pipeline_mode<synchronous>, transform_indices = @transform_2, window_bounds = array<i64: 1, 64>}, {transform_indices = @transform_3, window_bounds = array<i64: 8, 64>}]} {
    %c0_i32 = arith.constant 0 : i32
    %0 = arith.cmpi eq, %arg1, %c0_i32 : i32
    %1 = arith.extui %0 : i1 to i32
    %c0_i32_0 = arith.constant 0 : i32
    %2 = arith.cmpi ne, %1, %c0_i32_0 : i32
    scf.if %2 {
      %cst_10 = arith.constant 0.000000e+00 : f32
      %12 = vector.broadcast %cst_10 : f32 to vector<8x64xf32>
      %c0_11 = arith.constant 0 : index
      %c0_12 = arith.constant 0 : index
      %13 = vector.load %arg6[%c0_11, %c0_12] : memref<8x64xf32, #tpu.memory_space<vmem>>, vector<8x64xf32>
      tpu.vector_store %arg6[%c0_11, %c0_12], %12 {strides = array<i32>} : memref<8x64xf32, #tpu.memory_space<vmem>>, vector<8x64xf32>,
    } else {
    }
    %c0 = arith.constant 0 : index
    %c0_1 = arith.constant 0 : index
    %3 = vector.load %arg6[%c0, %c0_1] : memref<8x64xf32, #tpu.memory_space<vmem>>, vector<8x64xf32>
    %c0_2 = arith.constant 0 : index
    %c0_3 = arith.constant 0 : index
    %4 = vector.load %arg2[%c0_2, %c0_3] : memref<8x288xbf16, #tpu.memory_space<vmem>>, vector<8x288xbf16>
    %c0_4 = arith.constant 0 : index
    %c0_5 = arith.constant 0 : index
    %5 = vector.load %arg3[%c0_4, %c0_5] : memref<288x64xbf16, #tpu.memory_space<vmem>>, vector<288x64xbf16>
    %cst = arith.constant dense<0.000000e+00> : vector<8x64xf32>
    %6 = tpu.matmul %4, %5, %cst {dimension_numbers = #tpu.dot_dimension_numbers<[1], [0], [0], [1], [0, 0, 1, 1], [], []>} : vector<8x288xbf16>, vector<288x64xbf16>, vector<8x64xf32> -> vector<8x64xf32>
    %7 = arith.addf %3, %6 : vector<8x64xf32>
    %c0_6 = arith.constant 0 : index
    %c0_7 = arith.constant 0 : index
    %8 = vector.load %arg6[%c0_6, %c0_7] : memref<8x64xf32, #tpu.memory_space<vmem>>, vector<8x64xf32>
    tpu.vector_store %arg6[%c0_6, %c0_7], %7 {strides = array<i32>} : memref<8x64xf32, #tpu.memory_space<vmem>>, vector<8x64xf32>,
    %c0_i32_8 = arith.constant 0 : i32
    %9 = arith.cmpi eq, %arg1, %c0_i32_8 : i32
    %10 = arith.extui %9 : i1 to i32
    %c0_i32_9 = arith.constant 0 : i32
    %11 = arith.cmpi ne, %10, %c0_i32_9 : i32
    scf.if %11 {
      %c0_10 = arith.constant 0 : index
      %c0_11 = arith.constant 0 : index
      %12 = vector.load %arg6[%c0_10, %c0_11] : memref<8x64xf32, #tpu.memory_space<vmem>>, vector<8x64xf32>
      %c0_12 = arith.constant 0 : index
      %c0_13 = arith.constant 0 : index
      %13 = vector.load %arg4[%c0_12, %c0_13] : memref<1x64xf32, #tpu.memory_space<vmem>>, vector<1x64xf32>
      %14 = vector.broadcast %13 : vector<1x64xf32> to vector<8x64xf32>
      %15 = arith.addf %12, %14 : vector<8x64xf32>
      %cst_14 = arith.constant 0.000000e+00 : f32
      %16 = vector.broadcast %cst_14 : f32 to vector<8x64xf32>
      %17 = arith.maximumf %15, %16 : vector<8x64xf32>
      %18 = arith.truncf %17 : vector<8x64xf32> to vector<8x64xbf16>
      %c0_15 = arith.constant 0 : index
      %c0_16 = arith.constant 0 : index
      %19 = vector.load %arg5[%c0_15, %c0_16] : memref<8x64xbf16, #tpu.memory_space<vmem>>, vector<8x64xbf16>
      tpu.vector_store %arg5[%c0_15, %c0_16], %18 {strides = array<i32>} : memref<8x64xbf16, #tpu.memory_space<vmem>>, vector<8x64xbf16>,
    } else {
    }
    return
  }
  func.func @transform_0(%arg0: i32, %arg1: i32) -> (i32, i32) {
    %c0_i32 = arith.constant 0 : i32
    return %arg0, %arg1 : i32, i32
  }
  func.func @transform_1(%arg0: i32, %arg1: i32) -> (i32, i32) {
    %c0_i32 = arith.constant 0 : i32
    %c0_i32_0 = arith.constant 0 : i32
    return %arg1, %c0_i32 : i32, i32
  }
  func.func @transform_2(%arg0: i32, %arg1: i32) -> (i32, i32) {
    %c0_i32 = arith.constant 0 : i32
    %c0_i32_0 = arith.constant 0 : i32
    %c0_i32_1 = arith.constant 0 : i32
    return %c0_i32, %c0_i32_0 : i32, i32
  }
  func.func @transform_3(%arg0: i32, %arg1: i32) -> (i32, i32) {
    %c0_i32 = arith.constant 0 : i32
    %c0_i32_0 = arith.constant 0 : i32
    return %arg0, %c0_i32 : i32, i32
  }
}

module attributes {stable_mosaic.version = 11 : i64} {
  func.func @_mm_bias_act_kernel(%arg0: i32, %arg1: i32, %arg2: memref<2x32xbf16, #tpu.memory_space<vmem>>, %arg3: memref<32x256xbf16, #tpu.memory_space<vmem>>, %arg4: memref<1x256xf32, #tpu.memory_space<vmem>>, %arg5: memref<2x256xbf16, #tpu.memory_space<vmem>>, %arg6: memref<2x256xf32, #tpu.memory_space<vmem>>) attributes {dimension_semantics = [#tpu.dimension_semantics<parallel>, #tpu.dimension_semantics<arbitrary>], iteration_bounds = array<i64: 1, 1>, scalar_prefetch = 0 : i64, scratch_operands = 1 : i64, tpu.core_type = #tpu.core_type<tc>, window_params = [{transform_indices = @transform_0, window_bounds = array<i64: 2, 32>}, {transform_indices = @transform_1, window_bounds = array<i64: 32, 256>}, {pipeline_mode = #tpu.pipeline_mode<synchronous>, transform_indices = @transform_2, window_bounds = array<i64: 1, 256>}, {transform_indices = @transform_3, window_bounds = array<i64: 2, 256>}]} {
    %c0_i32 = arith.constant 0 : i32
    %0 = arith.cmpi eq, %arg1, %c0_i32 : i32
    %1 = arith.extui %0 : i1 to i32
    %c0_i32_0 = arith.constant 0 : i32
    %2 = arith.cmpi ne, %1, %c0_i32_0 : i32
    scf.if %2 {
      %cst_10 = arith.constant 0.000000e+00 : f32
      %12 = vector.broadcast %cst_10 : f32 to vector<2x256xf32>
      %c0_11 = arith.constant 0 : index
      %c0_12 = arith.constant 0 : index
      %13 = vector.load %arg6[%c0_11, %c0_12] : memref<2x256xf32, #tpu.memory_space<vmem>>, vector<2x256xf32>
      tpu.vector_store %arg6[%c0_11, %c0_12], %12 {strides = array<i32>} : memref<2x256xf32, #tpu.memory_space<vmem>>, vector<2x256xf32>,
    } else {
    }
    %c0 = arith.constant 0 : index
    %c0_1 = arith.constant 0 : index
    %3 = vector.load %arg6[%c0, %c0_1] : memref<2x256xf32, #tpu.memory_space<vmem>>, vector<2x256xf32>
    %c0_2 = arith.constant 0 : index
    %c0_3 = arith.constant 0 : index
    %4 = vector.load %arg2[%c0_2, %c0_3] : memref<2x32xbf16, #tpu.memory_space<vmem>>, vector<2x32xbf16>
    %c0_4 = arith.constant 0 : index
    %c0_5 = arith.constant 0 : index
    %5 = vector.load %arg3[%c0_4, %c0_5] : memref<32x256xbf16, #tpu.memory_space<vmem>>, vector<32x256xbf16>
    %cst = arith.constant dense<0.000000e+00> : vector<2x256xf32>
    %6 = tpu.matmul %4, %5, %cst {dimension_numbers = #tpu.dot_dimension_numbers<[1], [0], [0], [1], [0, 0, 1, 1], [], []>} : vector<2x32xbf16>, vector<32x256xbf16>, vector<2x256xf32> -> vector<2x256xf32>
    %7 = arith.addf %3, %6 : vector<2x256xf32>
    %c0_6 = arith.constant 0 : index
    %c0_7 = arith.constant 0 : index
    %8 = vector.load %arg6[%c0_6, %c0_7] : memref<2x256xf32, #tpu.memory_space<vmem>>, vector<2x256xf32>
    tpu.vector_store %arg6[%c0_6, %c0_7], %7 {strides = array<i32>} : memref<2x256xf32, #tpu.memory_space<vmem>>, vector<2x256xf32>,
    %c0_i32_8 = arith.constant 0 : i32
    %9 = arith.cmpi eq, %arg1, %c0_i32_8 : i32
    %10 = arith.extui %9 : i1 to i32
    %c0_i32_9 = arith.constant 0 : i32
    %11 = arith.cmpi ne, %10, %c0_i32_9 : i32
    scf.if %11 {
      %c0_10 = arith.constant 0 : index
      %c0_11 = arith.constant 0 : index
      %12 = vector.load %arg6[%c0_10, %c0_11] : memref<2x256xf32, #tpu.memory_space<vmem>>, vector<2x256xf32>
      %c0_12 = arith.constant 0 : index
      %c0_13 = arith.constant 0 : index
      %13 = vector.load %arg4[%c0_12, %c0_13] : memref<1x256xf32, #tpu.memory_space<vmem>>, vector<1x256xf32>
      %14 = vector.broadcast %13 : vector<1x256xf32> to vector<2x256xf32>
      %15 = arith.addf %12, %14 : vector<2x256xf32>
      %cst_14 = arith.constant 0.000000e+00 : f32
      %16 = vector.broadcast %cst_14 : f32 to vector<2x256xf32>
      %17 = arith.maximumf %15, %16 : vector<2x256xf32>
      %18 = arith.truncf %17 : vector<2x256xf32> to vector<2x256xbf16>
      %c0_15 = arith.constant 0 : index
      %c0_16 = arith.constant 0 : index
      %19 = vector.load %arg5[%c0_15, %c0_16] : memref<2x256xbf16, #tpu.memory_space<vmem>>, vector<2x256xbf16>
      tpu.vector_store %arg5[%c0_15, %c0_16], %18 {strides = array<i32>} : memref<2x256xbf16, #tpu.memory_space<vmem>>, vector<2x256xbf16>,
    } else {
    }
    return
  }
  func.func @transform_0(%arg0: i32, %arg1: i32) -> (i32, i32) {
    %c0_i32 = arith.constant 0 : i32
    return %arg0, %arg1 : i32, i32
  }
  func.func @transform_1(%arg0: i32, %arg1: i32) -> (i32, i32) {
    %c0_i32 = arith.constant 0 : i32
    %c0_i32_0 = arith.constant 0 : i32
    return %arg1, %c0_i32 : i32, i32
  }
  func.func @transform_2(%arg0: i32, %arg1: i32) -> (i32, i32) {
    %c0_i32 = arith.constant 0 : i32
    %c0_i32_0 = arith.constant 0 : i32
    %c0_i32_1 = arith.constant 0 : i32
    return %c0_i32, %c0_i32_0 : i32, i32
  }
  func.func @transform_3(%arg0: i32, %arg1: i32) -> (i32, i32) {
    %c0_i32 = arith.constant 0 : i32
    %c0_i32_0 = arith.constant 0 : i32
    return %arg0, %c0_i32 : i32, i32
  }
}

module attributes {stable_mosaic.version = 11 : i64} {
  func.func @_stats_reparam_kernel(%arg0: i32, %arg1: i32, %arg2: memref<2x256xbf16, #tpu.memory_space<vmem>>, %arg3: memref<256x64xbf16, #tpu.memory_space<vmem>>, %arg4: memref<1x64xf32, #tpu.memory_space<vmem>>, %arg5: memref<2x32xf32, #tpu.memory_space<vmem>>, %arg6: memref<2x32xf32, #tpu.memory_space<vmem>>, %arg7: memref<2x32xf32, #tpu.memory_space<vmem>>, %arg8: memref<2x32xbf16, #tpu.memory_space<vmem>>, %arg9: memref<2x64xf32, #tpu.memory_space<vmem>>) attributes {dimension_semantics = [#tpu.dimension_semantics<parallel>, #tpu.dimension_semantics<arbitrary>], iteration_bounds = array<i64: 1, 1>, scalar_prefetch = 0 : i64, scratch_operands = 1 : i64, tpu.core_type = #tpu.core_type<tc>, window_params = [{transform_indices = @transform_0, window_bounds = array<i64: 2, 256>}, {transform_indices = @transform_1, window_bounds = array<i64: 256, 64>}, {pipeline_mode = #tpu.pipeline_mode<synchronous>, transform_indices = @transform_2, window_bounds = array<i64: 1, 64>}, {transform_indices = @transform_3, window_bounds = array<i64: 2, 32>}, {transform_indices = @transform_4, window_bounds = array<i64: 2, 32>}, {transform_indices = @transform_5, window_bounds = array<i64: 2, 32>}, {transform_indices = @transform_6, window_bounds = array<i64: 2, 32>}]} {
    %c0_i32 = arith.constant 0 : i32
    %0 = arith.cmpi eq, %arg1, %c0_i32 : i32
    %1 = arith.extui %0 : i1 to i32
    %c0_i32_0 = arith.constant 0 : i32
    %2 = arith.cmpi ne, %1, %c0_i32_0 : i32
    scf.if %2 {
      %cst_10 = arith.constant 0.000000e+00 : f32
      %12 = vector.broadcast %cst_10 : f32 to vector<2x64xf32>
      %c0_11 = arith.constant 0 : index
      %c0_12 = arith.constant 0 : index
      %13 = vector.load %arg9[%c0_11, %c0_12] : memref<2x64xf32, #tpu.memory_space<vmem>>, vector<2x64xf32>
      tpu.vector_store %arg9[%c0_11, %c0_12], %12 {strides = array<i32>} : memref<2x64xf32, #tpu.memory_space<vmem>>, vector<2x64xf32>,
    } else {
    }
    %c0 = arith.constant 0 : index
    %c0_1 = arith.constant 0 : index
    %3 = vector.load %arg9[%c0, %c0_1] : memref<2x64xf32, #tpu.memory_space<vmem>>, vector<2x64xf32>
    %c0_2 = arith.constant 0 : index
    %c0_3 = arith.constant 0 : index
    %4 = vector.load %arg2[%c0_2, %c0_3] : memref<2x256xbf16, #tpu.memory_space<vmem>>, vector<2x256xbf16>
    %c0_4 = arith.constant 0 : index
    %c0_5 = arith.constant 0 : index
    %5 = vector.load %arg3[%c0_4, %c0_5] : memref<256x64xbf16, #tpu.memory_space<vmem>>, vector<256x64xbf16>
    %cst = arith.constant dense<0.000000e+00> : vector<2x64xf32>
    %6 = tpu.matmul %4, %5, %cst {dimension_numbers = #tpu.dot_dimension_numbers<[1], [0], [0], [1], [0, 0, 1, 1], [], []>} : vector<2x256xbf16>, vector<256x64xbf16>, vector<2x64xf32> -> vector<2x64xf32>
    %7 = arith.addf %3, %6 : vector<2x64xf32>
    %c0_6 = arith.constant 0 : index
    %c0_7 = arith.constant 0 : index
    %8 = vector.load %arg9[%c0_6, %c0_7] : memref<2x64xf32, #tpu.memory_space<vmem>>, vector<2x64xf32>
    tpu.vector_store %arg9[%c0_6, %c0_7], %7 {strides = array<i32>} : memref<2x64xf32, #tpu.memory_space<vmem>>, vector<2x64xf32>,
    %c0_i32_8 = arith.constant 0 : i32
    %9 = arith.cmpi eq, %arg1, %c0_i32_8 : i32
    %10 = arith.extui %9 : i1 to i32
    %c0_i32_9 = arith.constant 0 : i32
    %11 = arith.cmpi ne, %10, %c0_i32_9 : i32
    scf.if %11 {
      %c0_10 = arith.constant 0 : index
      %c0_11 = arith.constant 0 : index
      %12 = vector.load %arg9[%c0_10, %c0_11] : memref<2x64xf32, #tpu.memory_space<vmem>>, vector<2x64xf32>
      %c0_12 = arith.constant 0 : index
      %c0_13 = arith.constant 0 : index
      %13 = vector.load %arg4[%c0_12, %c0_13] : memref<1x64xf32, #tpu.memory_space<vmem>>, vector<1x64xf32>
      %14 = vector.broadcast %13 : vector<1x64xf32> to vector<2x64xf32>
      %15 = arith.addf %12, %14 : vector<2x64xf32>
      %16 = vector.extract_strided_slice %15 {offsets = [0, 0], sizes = [2, 32], strides = [1, 1]} : vector<2x64xf32> to vector<2x32xf32>
      %17 = vector.extract_strided_slice %15 {offsets = [0, 32], sizes = [2, 32], strides = [1, 1]} : vector<2x64xf32> to vector<2x32xf32>
      %c0_14 = arith.constant 0 : index
      %c0_15 = arith.constant 0 : index
      %18 = vector.load %arg5[%c0_14, %c0_15] : memref<2x32xf32, #tpu.memory_space<vmem>>, vector<2x32xf32>
      %cst_16 = arith.constant -1.500000e+00 : f32
      %19 = vector.broadcast %cst_16 : f32 to vector<2x32xf32>
      %20 = arith.mulf %19, %17 : vector<2x32xf32>
      %21 = math.exp %20 : vector<2x32xf32>
      %22 = arith.mulf %18, %21 : vector<2x32xf32>
      %23 = arith.addf %16, %22 : vector<2x32xf32>
      %c0_17 = arith.constant 0 : index
      %c0_18 = arith.constant 0 : index
      %24 = vector.load %arg6[%c0_17, %c0_18] : memref<2x32xf32, #tpu.memory_space<vmem>>, vector<2x32xf32>
      tpu.vector_store %arg6[%c0_17, %c0_18], %16 {strides = array<i32>} : memref<2x32xf32, #tpu.memory_space<vmem>>, vector<2x32xf32>,
      %c0_19 = arith.constant 0 : index
      %c0_20 = arith.constant 0 : index
      %25 = vector.load %arg7[%c0_19, %c0_20] : memref<2x32xf32, #tpu.memory_space<vmem>>, vector<2x32xf32>
      tpu.vector_store %arg7[%c0_19, %c0_20], %17 {strides = array<i32>} : memref<2x32xf32, #tpu.memory_space<vmem>>, vector<2x32xf32>,
      %26 = arith.truncf %23 : vector<2x32xf32> to vector<2x32xbf16>
      %c0_21 = arith.constant 0 : index
      %c0_22 = arith.constant 0 : index
      %27 = vector.load %arg8[%c0_21, %c0_22] : memref<2x32xbf16, #tpu.memory_space<vmem>>, vector<2x32xbf16>
      tpu.vector_store %arg8[%c0_21, %c0_22], %26 {strides = array<i32>} : memref<2x32xbf16, #tpu.memory_space<vmem>>, vector<2x32xbf16>,
    } else {
    }
    return
  }
  func.func @transform_0(%arg0: i32, %arg1: i32) -> (i32, i32) {
    %c0_i32 = arith.constant 0 : i32
    return %arg0, %arg1 : i32, i32
  }
  func.func @transform_1(%arg0: i32, %arg1: i32) -> (i32, i32) {
    %c0_i32 = arith.constant 0 : i32
    %c0_i32_0 = arith.constant 0 : i32
    return %arg1, %c0_i32 : i32, i32
  }
  func.func @transform_2(%arg0: i32, %arg1: i32) -> (i32, i32) {
    %c0_i32 = arith.constant 0 : i32
    %c0_i32_0 = arith.constant 0 : i32
    %c0_i32_1 = arith.constant 0 : i32
    return %c0_i32, %c0_i32_0 : i32, i32
  }
  func.func @transform_3(%arg0: i32, %arg1: i32) -> (i32, i32) {
    %c0_i32 = arith.constant 0 : i32
    %c0_i32_0 = arith.constant 0 : i32
    return %arg0, %c0_i32 : i32, i32
  }
  func.func @transform_4(%arg0: i32, %arg1: i32) -> (i32, i32) {
    %c0_i32 = arith.constant 0 : i32
    %c0_i32_0 = arith.constant 0 : i32
    return %arg0, %c0_i32 : i32, i32
  }
  func.func @transform_5(%arg0: i32, %arg1: i32) -> (i32, i32) {
    %c0_i32 = arith.constant 0 : i32
    %c0_i32_0 = arith.constant 0 : i32
    return %arg0, %c0_i32 : i32, i32
  }
  func.func @transform_6(%arg0: i32, %arg1: i32) -> (i32, i32) {
    %c0_i32 = arith.constant 0 : i32
    %c0_i32_0 = arith.constant 0 : i32
    return %arg0, %c0_i32 : i32, i32
  }
}

module attributes {stable_mosaic.version = 11 : i64} {
  func.func @_mm_bias_act_kernel(%arg0: i32, %arg1: i32, %arg2: memref<8x256xbf16, #tpu.memory_space<vmem>>, %arg3: memref<256x128xbf16, #tpu.memory_space<vmem>>, %arg4: memref<1x128xf32, #tpu.memory_space<vmem>>, %arg5: memref<8x128xbf16, #tpu.memory_space<vmem>>, %arg6: memref<8x128xf32, #tpu.memory_space<vmem>>) attributes {dimension_semantics = [#tpu.dimension_semantics<parallel>, #tpu.dimension_semantics<arbitrary>], iteration_bounds = array<i64: 1, 1>, scalar_prefetch = 0 : i64, scratch_operands = 1 : i64, tpu.core_type = #tpu.core_type<tc>, window_params = [{transform_indices = @transform_0, window_bounds = array<i64: 8, 256>}, {transform_indices = @transform_1, window_bounds = array<i64: 256, 128>}, {pipeline_mode = #tpu.pipeline_mode<synchronous>, transform_indices = @transform_2, window_bounds = array<i64: 1, 128>}, {transform_indices = @transform_3, window_bounds = array<i64: 8, 128>}]} {
    %c0_i32 = arith.constant 0 : i32
    %0 = arith.cmpi eq, %arg1, %c0_i32 : i32
    %1 = arith.extui %0 : i1 to i32
    %c0_i32_0 = arith.constant 0 : i32
    %2 = arith.cmpi ne, %1, %c0_i32_0 : i32
    scf.if %2 {
      %cst_10 = arith.constant 0.000000e+00 : f32
      %12 = vector.broadcast %cst_10 : f32 to vector<8x128xf32>
      %c0_11 = arith.constant 0 : index
      %c0_12 = arith.constant 0 : index
      %13 = vector.load %arg6[%c0_11, %c0_12] : memref<8x128xf32, #tpu.memory_space<vmem>>, vector<8x128xf32>
      tpu.vector_store %arg6[%c0_11, %c0_12], %12 {strides = array<i32>} : memref<8x128xf32, #tpu.memory_space<vmem>>, vector<8x128xf32>,
    } else {
    }
    %c0 = arith.constant 0 : index
    %c0_1 = arith.constant 0 : index
    %3 = vector.load %arg6[%c0, %c0_1] : memref<8x128xf32, #tpu.memory_space<vmem>>, vector<8x128xf32>
    %c0_2 = arith.constant 0 : index
    %c0_3 = arith.constant 0 : index
    %4 = vector.load %arg2[%c0_2, %c0_3] : memref<8x256xbf16, #tpu.memory_space<vmem>>, vector<8x256xbf16>
    %c0_4 = arith.constant 0 : index
    %c0_5 = arith.constant 0 : index
    %5 = vector.load %arg3[%c0_4, %c0_5] : memref<256x128xbf16, #tpu.memory_space<vmem>>, vector<256x128xbf16>
    %cst = arith.constant dense<0.000000e+00> : vector<8x128xf32>
    %6 = tpu.matmul %4, %5, %cst {dimension_numbers = #tpu.dot_dimension_numbers<[1], [0], [0], [1], [0, 0, 1, 1], [], []>} : vector<8x256xbf16>, vector<256x128xbf16>, vector<8x128xf32> -> vector<8x128xf32>
    %7 = arith.addf %3, %6 : vector<8x128xf32>
    %c0_6 = arith.constant 0 : index
    %c0_7 = arith.constant 0 : index
    %8 = vector.load %arg6[%c0_6, %c0_7] : memref<8x128xf32, #tpu.memory_space<vmem>>, vector<8x128xf32>
    tpu.vector_store %arg6[%c0_6, %c0_7], %7 {strides = array<i32>} : memref<8x128xf32, #tpu.memory_space<vmem>>, vector<8x128xf32>,
    %c0_i32_8 = arith.constant 0 : i32
    %9 = arith.cmpi eq, %arg1, %c0_i32_8 : i32
    %10 = arith.extui %9 : i1 to i32
    %c0_i32_9 = arith.constant 0 : i32
    %11 = arith.cmpi ne, %10, %c0_i32_9 : i32
    scf.if %11 {
      %c0_10 = arith.constant 0 : index
      %c0_11 = arith.constant 0 : index
      %12 = vector.load %arg6[%c0_10, %c0_11] : memref<8x128xf32, #tpu.memory_space<vmem>>, vector<8x128xf32>
      %c0_12 = arith.constant 0 : index
      %c0_13 = arith.constant 0 : index
      %13 = vector.load %arg4[%c0_12, %c0_13] : memref<1x128xf32, #tpu.memory_space<vmem>>, vector<1x128xf32>
      %14 = vector.broadcast %13 : vector<1x128xf32> to vector<8x128xf32>
      %15 = arith.addf %12, %14 : vector<8x128xf32>
      %cst_14 = arith.constant 0.000000e+00 : f32
      %16 = vector.broadcast %cst_14 : f32 to vector<8x128xf32>
      %17 = arith.maximumf %15, %16 : vector<8x128xf32>
      %18 = arith.truncf %17 : vector<8x128xf32> to vector<8x128xbf16>
      %c0_15 = arith.constant 0 : index
      %c0_16 = arith.constant 0 : index
      %19 = vector.load %arg5[%c0_15, %c0_16] : memref<8x128xbf16, #tpu.memory_space<vmem>>, vector<8x128xbf16>
      tpu.vector_store %arg5[%c0_15, %c0_16], %18 {strides = array<i32>} : memref<8x128xbf16, #tpu.memory_space<vmem>>, vector<8x128xbf16>,
    } else {
    }
    return
  }
  func.func @transform_0(%arg0: i32, %arg1: i32) -> (i32, i32) {
    %c0_i32 = arith.constant 0 : i32
    return %arg0, %arg1 : i32, i32
  }
  func.func @transform_1(%arg0: i32, %arg1: i32) -> (i32, i32) {
    %c0_i32 = arith.constant 0 : i32
    %c0_i32_0 = arith.constant 0 : i32
    return %arg1, %c0_i32 : i32, i32
  }
  func.func @transform_2(%arg0: i32, %arg1: i32) -> (i32, i32) {
    %c0_i32 = arith.constant 0 : i32
    %c0_i32_0 = arith.constant 0 : i32
    %c0_i32_1 = arith.constant 0 : i32
    return %c0_i32, %c0_i32_0 : i32, i32
  }
  func.func @transform_3(%arg0: i32, %arg1: i32) -> (i32, i32) {
    %c0_i32 = arith.constant 0 : i32
    %c0_i32_0 = arith.constant 0 : i32
    return %arg0, %c0_i32 : i32, i32
  }
}

module attributes {stable_mosaic.version = 11 : i64} {
  func.func @_mm_bias_act_kernel(%arg0: i32, %arg1: i32, %arg2: memref<16x128xbf16, #tpu.memory_space<vmem>>, %arg3: memref<128x64xbf16, #tpu.memory_space<vmem>>, %arg4: memref<1x64xf32, #tpu.memory_space<vmem>>, %arg5: memref<16x64xbf16, #tpu.memory_space<vmem>>, %arg6: memref<16x64xf32, #tpu.memory_space<vmem>>) attributes {dimension_semantics = [#tpu.dimension_semantics<parallel>, #tpu.dimension_semantics<arbitrary>], iteration_bounds = array<i64: 2, 1>, scalar_prefetch = 0 : i64, scratch_operands = 1 : i64, tpu.core_type = #tpu.core_type<tc>, window_params = [{transform_indices = @transform_0, window_bounds = array<i64: 16, 128>}, {transform_indices = @transform_1, window_bounds = array<i64: 128, 64>}, {pipeline_mode = #tpu.pipeline_mode<synchronous>, transform_indices = @transform_2, window_bounds = array<i64: 1, 64>}, {transform_indices = @transform_3, window_bounds = array<i64: 16, 64>}]} {
    %c0_i32 = arith.constant 0 : i32
    %0 = arith.cmpi eq, %arg1, %c0_i32 : i32
    %1 = arith.extui %0 : i1 to i32
    %c0_i32_0 = arith.constant 0 : i32
    %2 = arith.cmpi ne, %1, %c0_i32_0 : i32
    scf.if %2 {
      %cst_10 = arith.constant 0.000000e+00 : f32
      %12 = vector.broadcast %cst_10 : f32 to vector<16x64xf32>
      %c0_11 = arith.constant 0 : index
      %c0_12 = arith.constant 0 : index
      %13 = vector.load %arg6[%c0_11, %c0_12] : memref<16x64xf32, #tpu.memory_space<vmem>>, vector<16x64xf32>
      tpu.vector_store %arg6[%c0_11, %c0_12], %12 {strides = array<i32>} : memref<16x64xf32, #tpu.memory_space<vmem>>, vector<16x64xf32>,
    } else {
    }
    %c0 = arith.constant 0 : index
    %c0_1 = arith.constant 0 : index
    %3 = vector.load %arg6[%c0, %c0_1] : memref<16x64xf32, #tpu.memory_space<vmem>>, vector<16x64xf32>
    %c0_2 = arith.constant 0 : index
    %c0_3 = arith.constant 0 : index
    %4 = vector.load %arg2[%c0_2, %c0_3] : memref<16x128xbf16, #tpu.memory_space<vmem>>, vector<16x128xbf16>
    %c0_4 = arith.constant 0 : index
    %c0_5 = arith.constant 0 : index
    %5 = vector.load %arg3[%c0_4, %c0_5] : memref<128x64xbf16, #tpu.memory_space<vmem>>, vector<128x64xbf16>
    %cst = arith.constant dense<0.000000e+00> : vector<16x64xf32>
    %6 = tpu.matmul %4, %5, %cst {dimension_numbers = #tpu.dot_dimension_numbers<[1], [0], [0], [1], [0, 0, 1, 1], [], []>} : vector<16x128xbf16>, vector<128x64xbf16>, vector<16x64xf32> -> vector<16x64xf32>
    %7 = arith.addf %3, %6 : vector<16x64xf32>
    %c0_6 = arith.constant 0 : index
    %c0_7 = arith.constant 0 : index
    %8 = vector.load %arg6[%c0_6, %c0_7] : memref<16x64xf32, #tpu.memory_space<vmem>>, vector<16x64xf32>
    tpu.vector_store %arg6[%c0_6, %c0_7], %7 {strides = array<i32>} : memref<16x64xf32, #tpu.memory_space<vmem>>, vector<16x64xf32>,
    %c0_i32_8 = arith.constant 0 : i32
    %9 = arith.cmpi eq, %arg1, %c0_i32_8 : i32
    %10 = arith.extui %9 : i1 to i32
    %c0_i32_9 = arith.constant 0 : i32
    %11 = arith.cmpi ne, %10, %c0_i32_9 : i32
    scf.if %11 {
      %c0_10 = arith.constant 0 : index
      %c0_11 = arith.constant 0 : index
      %12 = vector.load %arg6[%c0_10, %c0_11] : memref<16x64xf32, #tpu.memory_space<vmem>>, vector<16x64xf32>
      %c0_12 = arith.constant 0 : index
      %c0_13 = arith.constant 0 : index
      %13 = vector.load %arg4[%c0_12, %c0_13] : memref<1x64xf32, #tpu.memory_space<vmem>>, vector<1x64xf32>
      %14 = vector.broadcast %13 : vector<1x64xf32> to vector<16x64xf32>
      %15 = arith.addf %12, %14 : vector<16x64xf32>
      %cst_14 = arith.constant 0.000000e+00 : f32
      %16 = vector.broadcast %cst_14 : f32 to vector<16x64xf32>
      %17 = arith.maximumf %15, %16 : vector<16x64xf32>
      %18 = arith.truncf %17 : vector<16x64xf32> to vector<16x64xbf16>
      %c0_15 = arith.constant 0 : index
      %c0_16 = arith.constant 0 : index
      %19 = vector.load %arg5[%c0_15, %c0_16] : memref<16x64xbf16, #tpu.memory_space<vmem>>, vector<16x64xbf16>
      tpu.vector_store %arg5[%c0_15, %c0_16], %18 {strides = array<i32>} : memref<16x64xbf16, #tpu.memory_space<vmem>>, vector<16x64xbf16>,
    } else {
    }
    return
  }
  func.func @transform_0(%arg0: i32, %arg1: i32) -> (i32, i32) {
    %c0_i32 = arith.constant 0 : i32
    return %arg0, %arg1 : i32, i32
  }
  func.func @transform_1(%arg0: i32, %arg1: i32) -> (i32, i32) {
    %c0_i32 = arith.constant 0 : i32
    %c0_i32_0 = arith.constant 0 : i32
    return %arg1, %c0_i32 : i32, i32
  }
  func.func @transform_2(%arg0: i32, %arg1: i32) -> (i32, i32) {
    %c0_i32 = arith.constant 0 : i32
    %c0_i32_0 = arith.constant 0 : i32
    %c0_i32_1 = arith.constant 0 : i32
    return %c0_i32, %c0_i32_0 : i32, i32
  }
  func.func @transform_3(%arg0: i32, %arg1: i32) -> (i32, i32) {
    %c0_i32 = arith.constant 0 : i32
    %c0_i32_0 = arith.constant 0 : i32
    return %arg0, %c0_i32 : i32, i32
  }
}

module attributes {stable_mosaic.version = 11 : i64} {
  func.func @_mm_bias_T_kernel(%arg0: i32, %arg1: memref<16x64xbf16, #tpu.memory_space<vmem>>, %arg2: memref<64x128xbf16, #tpu.memory_space<vmem>>, %arg3: memref<16x1xf32, #tpu.memory_space<vmem>>, %arg4: memref<16x128xf32, #tpu.memory_space<vmem>>) attributes {dimension_semantics = [#tpu.dimension_semantics<parallel>], iteration_bounds = array<i64: 1>, scalar_prefetch = 0 : i64, scratch_operands = 0 : i64, tpu.core_type = #tpu.core_type<tc>, window_params = [{pipeline_mode = #tpu.pipeline_mode<synchronous>, transform_indices = @transform_0, window_bounds = array<i64: 16, 64>}, {transform_indices = @transform_1, window_bounds = array<i64: 64, 128>}, {pipeline_mode = #tpu.pipeline_mode<synchronous>, transform_indices = @transform_2, window_bounds = array<i64: 16, 1>}, {transform_indices = @transform_3, window_bounds = array<i64: 16, 128>}]} {
    %c0 = arith.constant 0 : index
    %c0_0 = arith.constant 0 : index
    %0 = vector.load %arg1[%c0, %c0_0] : memref<16x64xbf16, #tpu.memory_space<vmem>>, vector<16x64xbf16>
    %c0_1 = arith.constant 0 : index
    %c0_2 = arith.constant 0 : index
    %1 = vector.load %arg2[%c0_1, %c0_2] : memref<64x128xbf16, #tpu.memory_space<vmem>>, vector<64x128xbf16>
    %cst = arith.constant dense<0.000000e+00> : vector<16x128xf32>
    %2 = tpu.matmul %0, %1, %cst {dimension_numbers = #tpu.dot_dimension_numbers<[1], [0], [0], [1], [0, 0, 1, 1], [], []>} : vector<16x64xbf16>, vector<64x128xbf16>, vector<16x128xf32> -> vector<16x128xf32>
    %c0_3 = arith.constant 0 : index
    %c0_4 = arith.constant 0 : index
    %3 = vector.load %arg3[%c0_3, %c0_4] : memref<16x1xf32, #tpu.memory_space<vmem>>, vector<16x1xf32>
    %4 = vector.broadcast %3 : vector<16x1xf32> to vector<16x128xf32>
    %5 = arith.addf %2, %4 : vector<16x128xf32>
    %c0_5 = arith.constant 0 : index
    %c0_6 = arith.constant 0 : index
    %6 = vector.load %arg4[%c0_5, %c0_6] : memref<16x128xf32, #tpu.memory_space<vmem>>, vector<16x128xf32>
    tpu.vector_store %arg4[%c0_5, %c0_6], %5 {strides = array<i32>} : memref<16x128xf32, #tpu.memory_space<vmem>>, vector<16x128xf32>,
    return
  }
  func.func @transform_0(%arg0: i32) -> (i32, i32) {
    %c0_i32 = arith.constant 0 : i32
    %c0_i32_0 = arith.constant 0 : i32
    %c0_i32_1 = arith.constant 0 : i32
    return %c0_i32, %c0_i32_0 : i32, i32
  }
  func.func @transform_1(%arg0: i32) -> (i32, i32) {
    %c0_i32 = arith.constant 0 : i32
    %c0_i32_0 = arith.constant 0 : i32
    return %c0_i32, %arg0 : i32, i32
  }
  func.func @transform_2(%arg0: i32) -> (i32, i32) {
    %c0_i32 = arith.constant 0 : i32
    %c0_i32_0 = arith.constant 0 : i32
    %c0_i32_1 = arith.constant 0 : i32
    return %c0_i32, %c0_i32_0 : i32, i32
  }
  func.func @transform_3(%arg0: i32) -> (i32, i32) {
    %c0_i32 = arith.constant 0 : i32
    %c0_i32_0 = arith.constant 0 : i32
    return %c0_i32, %arg0 : i32, i32
  }
}

</mosaic_0001>

<llo_original>
// kernel: vautoencoder_forward.8
$region0: #{vautoencoder_forward.8}
  #allocation0 [shape = 'u32[]', space=smem, size = 0x4, offset = 0x4, fixed_abs, tag = 'smem constant byte address 0x4 - core index']
  #allocation1 [shape = 'u32[144,128]{1,0:T(1,128)}', space=vmem, size = 0x12000, scoped, tag = 'internal scratch']
  #allocation2 [shape = 'f32[64,16]{1,0:T(8,128)}', space=vmem, size = 0x8000, scoped, tag = 'scratch operand']
  %s0 = inlined_call_operand.vmem [shape: bf16[128,36], index: 0, kind: input, shape index: {}]
  %s1 = inlined_call_operand.vmem [shape: bf16[36,16], index: 1, kind: input, shape index: {}]
  %s2 = inlined_call_operand.vmem [shape: f32[1,16], index: 2, kind: input, shape index: {}]
  %s3 = inlined_call_operand.vmem [shape: bf16[128,16], index: 3, kind: output, shape index: {}]
  %s4 = sld [smem:[#allocation0]]
  $region53: #{vautoencoder_forward.8} parent=0
    _
  %s6 = ssub.s32 1, %s4
  %s7 = scalar_select 0, %s6, %s4
  loop: start=0, step=1, limit=4
  $region2: #{vautoencoder_forward.8} parent=0 // loop_pre_header
    _
  $region3: #{vautoencoder_forward.8} parent=0 // loop_header
    %s9 = sphi 0, %s13
    %p10 = scmp.ge.s32.totalorder %s9, 4
    %s16 = sphi 0, %s28
    %s17 = sphi 0, %s24
    %s18 = sphi 0, %s16
    %s19 = sphi 0, %s17
    %s20 = sphi 0, %s18
    %s21 = sphi 0, %s19
    %s33 = sphi 0, %s35
    %s36 = sphi 0, %s33
    %s37 = sphi 0, %s36
    %s53 = sphi 0, %s37
    %s59 = sphi 0, %s61
    %s62 = sphi 0, %s59
    %s63 = sphi 0, %s62
    %s79 = sphi 0, %s63
    %s83 = sphi 0, %s83
    %s85 = sphi 0, %s83
    %s86 = sphi 0, %s85
    %s100 = sphi 0, %s86
    %s106 = sphi 0, %s108
    %s109 = sphi 0, %s106
    %s110 = sphi 0, %s109
    %s126 = sphi 0, %s110
  $region4: #{vautoencoder_forward.8} parent=0 // loop_header_branch
    %12 = sbr.rel (%p10) target = $region8
  $region5: #{vautoencoder_forward.8} parent=0 // loop_body
    %s14 = ssub.s32 %s9, 1
    %s15 = ssub.s32 %s9, 2
    %s22 = sadd.s32 1, %s17
    %p23 = scmp.ge.s32.totalorder %s22, 1
    %s24 = scalar_select %p23, 0, %s22
    %s25 = sadd.s32 1, %s16
    %s26 = scalar_select %p23, %s25, %s16
    %p27 = scmp.ge.s32.totalorder %s26, 2
    %s28 = scalar_select %p27, 0, %s26
    %s29 = ssub.s32 %s16, %s28
    %s30 = ssub.s32 %s17, %s24
    %s31 = sor.u32 %s29, %s30
    %p32 = scmp.eq.s32.totalorder %s31, 0
    %s34 = sadd.s32 %s33, 1
    %s35 = scalar_select %p32, %s33, %s34
    %p38 = pneg %p32
    %p39 = scmp.eq.s32.totalorder %s9, 1
    %p40 = por %p38, %p39
    %p41 = scmp.ne.s32.totalorder %s33, %s36
    %p42 = scmp.eq.s32.totalorder %s9, 0
    %p43 = por %p41, %p42
    %p44 = scmp.ne.s32.totalorder %s33, %s36
    %p45 = scmp.eq.s32.totalorder %s14, 1
    %p46 = por %p44, %p45
    %p47 = scmp.ne.s32.totalorder %s36, %s37
    %p48 = scmp.eq.s32.totalorder %s14, 0
    %p49 = por %p47, %p48
    %p50 = scmp.ne.s32.totalorder %s36, %s37
    %p51 = scmp.eq.s32.totalorder %s15, 1
    %p52 = por %p50, %p51
    %p54 = scmp.ne.s32.totalorder %s37, %s53
    %p55 = scmp.eq.s32.totalorder %s15, 0
    %p56 = por %p54, %p55
    %s57 = ssub.s32 %s17, %s24
    %p58 = scmp.eq.s32.totalorder %s57, 0
    %s60 = sadd.s32 %s59, 1
    %s61 = scalar_select %p58, %s59, %s60
    %p64 = pneg %p58
    %p65 = scmp.eq.s32.totalorder %s9, 1
    %p66 = por %p64, %p65
    %p67 = scmp.ne.s32.totalorder %s59, %s62
    %p68 = scmp.eq.s32.totalorder %s9, 0
    %p69 = por %p67, %p68
    %p70 = scmp.ne.s32.totalorder %s59, %s62
    %p71 = scmp.eq.s32.totalorder %s14, 1
    %p72 = por %p70, %p71
    %p73 = scmp.ne.s32.totalorder %s62, %s63
    %p74 = scmp.eq.s32.totalorder %s14, 0
    %p75 = por %p73, %p74
    %p76 = scmp.ne.s32.totalorder %s62, %s63
    %p77 = scmp.eq.s32.totalorder %s15, 1
    %p78 = por %p76, %p77
    %p80 = scmp.ne.s32.totalorder %s63, %s79
    %p81 = scmp.eq.s32.totalorder %s15, 0
    %p82 = por %p80, %p81
    %s84 = sadd.s32 %s83, 1
    %p87 = scmp.eq.s32.totalorder %s9, 1
    %p88 = scmp.ne.s32.totalorder %s83, %s85
    %p89 = scmp.eq.s32.totalorder %s9, 0
    %p90 = por %p88, %p89
    %p91 = scmp.ne.s32.totalorder %s83, %s85
    %p92 = scmp.eq.s32.totalorder %s14, 1
    %p93 = por %p91, %p92
    %p94 = scmp.ne.s32.totalorder %s85, %s86
    %p95 = scmp.eq.s32.totalorder %s14, 0
    %p96 = por %p94, %p95
    %p97 = scmp.ne.s32.totalorder %s85, %s86
    %p98 = scmp.eq.s32.totalorder %s15, 1
    %p99 = por %p97, %p98
    %p101 = scmp.ne.s32.totalorder %s86, %s100
    %p102 = scmp.eq.s32.totalorder %s15, 0
    %p103 = por %p101, %p102
    %s104 = ssub.s32 %s16, %s28
    %p105 = scmp.eq.s32.totalorder %s104, 0
    %s107 = sadd.s32 %s106, 1
    %s108 = scalar_select %p105, %s106, %s107
    %p111 = pneg %p105
    %p112 = scmp.eq.s32.totalorder %s9, 1
    %p113 = por %p111, %p112
    %p114 = scmp.ne.s32.totalorder %s106, %s109
    %p115 = scmp.eq.s32.totalorder %s9, 0
    %p116 = por %p114, %p115
    %p117 = scmp.ne.s32.totalorder %s106, %s109
    %p118 = scmp.eq.s32.totalorder %s14, 1
    %p119 = por %p117, %p118
    %p120 = scmp.ne.s32.totalorder %s109, %s110
    %p121 = scmp.eq.s32.totalorder %s14, 0
    %p122 = por %p120, %p121
    %p123 = scmp.ne.s32.totalorder %s109, %s110
    %p124 = scmp.eq.s32.totalorder %s15, 1
    %p125 = por %p123, %p124
    %p127 = scmp.ne.s32.totalorder %s110, %s126
    %p128 = scmp.eq.s32.totalorder %s15, 0
    %p129 = por %p127, %p128
    %p130 = scmp.le.s32.totalorder 1, %s9
    %p131 = scmp.lt.s32.totalorder %s9, 3
    %p132 = pnand %p130, %p131
    %p133 = pneg %p132
    // Predicated region
    $region9: #{vautoencoder_forward.8} parent=5 // pred_check
      _
    $region10: #{vautoencoder_forward.8} parent=5 // pred_check_branch
      %135 = sbr.rel (%p132) target = $region12
    $region11: #{vautoencoder_forward.8} parent=5 // pred_region
      %s136 = ssub.s32 %s9, 1
      // Predicated region
      $region13: #{vautoencoder_forward.8} parent=11 // pred_check
        %p137 = pneg %p75
      $region14: #{vautoencoder_forward.8} parent=11 // pred_check_branch
        %139 = sbr.rel (%p137) target = $region16
      $region15: #{vautoencoder_forward.8} parent=11 // pred_region
        %s140 = smul.u32 5, %s19
        %p141 = scmp.lt.s32.totalorder %s140, 4
        %s142 = scalar_select %p141, %s140, 4
        %s143 = smul.addr %s142, 4
        %s144 = scalar_lea.vmem %s1, %s143
        %s145 = smul.u32 5, %s19
      $region16: #{vautoencoder_forward.8} parent=11 // pred_fallthru
        _
      // Predicated region
      $region17: #{vautoencoder_forward.8} parent=11 // pred_check
        %p146 = pneg %p96
      $region18: #{vautoencoder_forward.8} parent=11 // pred_check_branch
        %148 = sbr.rel (%p146) target = $region20
      $region19: #{vautoencoder_forward.8} parent=11 // pred_region
        _
      $region20: #{vautoencoder_forward.8} parent=11 // pred_fallthru
        _
    $region12: #{vautoencoder_forward.8} parent=5 // pred_fallthru
      _
    %p149 = scmp.lt.s32.totalorder %s9, 2
    // Predicated region
    $region21: #{vautoencoder_forward.8} parent=5 // pred_check
      %p150 = pneg %p149
    $region22: #{vautoencoder_forward.8} parent=5 // pred_check_branch
      %152 = sbr.rel (%p150) target = $region24
    $region23: #{vautoencoder_forward.8} parent=5 // pred_region
      // Predicated region
      $region25: #{vautoencoder_forward.8} parent=23 // pred_check
        %p153 = pneg %p43
      $region26: #{vautoencoder_forward.8} parent=23 // pred_check_branch
        %155 = sbr.rel (%p153) target = $region28
      $region27: #{vautoencoder_forward.8} parent=23 // pred_region
        %s156 = smul.u32 8, %s16
        %p157 = scmp.lt.s32.totalorder %s156, 15
        %s158 = scalar_select %p157, %s156, 15
        %p159 = scmp.lt.s32.totalorder %s17, 0
        %s160 = scalar_select %p159, %s17, 0
        %s161 = sadd.s32 %s160, %s158
        %s162 = smul.addr %s161, 4
        %s163 = scalar_lea.vmem %s0, %s162
        %s164 = smul.u32 8, %s16
      $region28: #{vautoencoder_forward.8} parent=23 // pred_fallthru
        _
    $region24: #{vautoencoder_forward.8} parent=5 // pred_fallthru
      _
    %p165 = scmp.le.s32.totalorder 1, %s9
    %p166 = scmp.lt.s32.totalorder %s9, 3
    %p167 = pnand %p165, %p166
    %p168 = pneg %p167
    // Predicated region
    $region29: #{vautoencoder_forward.8} parent=5 // pred_check
      _
    $region30: #{vautoencoder_forward.8} parent=5 // pred_check_branch
      %170 = sbr.rel (%p167) target = $region32
    $region31: #{vautoencoder_forward.8} parent=5 // pred_region
      %s171 = ssub.s32 %s9, 1
      %s172 = smul.u32 8, %s18
      %p173 = scmp.lt.s32.totalorder %s172, 15
      %s174 = scalar_select %p173, %s172, 15
      %p175 = scmp.lt.s32.totalorder %s19, 0
      %s176 = scalar_select %p175, %s19, 0
      %s177 = sadd.s32 %s176, %s174
      %s178 = smul.addr %s177, 4
      %s179 = scalar_lea.vmem %s0, %s178
      %p180 = pneg %p49
      %p181 = pneg %p46
      %s182 = smul.u32 5, %s19
      %p183 = scmp.lt.s32.totalorder %s182, 4
      %s184 = scalar_select %p183, %s182, 4
      %s185 = smul.addr %s184, 4
      %s186 = scalar_lea.vmem %s1, %s185
      %p187 = pneg %p75
      %p188 = pneg %p72
      %p189 = pneg %p96
      %p190 = pneg %p93
      %p191 = pneg %p122
      %p192 = pneg %p119
      %s193 = smul.u32 8, %s18
      %p194 = scmp.lt.s32.totalorder %s193, 15
      %s195 = scalar_select %p194, %s193, 15
      %s196 = smul.addr %s195, 4
      %s197 = scalar_lea.vmem %s3, %s196
      %s198 = smul.u32 8, %s18
      %p199 = scmp.lt.s32.totalorder %s198, 15
      %s200 = scalar_select %p199, %s198, 15
      %p201 = scmp.lt.s32.totalorder %s19, 0
      %s202 = scalar_select %p201, %s19, 0
      %s203 = sadd.s32 %s202, %s200
      %s204 = smul.addr %s203, 4
      %s205 = scalar_lea.vmem %s0, %s204
      %s206 = smul.u32 8, %s18
      %s207 = smul.u32 5, %s19
      %p208 = scmp.lt.s32.totalorder %s207, 4
      %s209 = scalar_select %p208, %s207, 4
      %s210 = smul.addr %s209, 4
      %s211 = scalar_lea.vmem %s1, %s210
      %s212 = smul.u32 5, %s19
      %s213 = smul.u32 8, %s18
      %p214 = scmp.lt.s32.totalorder %s213, 15
      %s215 = scalar_select %p214, %s213, 15
      %s216 = smul.addr %s215, 4
      %s217 = scalar_lea.vmem %s3, %s216
      %s218 = smul.u32 8, %s18
      %p220 = scmp.eq.s32.totalorder %s19, 0
      // Predicated region
      $region33: #{vautoencoder_forward.8} parent=31 // pred_check
        %p221 = pneg %p220
      $region34: #{vautoencoder_forward.8} parent=31 // pred_check_branch
        %223 = sbr.rel (%p221) target = $region36
      $region35: #{vautoencoder_forward.8} parent=31 // pred_region
        %vm224 = vcmask 130048
        %225 = vst.msk [vmem:[#allocation2] sm:$0xff] %vm224, 0.0
        %226 = vst.msk [vmem:[#allocation2 + $0x8] sm:$0xff] %vm224, 0.0
        %227 = vst.msk [vmem:[#allocation2 + $0x10] sm:$0xff] %vm224, 0.0
        %228 = vst.msk [vmem:[#allocation2 + $0x18] sm:$0xff] %vm224, 0.0
        %229 = vst.msk [vmem:[#allocation2 + $0x20] sm:$0xff] %vm224, 0.0
        %230 = vst.msk [vmem:[#allocation2 + $0x28] sm:$0xff] %vm224, 0.0
        %231 = vst.msk [vmem:[#allocation2 + $0x30] sm:$0xff] %vm224, 0.0
        %232 = vst.msk [vmem:[#allocation2 + $0x38] sm:$0xff] %vm224, 0.0
      $region36: #{vautoencoder_forward.8} parent=31 // pred_fallthru
        _
      %v233 = vld [vmem:[#allocation2] sm:$0xff]
      %v234 = vld [vmem:[#allocation2 + $0x8] sm:$0xff]
      %v235 = vld [vmem:[#allocation2 + $0x10] sm:$0xff]
      %v236 = vld [vmem:[#allocation2 + $0x18] sm:$0xff]
      %v237 = vld [vmem:[#allocation2 + $0x20] sm:$0xff]
      %v238 = vld [vmem:[#allocation2 + $0x28] sm:$0xff]
      %v239 = vld [vmem:[#allocation2 + $0x30] sm:$0xff]
      %v240 = vld [vmem:[#allocation2 + $0x38] sm:$0xff]
      %v241 = vld [vmem:[%s205] sm:$0xf]
      %v242 = vld [vmem:[%s205 + $0x4] sm:$0xf]
      %v243 = vld [vmem:[%s205 + $0x8] sm:$0xf]
      %v244 = vld [vmem:[%s205 + $0xc] sm:$0xf]
      %v245 = vld [vmem:[%s205 + $0x10] sm:$0xf]
      %v246 = vld [vmem:[%s205 + $0x14] sm:$0xf]
      %v247 = vld [vmem:[%s205 + $0x18] sm:$0xf]
      %v248 = vld [vmem:[%s205 + $0x1c] sm:$0xf]
      %v249 = vld [vmem:[%s211] sm:$0xf]
      %v250 = vld [vmem:[%s211 + $0x4] sm:$0xf]
      %v251 = vld [vmem:[%s211 + $0x8] sm:$0xf]
      %v252 = vld [vmem:[%s211 + $0xc] sm:$0xf]
      %v253 = vld [vmem:[%s211 + $0x10] sm:$0x3]
      %v262 = vunpack.c.l.b16 %v241
      %v263 = vunpack.c.l.b16 %v242
      %v264 = vunpack.c.l.b16 %v243
      %v265 = vunpack.c.l.b16 %v244
      %v266 = vunpack.c.l.b16 %v245
      %v267 = vunpack.c.l.b16 %v246
      %v268 = vunpack.c.l.b16 %v247
      %v269 = vunpack.c.l.b16 %v248
      %v270 = vpack.c.b16 %v263, %v262
      %v271 = vpack.c.b16 %v265, %v264
      %v272 = vpack.c.b16 %v267, %v266
      %v273 = vpack.c.b16 %v269, %v268
      %v279 = vunpack.c.l.b16 %v249
      %v280 = vunpack.c.l.b16 %v250
      %v281 = vunpack.c.l.b16 %v251
      %v282 = vunpack.c.l.b16 %v252
      %v283 = vunpack.c.l.b16 %v253
      %v284 = vpack.c.b16 %v280, %v279
      %v285 = vpack.c.b16 %v282, %v281
      %v286 = vpack.c.b16 %v283, %v283
      %vm289 = vcmask 293888
      %v291 = vsel %vm289, %v270, 0
      %v294 = vsel %vm289, %v271, 0
      %v297 = vsel %vm289, %v272, 0
      %v300 = vsel %vm289, %v273, 0
      %vm302 = vcmask 1041408
      %v304 = vsel %vm302, %v286, 0
      %306 = vmatprep.subr.bf16.mxu0 0
      %307 = vmatpush1.bf16.msra.mxu0 %v284
      %308 = vmatprep.subr.bf16.mxu0 0
      %309 = vmatpush1.bf16.msra.mxu0 %v285
      %310 = vmatprep.subr.bf16.mxu0 0
      %311 = vmatpush1.bf16.msra.mxu0 %v304
      %312 = vmatprep.subr.bf16.mxu0 0
      %313 = vmatpush1.bf16.msra.mxu0 0
      %314 = vmatprep.subr.bf16.mxu0 0
      %315 = vmatpush1.bf16.msra.mxu0 0
      %316 = vmatprep.subr.bf16.mxu0 0
      %317 = vmatpush1.bf16.msra.mxu0 0
      %318 = vmatprep.subr.bf16.mxu0 0
      %319 = vmatpush1.bf16.msra.mxu0 0
      %320 = vmatprep.subr.bf16.mxu0 0
      %321 = vmatpush1.bf16.msra.mxu0 0
      %322 = vmatprep.subr.bf16.mxu0 0
      %323 = vmatpush1.bf16.msra.mxu0 0
      %324 = vmatprep.subr.bf16.mxu0 0
      %325 = vmatpush1.bf16.msra.mxu0 0
      %326 = vmatprep.subr.bf16.mxu0 0
      %327 = vmatpush1.bf16.msra.mxu0 0
      %328 = vmatprep.subr.bf16.mxu0 0
      %329 = vmatpush1.bf16.msra.mxu0 0
      %330 = vmatprep.subr.bf16.mxu0 0
      %331 = vmatpush1.bf16.msra.mxu0 0
      %332 = vmatprep.subr.bf16.mxu0 0
      %333 = vmatpush1.bf16.msra.mxu0 0
      %334 = vmatprep.subr.bf16.mxu0 0
      %335 = vmatpush1.bf16.msra.mxu0 0
      %336 = vmatprep.subr.bf16.mxu0 0
      %337 = vmatpush1.bf16.msra.mxu0 0
      %338 = vmatprep.mubr.bf16.mxu0 0
      %339 = vmatmul.mubr.bf16.gmra.mrb[0].mxu0 %v291
      %v340 = vpop.f32.mrb[0].mxu0
      %v341 = vadd.f32 0.0, %v340
      %v342 = vpop.f32.mrb[0].mxu0
      %v343 = vpop.f32.mrb[0].mxu0
      %v344 = vadd.f32 0.0, %v343
      %v345 = vpop.f32.mrb[0].mxu0
      %346 = vmatprep.mubr.bf16.mxu0 0
      %347 = vmatmul.mubr.bf16.gmra.mrb[0].mxu0 %v294
      %v348 = vpop.f32.mrb[0].mxu0
      %v349 = vadd.f32 0.0, %v348
      %v350 = vpop.f32.mrb[0].mxu0
      %v351 = vpop.f32.mrb[0].mxu0
      %v352 = vadd.f32 0.0, %v351
      %v353 = vpop.f32.mrb[0].mxu0
      %354 = vmatprep.mubr.bf16.mxu0 0
      %355 = vmatmul.mubr.bf16.gmra.mrb[0].mxu0 %v297
      %v356 = vpop.f32.mrb[0].mxu0
      %v357 = vadd.f32 0.0, %v356
      %v358 = vpop.f32.mrb[0].mxu0
      %v359 = vpop.f32.mrb[0].mxu0
      %v360 = vadd.f32 0.0, %v359
      %v361 = vpop.f32.mrb[0].mxu0
      %362 = vmatprep.mubr.bf16.mxu0 0
      %363 = vmatmul.mubr.bf16.gmra.mrb[0].mxu0 %v300
      %v364 = vpop.f32.mrb[0].mxu0
      %v365 = vadd.f32 0.0, %v364
      %v366 = vpop.f32.mrb[0].mxu0
      %v367 = vpop.f32.mrb[0].mxu0
      %v368 = vadd.f32 0.0, %v367
      %v369 = vpop.f32.mrb[0].mxu0
      %370 = vdwg.mxu0
      %v371 = vadd.f32 %v233, %v341
      %v372 = vadd.f32 %v234, %v344
      %v373 = vadd.f32 %v235, %v349
      %v374 = vadd.f32 %v236, %v352
      %v375 = vadd.f32 %v237, %v357
      %v376 = vadd.f32 %v238, %v360
      %v377 = vadd.f32 %v239, %v365
      %v378 = vadd.f32 %v240, %v368
      %vm379 = vcmask 130048
      %380 = vst.msk [vmem:[#allocation2] sm:$0xff] %vm379, %v371
      %381 = vst.msk [vmem:[#allocation2 + $0x8] sm:$0xff] %vm379, %v372
      %382 = vst.msk [vmem:[#allocation2 + $0x10] sm:$0xff] %vm379, %v373
      %383 = vst.msk [vmem:[#allocation2 + $0x18] sm:$0xff] %vm379, %v374
      %384 = vst.msk [vmem:[#allocation2 + $0x20] sm:$0xff] %vm379, %v375
      %385 = vst.msk [vmem:[#allocation2 + $0x28] sm:$0xff] %vm379, %v376
      %386 = vst.msk [vmem:[#allocation2 + $0x30] sm:$0xff] %vm379, %v377
      %387 = vst.msk [vmem:[#allocation2 + $0x38] sm:$0xff] %vm379, %v378
      // Predicated region
      $region37: #{vautoencoder_forward.8} parent=31 // pred_check
        %p388 = pneg %p220
      $region38: #{vautoencoder_forward.8} parent=31 // pred_check_branch
        %390 = sbr.rel (%p388) target = $region40
      $region39: #{vautoencoder_forward.8} parent=31 // pred_region
        %v391 = vld [vmem:[#allocation2] sm:$0xff]
        %v392 = vld [vmem:[#allocation2 + $0x8] sm:$0xff]
        %v393 = vld [vmem:[#allocation2 + $0x10] sm:$0xff]
        %v394 = vld [vmem:[#allocation2 + $0x18] sm:$0xff]
        %v395 = vld [vmem:[#allocation2 + $0x20] sm:$0xff]
        %v396 = vld [vmem:[#allocation2 + $0x28] sm:$0xff]
        %v397 = vld [vmem:[#allocation2 + $0x30] sm:$0xff]
        %v398 = vld [vmem:[#allocation2 + $0x38] sm:$0xff]
        %v399 = vld [vmem:[%s2] sm:$0x1]
        %v401 = vlaneseq
        %v402 = vshrl.u32 %v401, 7
        %v403 = vsub.s32 0, %v402
        %v404 = vrot.slane %v399, %v403
        %v406 = vadd.f32 %v391, %v404
        %v407 = vadd.f32 %v392, %v404
        %v408 = vadd.f32 %v393, %v404
        %v409 = vadd.f32 %v394, %v404
        %v410 = vadd.f32 %v395, %v404
        %v411 = vadd.f32 %v396, %v404
        %v412 = vadd.f32 %v397, %v404
        %v413 = vadd.f32 %v398, %v404
        %v414 = vmax.f32 %v406, 0.0
        %v415 = vmax.f32 %v407, 0.0
        %v416 = vmax.f32 %v408, 0.0
        %v417 = vmax.f32 %v409, 0.0
        %v418 = vmax.f32 %v410, 0.0
        %v419 = vmax.f32 %v411, 0.0
        %v420 = vmax.f32 %v412, 0.0
        %v421 = vmax.f32 %v413, 0.0
        %v422 = vpack.c.bf16 %v415, %v414
        %v423 = vpack.c.bf16 %v417, %v416
        %v424 = vpack.c.bf16 %v419, %v418
        %v425 = vpack.c.bf16 %v421, %v420
        %v430 = vunpack.c.l.b16 %v422
        %v431 = vunpack.c.h.b16 %v422
        %v432 = vunpack.c.l.b16 %v423
        %v433 = vunpack.c.h.b16 %v423
        %v434 = vunpack.c.l.b16 %v424
        %v435 = vunpack.c.h.b16 %v424
        %v436 = vunpack.c.l.b16 %v425
        %v437 = vunpack.c.h.b16 %v425
        %v438 = vpack.c.b16 %v430, %v430
        %v439 = vpack.c.b16 %v431, %v431
        %v440 = vpack.c.b16 %v432, %v432
        %v441 = vpack.c.b16 %v433, %v433
        %v442 = vpack.c.b16 %v434, %v434
        %v443 = vpack.c.b16 %v435, %v435
        %v444 = vpack.c.b16 %v436, %v436
        %v445 = vpack.c.b16 %v437, %v437
        %vm454 = vcmask 125952
        %455 = vst.msk [vmem:[%s217] sm:$0xf] %vm454, %v438
        %456 = vst.msk [vmem:[%s217 + $0x4] sm:$0xf] %vm454, %v439
        %457 = vst.msk [vmem:[%s217 + $0x8] sm:$0xf] %vm454, %v440
        %458 = vst.msk [vmem:[%s217 + $0xc] sm:$0xf] %vm454, %v441
        %459 = vst.msk [vmem:[%s217 + $0x10] sm:$0xf] %vm454, %v442
        %460 = vst.msk [vmem:[%s217 + $0x14] sm:$0xf] %vm454, %v443
        %461 = vst.msk [vmem:[%s217 + $0x18] sm:$0xf] %vm454, %v444
        %462 = vst.msk [vmem:[%s217 + $0x1c] sm:$0xf] %vm454, %v445
      $region40: #{vautoencoder_forward.8} parent=31 // pred_fallthru
        _
      %s463 = smul.u32 8, %s18
      %p464 = scmp.lt.s32.totalorder %s463, 15
      %s465 = scalar_select %p464, %s463, 15
      %s466 = smul.addr %s465, 4
      %s467 = scalar_lea.vmem %s3, %s466
      // Predicated region
      $region41: #{vautoencoder_forward.8} parent=31 // pred_check
        %p468 = pneg %p119
      $region42: #{vautoencoder_forward.8} parent=31 // pred_check_branch
        %470 = sbr.rel (%p468) target = $region44
      $region43: #{vautoencoder_forward.8} parent=31 // pred_region
        %s471 = smul.u32 8, %s18
      $region44: #{vautoencoder_forward.8} parent=31 // pred_fallthru
        _
    $region32: #{vautoencoder_forward.8} parent=5 // pred_fallthru
      _
    %p472 = scmp.le.s32.totalorder 2, %s9
    // Predicated region
    $region45: #{vautoencoder_forward.8} parent=5 // pred_check
      %p473 = pneg %p472
    $region46: #{vautoencoder_forward.8} parent=5 // pred_check_branch
      %475 = sbr.rel (%p473) target = $region48
    $region47: #{vautoencoder_forward.8} parent=5 // pred_region
      %s476 = ssub.s32 %s9, 2
      // Predicated region
      $region49: #{vautoencoder_forward.8} parent=47 // pred_check
        %p477 = pneg %p125
      $region50: #{vautoencoder_forward.8} parent=47 // pred_check_branch
        %479 = sbr.rel (%p477) target = $region52
      $region51: #{vautoencoder_forward.8} parent=47 // pred_region
        %s480 = smul.u32 8, %s20
        %p481 = scmp.lt.s32.totalorder %s480, 15
        %s482 = scalar_select %p481, %s480, 15
        %s483 = smul.addr %s482, 4
        %s484 = scalar_lea.vmem %s3, %s483
      $region52: #{vautoencoder_forward.8} parent=47 // pred_fallthru
        _
    $region48: #{vautoencoder_forward.8} parent=5 // pred_fallthru
      _
  $region6: #{vautoencoder_forward.8} parent=0 // loop_footer
    %s13 = sadd.s32 1, %s9
  $region7: #{vautoencoder_forward.8} parent=0 // loop_footer_branch
    %8 = sbr.rel target = $region3
  $region8: #{vautoencoder_forward.8} parent=0 // loop_exit
    _

// kernel: vautoencoder_forward.9
$region0: #{vautoencoder_forward.9}
  #allocation0 [shape = 'u32[]', space=smem, size = 0x4, offset = 0x4, fixed_abs, tag = 'smem constant byte address 0x4 - core index']
  #allocation1 [shape = 'u32[144,128]{1,0:T(1,128)}', space=vmem, size = 0x12000, scoped, tag = 'internal scratch']
  #allocation2 [shape = 'f32[16,32]{1,0:T(8,128)}', space=vmem, size = 0x2000, scoped, tag = 'scratch operand']
  %s0 = inlined_call_operand.vmem [shape: bf16[32,144], index: 0, kind: input, shape index: {}]
  %s1 = inlined_call_operand.vmem [shape: bf16[144,32], index: 1, kind: input, shape index: {}]
  %s2 = inlined_call_operand.vmem [shape: f32[1,32], index: 2, kind: input, shape index: {}]
  %s3 = inlined_call_operand.vmem [shape: bf16[32,32], index: 3, kind: output, shape index: {}]
  %s4 = sld [smem:[#allocation0]]
  $region53: #{vautoencoder_forward.9} parent=0
    _
  %s6 = ssub.s32 1, %s4
  %s7 = scalar_select 0, %s6, %s4
  loop: start=0, step=1, limit=4
  $region2: #{vautoencoder_forward.9} parent=0 // loop_pre_header
    _
  $region3: #{vautoencoder_forward.9} parent=0 // loop_header
    %s9 = sphi 0, %s13
    %p10 = scmp.ge.s32.totalorder %s9, 4
    %s16 = sphi 0, %s28
    %s17 = sphi 0, %s24
    %s18 = sphi 0, %s16
    %s19 = sphi 0, %s17
    %s20 = sphi 0, %s18
    %s21 = sphi 0, %s19
    %s33 = sphi 0, %s35
    %s36 = sphi 0, %s33
    %s37 = sphi 0, %s36
    %s53 = sphi 0, %s37
    %s59 = sphi 0, %s61
    %s62 = sphi 0, %s59
    %s63 = sphi 0, %s62
    %s79 = sphi 0, %s63
    %s83 = sphi 0, %s83
    %s85 = sphi 0, %s83
    %s86 = sphi 0, %s85
    %s100 = sphi 0, %s86
    %s106 = sphi 0, %s108
    %s109 = sphi 0, %s106
    %s110 = sphi 0, %s109
    %s126 = sphi 0, %s110
  $region4: #{vautoencoder_forward.9} parent=0 // loop_header_branch
    %12 = sbr.rel (%p10) target = $region8
  $region5: #{vautoencoder_forward.9} parent=0 // loop_body
    %s14 = ssub.s32 %s9, 1
    %s15 = ssub.s32 %s9, 2
    %s22 = sadd.s32 1, %s17
    %p23 = scmp.ge.s32.totalorder %s22, 1
    %s24 = scalar_select %p23, 0, %s22
    %s25 = sadd.s32 1, %s16
    %s26 = scalar_select %p23, %s25, %s16
    %p27 = scmp.ge.s32.totalorder %s26, 2
    %s28 = scalar_select %p27, 0, %s26
    %s29 = ssub.s32 %s16, %s28
    %s30 = ssub.s32 %s17, %s24
    %s31 = sor.u32 %s29, %s30
    %p32 = scmp.eq.s32.totalorder %s31, 0
    %s34 = sadd.s32 %s33, 1
    %s35 = scalar_select %p32, %s33, %s34
    %p38 = pneg %p32
    %p39 = scmp.eq.s32.totalorder %s9, 1
    %p40 = por %p38, %p39
    %p41 = scmp.ne.s32.totalorder %s33, %s36
    %p42 = scmp.eq.s32.totalorder %s9, 0
    %p43 = por %p41, %p42
    %p44 = scmp.ne.s32.totalorder %s33, %s36
    %p45 = scmp.eq.s32.totalorder %s14, 1
    %p46 = por %p44, %p45
    %p47 = scmp.ne.s32.totalorder %s36, %s37
    %p48 = scmp.eq.s32.totalorder %s14, 0
    %p49 = por %p47, %p48
    %p50 = scmp.ne.s32.totalorder %s36, %s37
    %p51 = scmp.eq.s32.totalorder %s15, 1
    %p52 = por %p50, %p51
    %p54 = scmp.ne.s32.totalorder %s37, %s53
    %p55 = scmp.eq.s32.totalorder %s15, 0
    %p56 = por %p54, %p55
    %s57 = ssub.s32 %s17, %s24
    %p58 = scmp.eq.s32.totalorder %s57, 0
    %s60 = sadd.s32 %s59, 1
    %s61 = scalar_select %p58, %s59, %s60
    %p64 = pneg %p58
    %p65 = scmp.eq.s32.totalorder %s9, 1
    %p66 = por %p64, %p65
    %p67 = scmp.ne.s32.totalorder %s59, %s62
    %p68 = scmp.eq.s32.totalorder %s9, 0
    %p69 = por %p67, %p68
    %p70 = scmp.ne.s32.totalorder %s59, %s62
    %p71 = scmp.eq.s32.totalorder %s14, 1
    %p72 = por %p70, %p71
    %p73 = scmp.ne.s32.totalorder %s62, %s63
    %p74 = scmp.eq.s32.totalorder %s14, 0
    %p75 = por %p73, %p74
    %p76 = scmp.ne.s32.totalorder %s62, %s63
    %p77 = scmp.eq.s32.totalorder %s15, 1
    %p78 = por %p76, %p77
    %p80 = scmp.ne.s32.totalorder %s63, %s79
    %p81 = scmp.eq.s32.totalorder %s15, 0
    %p82 = por %p80, %p81
    %s84 = sadd.s32 %s83, 1
    %p87 = scmp.eq.s32.totalorder %s9, 1
    %p88 = scmp.ne.s32.totalorder %s83, %s85
    %p89 = scmp.eq.s32.totalorder %s9, 0
    %p90 = por %p88, %p89
    %p91 = scmp.ne.s32.totalorder %s83, %s85
    %p92 = scmp.eq.s32.totalorder %s14, 1
    %p93 = por %p91, %p92
    %p94 = scmp.ne.s32.totalorder %s85, %s86
    %p95 = scmp.eq.s32.totalorder %s14, 0
    %p96 = por %p94, %p95
    %p97 = scmp.ne.s32.totalorder %s85, %s86
    %p98 = scmp.eq.s32.totalorder %s15, 1
    %p99 = por %p97, %p98
    %p101 = scmp.ne.s32.totalorder %s86, %s100
    %p102 = scmp.eq.s32.totalorder %s15, 0
    %p103 = por %p101, %p102
    %s104 = ssub.s32 %s16, %s28
    %p105 = scmp.eq.s32.totalorder %s104, 0
    %s107 = sadd.s32 %s106, 1
    %s108 = scalar_select %p105, %s106, %s107
    %p111 = pneg %p105
    %p112 = scmp.eq.s32.totalorder %s9, 1
    %p113 = por %p111, %p112
    %p114 = scmp.ne.s32.totalorder %s106, %s109
    %p115 = scmp.eq.s32.totalorder %s9, 0
    %p116 = por %p114, %p115
    %p117 = scmp.ne.s32.totalorder %s106, %s109
    %p118 = scmp.eq.s32.totalorder %s14, 1
    %p119 = por %p117, %p118
    %p120 = scmp.ne.s32.totalorder %s109, %s110
    %p121 = scmp.eq.s32.totalorder %s14, 0
    %p122 = por %p120, %p121
    %p123 = scmp.ne.s32.totalorder %s109, %s110
    %p124 = scmp.eq.s32.totalorder %s15, 1
    %p125 = por %p123, %p124
    %p127 = scmp.ne.s32.totalorder %s110, %s126
    %p128 = scmp.eq.s32.totalorder %s15, 0
    %p129 = por %p127, %p128
    %p130 = scmp.le.s32.totalorder 1, %s9
    %p131 = scmp.lt.s32.totalorder %s9, 3
    %p132 = pnand %p130, %p131
    %p133 = pneg %p132
    // Predicated region
    $region9: #{vautoencoder_forward.9} parent=5 // pred_check
      _
    $region10: #{vautoencoder_forward.9} parent=5 // pred_check_branch
      %135 = sbr.rel (%p132) target = $region12
    $region11: #{vautoencoder_forward.9} parent=5 // pred_region
      %s136 = ssub.s32 %s9, 1
      // Predicated region
      $region13: #{vautoencoder_forward.9} parent=11 // pred_check
        %p137 = pneg %p75
      $region14: #{vautoencoder_forward.9} parent=11 // pred_check_branch
        %139 = sbr.rel (%p137) target = $region16
      $region15: #{vautoencoder_forward.9} parent=11 // pred_region
        %s140 = smul.u32 18, %s19
        %p141 = scmp.lt.s32.totalorder %s140, 17
        %s142 = scalar_select %p141, %s140, 17
        %s143 = smul.addr %s142, 4
        %s144 = scalar_lea.vmem %s1, %s143
        %s145 = smul.u32 18, %s19
      $region16: #{vautoencoder_forward.9} parent=11 // pred_fallthru
        _
      // Predicated region
      $region17: #{vautoencoder_forward.9} parent=11 // pred_check
        %p146 = pneg %p96
      $region18: #{vautoencoder_forward.9} parent=11 // pred_check_branch
        %148 = sbr.rel (%p146) target = $region20
      $region19: #{vautoencoder_forward.9} parent=11 // pred_region
        _
      $region20: #{vautoencoder_forward.9} parent=11 // pred_fallthru
        _
    $region12: #{vautoencoder_forward.9} parent=5 // pred_fallthru
      _
    %p149 = scmp.lt.s32.totalorder %s9, 2
    // Predicated region
    $region21: #{vautoencoder_forward.9} parent=5 // pred_check
      %p150 = pneg %p149
    $region22: #{vautoencoder_forward.9} parent=5 // pred_check_branch
      %152 = sbr.rel (%p150) target = $region24
    $region23: #{vautoencoder_forward.9} parent=5 // pred_region
      // Predicated region
      $region25: #{vautoencoder_forward.9} parent=23 // pred_check
        %p153 = pneg %p43
      $region26: #{vautoencoder_forward.9} parent=23 // pred_check_branch
        %155 = sbr.rel (%p153) target = $region28
      $region27: #{vautoencoder_forward.9} parent=23 // pred_region
        %s156 = smul.u32 2, %s16
        %s157 = smul.u32 2, %s17
        %p158 = scmp.lt.s32.totalorder %s156, 3
        %s159 = scalar_select %p158, %s156, 3
        %p160 = scmp.lt.s32.totalorder %s157, 1
        %s161 = scalar_select %p160, %s157, 1
        %s162 = smul.addr %s159, 2
        %s163 = sadd.s32 %s161, %s162
        %s164 = smul.addr %s163, 4
        %s165 = scalar_lea.vmem %s0, %s164
        %s166 = smul.u32 2, %s16
        %s167 = smul.u32 2, %s17
      $region28: #{vautoencoder_forward.9} parent=23 // pred_fallthru
        _
    $region24: #{vautoencoder_forward.9} parent=5 // pred_fallthru
      _
    %p168 = scmp.le.s32.totalorder 1, %s9
    %p169 = scmp.lt.s32.totalorder %s9, 3
    %p170 = pnand %p168, %p169
    %p171 = pneg %p170
    // Predicated region
    $region29: #{vautoencoder_forward.9} parent=5 // pred_check
      _
    $region30: #{vautoencoder_forward.9} parent=5 // pred_check_branch
      %173 = sbr.rel (%p170) target = $region32
    $region31: #{vautoencoder_forward.9} parent=5 // pred_region
      %s174 = ssub.s32 %s9, 1
      %s175 = smul.u32 2, %s18
      %s176 = smul.u32 2, %s19
      %p177 = scmp.lt.s32.totalorder %s175, 3
      %s178 = scalar_select %p177, %s175, 3
      %p179 = scmp.lt.s32.totalorder %s176, 1
      %s180 = scalar_select %p179, %s176, 1
      %s181 = smul.addr %s178, 2
      %s182 = sadd.s32 %s180, %s181
      %s183 = smul.addr %s182, 4
      %s184 = scalar_lea.vmem %s0, %s183
      %p185 = pneg %p49
      %p186 = pneg %p46
      %s187 = smul.u32 18, %s19
      %p188 = scmp.lt.s32.totalorder %s187, 17
      %s189 = scalar_select %p188, %s187, 17
      %s190 = smul.addr %s189, 4
      %s191 = scalar_lea.vmem %s1, %s190
      %p192 = pneg %p75
      %p193 = pneg %p72
      %p194 = pneg %p96
      %p195 = pneg %p93
      %p196 = pneg %p122
      %p197 = pneg %p119
      %s198 = smul.u32 2, %s18
      %p199 = scmp.lt.s32.totalorder %s198, 3
      %s200 = scalar_select %p199, %s198, 3
      %s201 = smul.addr %s200, 4
      %s202 = scalar_lea.vmem %s3, %s201
      %s203 = smul.u32 2, %s18
      %s204 = smul.u32 2, %s19
      %p205 = scmp.lt.s32.totalorder %s203, 3
      %s206 = scalar_select %p205, %s203, 3
      %p207 = scmp.lt.s32.totalorder %s204, 1
      %s208 = scalar_select %p207, %s204, 1
      %s209 = smul.addr %s206, 2
      %s210 = sadd.s32 %s208, %s209
      %s211 = smul.addr %s210, 4
      %s212 = scalar_lea.vmem %s0, %s211
      %s213 = smul.u32 2, %s18
      %s214 = smul.u32 2, %s19
      %s215 = smul.u32 18, %s19
      %p216 = scmp.lt.s32.totalorder %s215, 17
      %s217 = scalar_select %p216, %s215, 17
      %s218 = smul.addr %s217, 4
      %s219 = scalar_lea.vmem %s1, %s218
      %s220 = smul.u32 18, %s19
      %s221 = smul.u32 2, %s18
      %p222 = scmp.lt.s32.totalorder %s221, 3
      %s223 = scalar_select %p222, %s221, 3
      %s224 = smul.addr %s223, 4
      %s225 = scalar_lea.vmem %s3, %s224
      %s226 = smul.u32 2, %s18
      %p228 = scmp.eq.s32.totalorder %s19, 0
      // Predicated region
      $region33: #{vautoencoder_forward.9} parent=31 // pred_check
        %p229 = pneg %p228
      $region34: #{vautoencoder_forward.9} parent=31 // pred_check_branch
        %231 = sbr.rel (%p229) target = $region36
      $region35: #{vautoencoder_forward.9} parent=31 // pred_region
        %vm232 = vcmask 261120
        %233 = vst.msk [vmem:[#allocation2] sm:$0xff] %vm232, 0.0
        %234 = vst.msk [vmem:[#allocation2 + $0x8] sm:$0xff] %vm232, 0.0
      $region36: #{vautoencoder_forward.9} parent=31 // pred_fallthru
        _
      %v235 = vld [vmem:[#allocation2] sm:$0xff]
      %v236 = vld [vmem:[#allocation2 + $0x8] sm:$0xff]
      %v237 = vld [vmem:[%s212] sm:$0xff]
      %v238 = vld [vmem:[%s212 + $0x8] sm:$0xff]
      %v239 = vld [vmem:[%s219] sm:$0xf]
      %v240 = vld [vmem:[%s219 + $0x4] sm:$0xf]
      %v241 = vld [vmem:[%s219 + $0x8] sm:$0xf]
      %v242 = vld [vmem:[%s219 + $0xc] sm:$0xf]
      %v243 = vld [vmem:[%s219 + $0x10] sm:$0xf]
      %v244 = vld [vmem:[%s219 + $0x14] sm:$0xf]
      %v245 = vld [vmem:[%s219 + $0x18] sm:$0xf]
      %v246 = vld [vmem:[%s219 + $0x1c] sm:$0xf]
      %v247 = vld [vmem:[%s219 + $0x20] sm:$0xf]
      %v248 = vld [vmem:[%s219 + $0x24] sm:$0xf]
      %v249 = vld [vmem:[%s219 + $0x28] sm:$0xf]
      %v250 = vld [vmem:[%s219 + $0x2c] sm:$0xf]
      %v251 = vld [vmem:[%s219 + $0x30] sm:$0xf]
      %v252 = vld [vmem:[%s219 + $0x34] sm:$0xf]
      %v253 = vld [vmem:[%s219 + $0x38] sm:$0xf]
      %v254 = vld [vmem:[%s219 + $0x3c] sm:$0xf]
      %v255 = vld [vmem:[%s219 + $0x40] sm:$0xf]
      %v256 = vld [vmem:[%s219 + $0x44] sm:$0xf]
      %v259 = vunpack.c.l.b16 %v237
      %v260 = vunpack.c.h.b16 %v237
      %v261 = vunpack.c.l.b16 %v238
      %v262 = vunpack.c.h.b16 %v238
      %v263 = vpack.c.b16 %v261, %v259
      %v264 = vpack.c.b16 %v262, %v260
      %v284 = vunpack.c.l.b16 %v239
      %v285 = vunpack.c.l.b16 %v240
      %v286 = vunpack.c.l.b16 %v241
      %v287 = vunpack.c.l.b16 %v242
      %v288 = vunpack.c.l.b16 %v243
      %v289 = vunpack.c.l.b16 %v244
      %v290 = vunpack.c.l.b16 %v245
      %v291 = vunpack.c.l.b16 %v246
      %v292 = vunpack.c.l.b16 %v247
      %v293 = vunpack.c.l.b16 %v248
      %v294 = vunpack.c.l.b16 %v249
      %v295 = vunpack.c.l.b16 %v250
      %v296 = vunpack.c.l.b16 %v251
      %v297 = vunpack.c.l.b16 %v252
      %v298 = vunpack.c.l.b16 %v253
      %v299 = vunpack.c.l.b16 %v254
      %v300 = vunpack.c.l.b16 %v255
      %v301 = vunpack.c.l.b16 %v256
      %v302 = vpack.c.b16 %v285, %v284
      %v303 = vpack.c.b16 %v287, %v286
      %v304 = vpack.c.b16 %v289, %v288
      %v305 = vpack.c.b16 %v291, %v290
      %v306 = vpack.c.b16 %v293, %v292
      %v307 = vpack.c.b16 %v295, %v294
      %v308 = vpack.c.b16 %v297, %v296
      %v309 = vpack.c.b16 %v299, %v298
      %v310 = vpack.c.b16 %v301, %v300
      %vm320 = vcmask 130048
      %v322 = vsel %vm320, %v264, 0
      %324 = vmatprep.subr.bf16.mxu0 0
      %325 = vmatpush1.bf16.msra.mxu0 %v302
      %326 = vmatprep.subr.bf16.mxu0 0
      %327 = vmatpush1.bf16.msra.mxu0 %v303
      %328 = vmatprep.subr.bf16.mxu0 0
      %329 = vmatpush1.bf16.msra.mxu0 %v304
      %330 = vmatprep.subr.bf16.mxu0 0
      %331 = vmatpush1.bf16.msra.mxu0 %v305
      %332 = vmatprep.subr.bf16.mxu0 0
      %333 = vmatpush1.bf16.msra.mxu0 %v306
      %334 = vmatprep.subr.bf16.mxu0 0
      %335 = vmatpush1.bf16.msra.mxu0 %v307
      %336 = vmatprep.subr.bf16.mxu0 0
      %337 = vmatpush1.bf16.msra.mxu0 %v308
      %338 = vmatprep.subr.bf16.mxu0 0
      %339 = vmatpush1.bf16.msra.mxu0 %v309
      %340 = vmatprep.subr.bf16.mxu0 0
      %341 = vmatpush1.bf16.msra.mxu0 %v310
      %342 = vmatprep.subr.bf16.mxu0 0
      %343 = vmatpush1.bf16.msra.mxu0 0
      %344 = vmatprep.subr.bf16.mxu0 0
      %345 = vmatpush1.bf16.msra.mxu0 0
      %346 = vmatprep.subr.bf16.mxu0 0
      %347 = vmatpush1.bf16.msra.mxu0 0
      %348 = vmatprep.subr.bf16.mxu0 0
      %349 = vmatpush1.bf16.msra.mxu0 0
      %350 = vmatprep.subr.bf16.mxu0 0
      %351 = vmatpush1.bf16.msra.mxu0 0
      %352 = vmatprep.subr.bf16.mxu0 0
      %353 = vmatpush1.bf16.msra.mxu0 0
      %354 = vmatprep.subr.bf16.mxu0 0
      %355 = vmatpush1.bf16.msra.mxu0 0
      %356 = vmatprep.mubr.bf16.mxu0 %v322
      %357 = vmatmul.mubr.bf16.gmra.mrb[0].mxu0 %v263
      %v358 = vpop.f32.mrb[0].mxu0
      %v359 = vadd.f32 0.0, %v358
      %v360 = vpop.f32.mrb[0].mxu0
      %v361 = vpop.f32.mrb[0].mxu0
      %v362 = vadd.f32 0.0, %v361
      %v363 = vpop.f32.mrb[0].mxu0
      %364 = vdwg.mxu0
      %v365 = vadd.f32 %v235, %v359
      %v366 = vadd.f32 %v236, %v362
      %vm367 = vcmask 261120
      %368 = vst.msk [vmem:[#allocation2] sm:$0xff] %vm367, %v365
      %369 = vst.msk [vmem:[#allocation2 + $0x8] sm:$0xff] %vm367, %v366
      // Predicated region
      $region37: #{vautoencoder_forward.9} parent=31 // pred_check
        %p370 = pneg %p228
      $region38: #{vautoencoder_forward.9} parent=31 // pred_check_branch
        %372 = sbr.rel (%p370) target = $region40
      $region39: #{vautoencoder_forward.9} parent=31 // pred_region
        %v373 = vld [vmem:[#allocation2] sm:$0xff]
        %v374 = vld [vmem:[#allocation2 + $0x8] sm:$0xff]
        %v375 = vld [vmem:[%s2] sm:$0x1]
        %v377 = vlaneseq
        %v378 = vshrl.u32 %v377, 7
        %v379 = vsub.s32 0, %v378
        %v380 = vrot.slane %v375, %v379
        %v382 = vadd.f32 %v373, %v380
        %v383 = vadd.f32 %v374, %v380
        %v384 = vmax.f32 %v382, 0.0
        %v385 = vmax.f32 %v383, 0.0
        %v386 = vpack.c.bf16 %v385, %v384
        %v388 = vunpack.c.l.b16 %v386
        %v389 = vunpack.c.h.b16 %v386
        %v390 = vpack.c.b16 %v388, %v388
        %v391 = vpack.c.b16 %v389, %v389
        %vm394 = vcmask 257024
        %395 = vst.msk [vmem:[%s225] sm:$0xf] %vm394, %v390
        %396 = vst.msk [vmem:[%s225 + $0x4] sm:$0xf] %vm394, %v391
      $region40: #{vautoencoder_forward.9} parent=31 // pred_fallthru
        _
      %s397 = smul.u32 2, %s18
      %p398 = scmp.lt.s32.totalorder %s397, 3
      %s399 = scalar_select %p398, %s397, 3
      %s400 = smul.addr %s399, 4
      %s401 = scalar_lea.vmem %s3, %s400
      // Predicated region
      $region41: #{vautoencoder_forward.9} parent=31 // pred_check
        %p402 = pneg %p119
      $region42: #{vautoencoder_forward.9} parent=31 // pred_check_branch
        %404 = sbr.rel (%p402) target = $region44
      $region43: #{vautoencoder_forward.9} parent=31 // pred_region
        %s405 = smul.u32 2, %s18
      $region44: #{vautoencoder_forward.9} parent=31 // pred_fallthru
        _
    $region32: #{vautoencoder_forward.9} parent=5 // pred_fallthru
      _
    %p406 = scmp.le.s32.totalorder 2, %s9
    // Predicated region
    $region45: #{vautoencoder_forward.9} parent=5 // pred_check
      %p407 = pneg %p406
    $region46: #{vautoencoder_forward.9} parent=5 // pred_check_branch
      %409 = sbr.rel (%p407) target = $region48
    $region47: #{vautoencoder_forward.9} parent=5 // pred_region
      %s410 = ssub.s32 %s9, 2
      // Predicated region
      $region49: #{vautoencoder_forward.9} parent=47 // pred_check
        %p411 = pneg %p125
      $region50: #{vautoencoder_forward.9} parent=47 // pred_check_branch
        %413 = sbr.rel (%p411) target = $region52
      $region51: #{vautoencoder_forward.9} parent=47 // pred_region
        %s414 = smul.u32 2, %s20
        %p415 = scmp.lt.s32.totalorder %s414, 3
        %s416 = scalar_select %p415, %s414, 3
        %s417 = smul.addr %s416, 4
        %s418 = scalar_lea.vmem %s3, %s417
      $region52: #{vautoencoder_forward.9} parent=47 // pred_fallthru
        _
    $region48: #{vautoencoder_forward.9} parent=5 // pred_fallthru
      _
  $region6: #{vautoencoder_forward.9} parent=0 // loop_footer
    %s13 = sadd.s32 1, %s9
  $region7: #{vautoencoder_forward.9} parent=0 // loop_footer_branch
    %8 = sbr.rel target = $region3
  $region8: #{vautoencoder_forward.9} parent=0 // loop_exit
    _

// kernel: vautoencoder_forward.10
$region0: #{vautoencoder_forward.10}
  #allocation0 [shape = 'u32[]', space=smem, size = 0x4, offset = 0x4, fixed_abs, tag = 'smem constant byte address 0x4 - core index']
  #allocation1 [shape = 'u32[144,128]{1,0:T(1,128)}', space=vmem, size = 0x12000, scoped, tag = 'internal scratch']
  #allocation2 [shape = 'f32[8,64]{1,0:T(8,128)}', space=vmem, size = 0x1000, scoped, tag = 'scratch operand']
  %s0 = inlined_call_operand.vmem [shape: bf16[8,288], index: 0, kind: input, shape index: {}]
  %s1 = inlined_call_operand.vmem [shape: bf16[288,64], index: 1, kind: input, shape index: {}]
  %s2 = inlined_call_operand.vmem [shape: f32[1,64], index: 2, kind: input, shape index: {}]
  %s3 = inlined_call_operand.vmem [shape: bf16[8,64], index: 3, kind: output, shape index: {}]
  %s4 = sld [smem:[#allocation0]]
  $region30: #{vautoencoder_forward.10} parent=0
    _
  %s6 = ssub.s32 1, %s4
  %s7 = scalar_select 0, %s6, %s4
  // Predicated region
  $region2: #{vautoencoder_forward.10} parent=0 // pred_check
    _
  $region3: #{vautoencoder_forward.10} parent=0 // pred_check_branch
    %9 = sbr.rel (0) target = $region5
  $region4: #{vautoencoder_forward.10} parent=0 // pred_region
    _
  $region5: #{vautoencoder_forward.10} parent=0 // pred_fallthru
    _
  // Predicated region
  $region6: #{vautoencoder_forward.10} parent=0 // pred_check
    _
  $region7: #{vautoencoder_forward.10} parent=0 // pred_check_branch
    %11 = sbr.rel (0) target = $region9
  $region8: #{vautoencoder_forward.10} parent=0 // pred_region
    _
  $region9: #{vautoencoder_forward.10} parent=0 // pred_fallthru
    _
  // Predicated region
  $region10: #{vautoencoder_forward.10} parent=0 // pred_check
    _
  $region11: #{vautoencoder_forward.10} parent=0 // pred_check_branch
    %13 = sbr.rel (0) target = $region13
  $region12: #{vautoencoder_forward.10} parent=0 // pred_region
    _
  $region13: #{vautoencoder_forward.10} parent=0 // pred_fallthru
    _
  %p15 = scmp.eq.s32.totalorder 0, 0
  // Predicated region
  $region14: #{vautoencoder_forward.10} parent=0 // pred_check
    %p16 = pneg %p15
  $region15: #{vautoencoder_forward.10} parent=0 // pred_check_branch
    %18 = sbr.rel (%p16) target = $region17
  $region16: #{vautoencoder_forward.10} parent=0 // pred_region
    %vm19 = vcmask 523264
    %20 = vst.msk [vmem:[#allocation2] sm:$0xff] %vm19, 0.0
  $region17: #{vautoencoder_forward.10} parent=0 // pred_fallthru
    _
  %v21 = vld [vmem:[#allocation2] sm:$0xff]
  %v22 = vld [vmem:[%s0] sm:$0xff]
  %v23 = vld [vmem:[%s0 + $0x8] sm:$0xf]
  %v24 = vld [vmem:[%s1] sm:$0xf]
  %v25 = vld [vmem:[%s1 + $0x4] sm:$0xf]
  %v26 = vld [vmem:[%s1 + $0x8] sm:$0xf]
  %v27 = vld [vmem:[%s1 + $0xc] sm:$0xf]
  %v28 = vld [vmem:[%s1 + $0x10] sm:$0xf]
  %v29 = vld [vmem:[%s1 + $0x14] sm:$0xf]
  %v30 = vld [vmem:[%s1 + $0x18] sm:$0xf]
  %v31 = vld [vmem:[%s1 + $0x1c] sm:$0xf]
  %v32 = vld [vmem:[%s1 + $0x20] sm:$0xf]
  %v33 = vld [vmem:[%s1 + $0x24] sm:$0xf]
  %v34 = vld [vmem:[%s1 + $0x28] sm:$0xf]
  %v35 = vld [vmem:[%s1 + $0x2c] sm:$0xf]
  %v36 = vld [vmem:[%s1 + $0x30] sm:$0xf]
  %v37 = vld [vmem:[%s1 + $0x34] sm:$0xf]
  %v38 = vld [vmem:[%s1 + $0x38] sm:$0xf]
  %v39 = vld [vmem:[%s1 + $0x3c] sm:$0xf]
  %v40 = vld [vmem:[%s1 + $0x40] sm:$0xf]
  %v41 = vld [vmem:[%s1 + $0x44] sm:$0xf]
  %v42 = vld [vmem:[%s1 + $0x48] sm:$0xf]
  %v43 = vld [vmem:[%s1 + $0x4c] sm:$0xf]
  %v44 = vld [vmem:[%s1 + $0x50] sm:$0xf]
  %v45 = vld [vmem:[%s1 + $0x54] sm:$0xf]
  %v46 = vld [vmem:[%s1 + $0x58] sm:$0xf]
  %v47 = vld [vmem:[%s1 + $0x5c] sm:$0xf]
  %v48 = vld [vmem:[%s1 + $0x60] sm:$0xf]
  %v49 = vld [vmem:[%s1 + $0x64] sm:$0xf]
  %v50 = vld [vmem:[%s1 + $0x68] sm:$0xf]
  %v51 = vld [vmem:[%s1 + $0x6c] sm:$0xf]
  %v52 = vld [vmem:[%s1 + $0x70] sm:$0xf]
  %v53 = vld [vmem:[%s1 + $0x74] sm:$0xf]
  %v54 = vld [vmem:[%s1 + $0x78] sm:$0xf]
  %v55 = vld [vmem:[%s1 + $0x7c] sm:$0xf]
  %v56 = vld [vmem:[%s1 + $0x80] sm:$0xf]
  %v57 = vld [vmem:[%s1 + $0x84] sm:$0xf]
  %v58 = vld [vmem:[%s1 + $0x88] sm:$0xf]
  %v59 = vld [vmem:[%s1 + $0x8c] sm:$0xf]
  %v62 = vunpack.c.l.b16 %v22
  %v63 = vunpack.c.h.b16 %v22
  %v64 = vunpack.c.l.b16 %v23
  %v65 = vpack.c.b16 %v62, %v62
  %v66 = vpack.c.b16 %v63, %v63
  %v67 = vpack.c.b16 %v64, %v64
  %v106 = vunpack.c.l.b16 %v24
  %v107 = vunpack.c.l.b16 %v25
  %v108 = vunpack.c.l.b16 %v26
  %v109 = vunpack.c.l.b16 %v27
  %v110 = vunpack.c.l.b16 %v28
  %v111 = vunpack.c.l.b16 %v29
  %v112 = vunpack.c.l.b16 %v30
  %v113 = vunpack.c.l.b16 %v31
  %v114 = vunpack.c.l.b16 %v32
  %v115 = vunpack.c.l.b16 %v33
  %v116 = vunpack.c.l.b16 %v34
  %v117 = vunpack.c.l.b16 %v35
  %v118 = vunpack.c.l.b16 %v36
  %v119 = vunpack.c.l.b16 %v37
  %v120 = vunpack.c.l.b16 %v38
  %v121 = vunpack.c.l.b16 %v39
  %v122 = vunpack.c.l.b16 %v40
  %v123 = vunpack.c.l.b16 %v41
  %v124 = vunpack.c.l.b16 %v42
  %v125 = vunpack.c.l.b16 %v43
  %v126 = vunpack.c.l.b16 %v44
  %v127 = vunpack.c.l.b16 %v45
  %v128 = vunpack.c.l.b16 %v46
  %v129 = vunpack.c.l.b16 %v47
  %v130 = vunpack.c.l.b16 %v48
  %v131 = vunpack.c.l.b16 %v49
  %v132 = vunpack.c.l.b16 %v50
  %v133 = vunpack.c.l.b16 %v51
  %v134 = vunpack.c.l.b16 %v52
  %v135 = vunpack.c.l.b16 %v53
  %v136 = vunpack.c.l.b16 %v54
  %v137 = vunpack.c.l.b16 %v55
  %v138 = vunpack.c.l.b16 %v56
  %v139 = vunpack.c.l.b16 %v57
  %v140 = vunpack.c.l.b16 %v58
  %v141 = vunpack.c.l.b16 %v59
  %v142 = vpack.c.b16 %v107, %v106
  %v143 = vpack.c.b16 %v109, %v108
  %v144 = vpack.c.b16 %v111, %v110
  %v145 = vpack.c.b16 %v113, %v112
  %v146 = vpack.c.b16 %v115, %v114
  %v147 = vpack.c.b16 %v117, %v116
  %v148 = vpack.c.b16 %v119, %v118
  %v149 = vpack.c.b16 %v121, %v120
  %v150 = vpack.c.b16 %v123, %v122
  %v151 = vpack.c.b16 %v125, %v124
  %v152 = vpack.c.b16 %v127, %v126
  %v153 = vpack.c.b16 %v129, %v128
  %v154 = vpack.c.b16 %v131, %v130
  %v155 = vpack.c.b16 %v133, %v132
  %v156 = vpack.c.b16 %v135, %v134
  %v157 = vpack.c.b16 %v137, %v136
  %v158 = vpack.c.b16 %v139, %v138
  %v159 = vpack.c.b16 %v141, %v140
  %vm178 = vcmask 261120
  %v180 = vsel %vm178, %v67, 0
  %182 = vmatprep.subr.bf16.mxu0 0
  %183 = vmatpush1.bf16.msra.mxu0 %v142
  %184 = vmatprep.subr.bf16.mxu0 0
  %185 = vmatpush1.bf16.msra.mxu0 %v143
  %186 = vmatprep.subr.bf16.mxu0 0
  %187 = vmatpush1.bf16.msra.mxu0 %v144
  %188 = vmatprep.subr.bf16.mxu0 0
  %189 = vmatpush1.bf16.msra.mxu0 %v145
  %190 = vmatprep.subr.bf16.mxu0 0
  %191 = vmatpush1.bf16.msra.mxu0 %v146
  %192 = vmatprep.subr.bf16.mxu0 0
  %193 = vmatpush1.bf16.msra.mxu0 %v147
  %194 = vmatprep.subr.bf16.mxu0 0
  %195 = vmatpush1.bf16.msra.mxu0 %v148
  %196 = vmatprep.subr.bf16.mxu0 0
  %197 = vmatpush1.bf16.msra.mxu0 %v149
  %198 = vmatprep.subr.bf16.mxu0 0
  %199 = vmatpush1.bf16.msra.mxu0 %v150
  %200 = vmatprep.subr.bf16.mxu0 0
  %201 = vmatpush1.bf16.msra.mxu0 %v151
  %202 = vmatprep.subr.bf16.mxu0 0
  %203 = vmatpush1.bf16.msra.mxu0 %v152
  %204 = vmatprep.subr.bf16.mxu0 0
  %205 = vmatpush1.bf16.msra.mxu0 %v153
  %206 = vmatprep.subr.bf16.mxu0 0
  %207 = vmatpush1.bf16.msra.mxu0 %v154
  %208 = vmatprep.subr.bf16.mxu0 0
  %209 = vmatpush1.bf16.msra.mxu0 %v155
  %210 = vmatprep.subr.bf16.mxu0 0
  %211 = vmatpush1.bf16.msra.mxu0 %v156
  %212 = vmatprep.subr.bf16.mxu0 0
  %213 = vmatpush1.bf16.msra.mxu0 %v157
  %214 = vmatprep.mubr.bf16.mxu0 %v66
  %215 = vmatmul.mubr.bf16.gmra.mrb[0].mxu0 %v65
  %v216 = vpop.f32.mrb[0].mxu0
  %v217 = vadd.f32 0.0, %v216
  %v218 = vpop.f32.mrb[0].mxu0
  %v219 = vpop.f32.mrb[0].mxu0
  %v220 = vpop.f32.mrb[0].mxu0
  %221 = vdwg.mxu0
  %222 = vmatprep.subr.bf16.mxu0 0
  %223 = vmatpush1.bf16.msra.mxu0 %v158
  %224 = vmatprep.subr.bf16.mxu0 0
  %225 = vmatpush1.bf16.msra.mxu0 %v159
  %226 = vmatprep.subr.bf16.mxu0 0
  %227 = vmatpush1.bf16.msra.mxu0 0
  %228 = vmatprep.subr.bf16.mxu0 0
  %229 = vmatpush1.bf16.msra.mxu0 0
  %230 = vmatprep.subr.bf16.mxu0 0
  %231 = vmatpush1.bf16.msra.mxu0 0
  %232 = vmatprep.subr.bf16.mxu0 0
  %233 = vmatpush1.bf16.msra.mxu0 0
  %234 = vmatprep.subr.bf16.mxu0 0
  %235 = vmatpush1.bf16.msra.mxu0 0
  %236 = vmatprep.subr.bf16.mxu0 0
  %237 = vmatpush1.bf16.msra.mxu0 0
  %238 = vmatprep.subr.bf16.mxu0 0
  %239 = vmatpush1.bf16.msra.mxu0 0
  %240 = vmatprep.subr.bf16.mxu0 0
  %241 = vmatpush1.bf16.msra.mxu0 0
  %242 = vmatprep.subr.bf16.mxu0 0
  %243 = vmatpush1.bf16.msra.mxu0 0
  %244 = vmatprep.subr.bf16.mxu0 0
  %245 = vmatpush1.bf16.msra.mxu0 0
  %246 = vmatprep.subr.bf16.mxu0 0
  %247 = vmatpush1.bf16.msra.mxu0 0
  %248 = vmatprep.subr.bf16.mxu0 0
  %249 = vmatpush1.bf16.msra.mxu0 0
  %250 = vmatprep.subr.bf16.mxu0 0
  %251 = vmatpush1.bf16.msra.mxu0 0
  %252 = vmatprep.subr.bf16.mxu0 0
  %253 = vmatpush1.bf16.msra.mxu0 0
  %254 = vmatprep.mubr.bf16.mxu0 0
  %255 = vmatmul.mubr.bf16.gmra.mrb[0].mxu0 %v180
  %v256 = vpop.f32.mrb[0].mxu0
  %v257 = vadd.f32 %v217, %v256
  %v258 = vpop.f32.mrb[0].mxu0
  %v259 = vpop.f32.mrb[0].mxu0
  %v260 = vpop.f32.mrb[0].mxu0
  %261 = vdwg.mxu0
  %v262 = vadd.f32 %v21, %v257
  %vm263 = vcmask 523264
  %264 = vst.msk [vmem:[#allocation2] sm:$0xff] %vm263, %v262
  // Predicated region
  $region18: #{vautoencoder_forward.10} parent=0 // pred_check
    %p265 = pneg %p15
  $region19: #{vautoencoder_forward.10} parent=0 // pred_check_branch
    %267 = sbr.rel (%p265) target = $region21
  $region20: #{vautoencoder_forward.10} parent=0 // pred_region
    %v268 = vld [vmem:[#allocation2] sm:$0xff]
    %v269 = vld [vmem:[%s2] sm:$0x1]
    %v271 = vlaneseq
    %v272 = vshrl.u32 %v271, 7
    %v273 = vsub.s32 0, %v272
    %v274 = vrot.slane %v269, %v273
    %v276 = vadd.f32 %v268, %v274
    %v277 = vmax.f32 %v276, 0.0
    %v278 = vpack.c.bf16 %v277, %v277
    %vm279 = vcmask 519168
    %280 = vst.msk [vmem:[%s3] sm:$0xf] %vm279, %v278
  $region21: #{vautoencoder_forward.10} parent=0 // pred_fallthru
    _
  // Predicated region
  $region22: #{vautoencoder_forward.10} parent=0 // pred_check
    _
  $region23: #{vautoencoder_forward.10} parent=0 // pred_check_branch
    %282 = sbr.rel (0) target = $region25
  $region24: #{vautoencoder_forward.10} parent=0 // pred_region
    _
  $region25: #{vautoencoder_forward.10} parent=0 // pred_fallthru
    _
  // Predicated region
  $region26: #{vautoencoder_forward.10} parent=0 // pred_check
    _
  $region27: #{vautoencoder_forward.10} parent=0 // pred_check_branch
    %284 = sbr.rel (0) target = $region29
  $region28: #{vautoencoder_forward.10} parent=0 // pred_region
    _
  $region29: #{vautoencoder_forward.10} parent=0 // pred_fallthru
    _

// kernel: vautoencoder_forward.12
$region0: #{vautoencoder_forward.12}
  #allocation0 [shape = 'u32[]', space=smem, size = 0x4, offset = 0x4, fixed_abs, tag = 'smem constant byte address 0x4 - core index']
  #allocation1 [shape = 'u32[144,128]{1,0:T(1,128)}', space=vmem, size = 0x12000, scoped, tag = 'internal scratch']
  #allocation2 [shape = 'f32[2,256]{1,0:T(2,128)}', space=vmem, size = 0x800, scoped, tag = 'scratch operand']
  %s0 = inlined_call_operand.vmem [shape: bf16[2,32], index: 0, kind: input, shape index: {}]
  %s1 = inlined_call_operand.vmem [shape: bf16[32,256], index: 1, kind: input, shape index: {}]
  %s2 = inlined_call_operand.vmem [shape: f32[1,256], index: 2, kind: input, shape index: {}]
  %s3 = inlined_call_operand.vmem [shape: bf16[2,256], index: 3, kind: output, shape index: {}]
  %s4 = sld [smem:[#allocation0]]
  $region30: #{vautoencoder_forward.12} parent=0
    _
  %s6 = ssub.s32 1, %s4
  %s7 = scalar_select 0, %s6, %s4
  // Predicated region
  $region2: #{vautoencoder_forward.12} parent=0 // pred_check
    _
  $region3: #{vautoencoder_forward.12} parent=0 // pred_check_branch
    %9 = sbr.rel (0) target = $region5
  $region4: #{vautoencoder_forward.12} parent=0 // pred_region
    _
  $region5: #{vautoencoder_forward.12} parent=0 // pred_fallthru
    _
  // Predicated region
  $region6: #{vautoencoder_forward.12} parent=0 // pred_check
    _
  $region7: #{vautoencoder_forward.12} parent=0 // pred_check_branch
    %11 = sbr.rel (0) target = $region9
  $region8: #{vautoencoder_forward.12} parent=0 // pred_region
    _
  $region9: #{vautoencoder_forward.12} parent=0 // pred_fallthru
    _
  // Predicated region
  $region10: #{vautoencoder_forward.12} parent=0 // pred_check
    _
  $region11: #{vautoencoder_forward.12} parent=0 // pred_check_branch
    %13 = sbr.rel (0) target = $region13
  $region12: #{vautoencoder_forward.12} parent=0 // pred_region
    _
  $region13: #{vautoencoder_forward.12} parent=0 // pred_fallthru
    _
  %p15 = scmp.eq.s32.totalorder 0, 0
  // Predicated region
  $region14: #{vautoencoder_forward.12} parent=0 // pred_check
    %p16 = pneg %p15
  $region15: #{vautoencoder_forward.12} parent=0 // pred_check_branch
    %18 = sbr.rel (%p16) target = $region17
  $region16: #{vautoencoder_forward.12} parent=0 // pred_region
    %19 = vst [vmem:[#allocation2] sm:$0xf] 0.0
  $region17: #{vautoencoder_forward.12} parent=0 // pred_fallthru
    _
  %v20 = vld [vmem:[#allocation2] sm:$0xf]
  %v21 = vld [vmem:[%s0] sm:$0x1]
  %v22 = vld [vmem:[%s1] sm:$0xff]
  %v23 = vld [vmem:[%s1 + $0x8] sm:$0xff]
  %v24 = vld [vmem:[%s1 + $0x10] sm:$0xff]
  %v25 = vld [vmem:[%s1 + $0x18] sm:$0xff]
  %v30 = vunpack.c.l.b16 %v22
  %v31 = vunpack.c.h.b16 %v22
  %v32 = vunpack.c.l.b16 %v23
  %v33 = vunpack.c.h.b16 %v23
  %v34 = vunpack.c.l.b16 %v24
  %v35 = vunpack.c.h.b16 %v24
  %v36 = vunpack.c.l.b16 %v25
  %v37 = vunpack.c.h.b16 %v25
  %v38 = vpack.c.b16 %v32, %v30
  %v39 = vpack.c.b16 %v33, %v31
  %v40 = vpack.c.b16 %v36, %v34
  %v41 = vpack.c.b16 %v37, %v35
  %vm46 = vcmask 261120
  %v48 = vsel %vm46, %v21, 0
  %50 = vmatprep.subr.bf16.mxu0 %v39
  %51 = vmatpush1.bf16.msra.mxu0 %v38
  %52 = vmatprep.subr.bf16.mxu0 %v41
  %53 = vmatpush1.bf16.msra.mxu0 %v40
  %54 = vmatprep.subr.bf16.mxu0 0
  %55 = vmatpush1.bf16.msra.mxu0 0
  %56 = vmatprep.subr.bf16.mxu0 0
  %57 = vmatpush1.bf16.msra.mxu0 0
  %58 = vmatprep.subr.bf16.mxu0 0
  %59 = vmatpush1.bf16.msra.mxu0 0
  %60 = vmatprep.subr.bf16.mxu0 0
  %61 = vmatpush1.bf16.msra.mxu0 0
  %62 = vmatprep.subr.bf16.mxu0 0
  %63 = vmatpush1.bf16.msra.mxu0 0
  %64 = vmatprep.subr.bf16.mxu0 0
  %65 = vmatpush1.bf16.msra.mxu0 0
  %66 = vmatprep.subr.bf16.mxu0 0
  %67 = vmatpush1.bf16.msra.mxu0 0
  %68 = vmatprep.subr.bf16.mxu0 0
  %69 = vmatpush1.bf16.msra.mxu0 0
  %70 = vmatprep.subr.bf16.mxu0 0
  %71 = vmatpush1.bf16.msra.mxu0 0
  %72 = vmatprep.subr.bf16.mxu0 0
  %73 = vmatpush1.bf16.msra.mxu0 0
  %74 = vmatprep.subr.bf16.mxu0 0
  %75 = vmatpush1.bf16.msra.mxu0 0
  %76 = vmatprep.subr.bf16.mxu0 0
  %77 = vmatpush1.bf16.msra.mxu0 0
  %78 = vmatprep.subr.bf16.mxu0 0
  %79 = vmatpush1.bf16.msra.mxu0 0
  %80 = vmatprep.subr.bf16.mxu0 0
  %81 = vmatpush1.bf16.msra.mxu0 0
  %82 = vmatprep.mubr.bf16.mxu0 0
  %83 = vmatmul.mubr.bf16.gmra.mrb[0].mxu0 %v48
  %v84 = vpop.f32.mrb[0].mxu0
  %v85 = vadd.f32 0.0, %v84
  %v86 = vpop.f32.mrb[0].mxu0
  %v87 = vadd.f32 0.0, %v86
  %v88 = vpop.f32.mrb[0].mxu0
  %v89 = vpop.f32.mrb[0].mxu0
  %90 = vdwg.mxu0
  %v93 = vcombine.low %v85, %v87
  %v95 = vunpack.c.l.s4 1983009808
  %v96 = vunpack.c.0.s8 %v95
  %v97 = vlaneseq
  %v98 = vshrl.u32 %v97, 7
  %v99 = vsub.s32 %v96, %v98
  %v100 = vrot.slane %v93, %v99
  %v102 = vadd.f32 %v20, %v100
  %103 = vst [vmem:[#allocation2] sm:$0xf] %v102
  // Predicated region
  $region18: #{vautoencoder_forward.12} parent=0 // pred_check
    %p104 = pneg %p15
  $region19: #{vautoencoder_forward.12} parent=0 // pred_check_branch
    %106 = sbr.rel (%p104) target = $region21
  $region20: #{vautoencoder_forward.12} parent=0 // pred_region
    %v107 = vld [vmem:[#allocation2] sm:$0xf]
    %v108 = vld [vmem:[%s2] sm:$0x3]
    %v110 = vlaneseq
    %v111 = vshrl.u32 %v110, 7
    %v112 = vsub.s32 0, %v111
    %v113 = vrot.slane %v108, %v112
    %v114 = vlaneseq
    %v115 = vshrl.u32 %v114, 7
    %v116 = vsub.s32 1, %v115
    %v117 = vrot.slane %v108, %v116
    %v118 = vcombine.low %v113, %v117
    %v120 = vunpack.c.l.s4 1983009808
    %v121 = vunpack.c.0.s8 %v120
    %v122 = vlaneseq
    %v123 = vshrl.u32 %v122, 7
    %v124 = vsub.s32 %v121, %v123
    %v125 = vrot.slane %v118, %v124
    %v127 = vadd.f32 %v107, %v125
    %v128 = vmax.f32 %v127, 0.0
    %v131 = vunpack.c.l.s4 1983009808
    %v132 = vunpack.c.0.s8 %v131
    %v133 = vlaneseq
    %v134 = vshrl.u32 %v133, 7
    %v135 = vsub.s32 %v132, %v134
    %v136 = vrot.slane %v128, %v135
    %v137 = vcombine.high %v136, %v136
    %v140 = vpack.c.bf16 %v136, %v136
    %v141 = vpack.c.bf16 %v137, %v137
    %v144 = vcombine.low %v140, %v141
    %v146 = vunpack.c.l.s4 1966171168
    %v147 = vunpack.c.0.s8 %v146
    %v148 = vlaneseq
    %v149 = vshrl.u32 %v148, 7
    %v150 = vsub.s32 %v147, %v149
    %v151 = vrot.slane %v144, %v150
    %v153 = vunpack.c.l.s4 1966171168
    %v154 = vunpack.c.0.s8 %v153
    %v155 = vlaneseq
    %v156 = vshrl.u32 %v155, 7
    %v157 = vsub.s32 %v154, %v156
    %v158 = vrot.slane %v151, %v157
    %160 = vst [vmem:[%s3] sm:$0x3] %v158
  $region21: #{vautoencoder_forward.12} parent=0 // pred_fallthru
    _
  // Predicated region
  $region22: #{vautoencoder_forward.12} parent=0 // pred_check
    _
  $region23: #{vautoencoder_forward.12} parent=0 // pred_check_branch
    %162 = sbr.rel (0) target = $region25
  $region24: #{vautoencoder_forward.12} parent=0 // pred_region
    _
  $region25: #{vautoencoder_forward.12} parent=0 // pred_fallthru
    _
  // Predicated region
  $region26: #{vautoencoder_forward.12} parent=0 // pred_check
    _
  $region27: #{vautoencoder_forward.12} parent=0 // pred_check_branch
    %164 = sbr.rel (0) target = $region29
  $region28: #{vautoencoder_forward.12} parent=0 // pred_region
    _
  $region29: #{vautoencoder_forward.12} parent=0 // pred_fallthru
    _

// kernel: vautoencoder_forward.11
$region0: #{vautoencoder_forward.11}
  #allocation0 [shape = 'u32[]', space=smem, size = 0x4, offset = 0x4, fixed_abs, tag = 'smem constant byte address 0x4 - core index']
  #allocation1 [shape = 'u32[144,128]{1,0:T(1,128)}', space=vmem, size = 0x12000, scoped, tag = 'internal scratch']
  #allocation2 [shape = 'f32[2,64]{1,0:T(2,128)}', space=vmem, size = 0x400, scoped, tag = 'scratch operand']
  %s0 = inlined_call_operand.vmem [shape: bf16[2,256], index: 0, kind: input, shape index: {}]
  %s1 = inlined_call_operand.vmem [shape: bf16[256,64], index: 1, kind: input, shape index: {}]
  %s2 = inlined_call_operand.vmem [shape: f32[1,64], index: 2, kind: input, shape index: {}]
  %s3 = inlined_call_operand.vmem [shape: f32[2,32], index: 3, kind: input, shape index: {}]
  %s4 = inlined_call_operand.hbm [shape: f32[2,32], index: 4, kind: output, shape index: {0}]
  %s5 = inlined_call_operand.hbm [shape: f32[2,32], index: 5, kind: output, shape index: {1}]
  %s6 = inlined_call_operand.vmem [shape: bf16[2,32], index: 6, kind: output, shape index: {2}]
  %7 = xla_tuple %s4, %s5, %s6
  %s8 = sld [smem:[#allocation0]]
  $region50: #{vautoencoder_forward.11} parent=0
    _
  %s10 = ssub.s32 1, %s8
  %s11 = scalar_select 0, %s10, %s8
  $region1: #{vautoencoder_forward.11} parent=0
    #allocation3 [shape = 'u8[1024]{0}', space=vmem, size = 0x400, scoped, tag = 'output window, operand 0, single buffered']
    #allocation4 [shape = 's32[1]{0}', space=sflag, size = 0x4, scoped, tag = 'scoped memory for vautoencoder_forward.11']
    #allocation5 [shape = 'u8[1024]{0}', space=vmem, size = 0x400, scoped, tag = 'output window, operand 1, single buffered']
    #allocation6 [shape = 's32[1]{0}', space=sflag, size = 0x4, scoped, tag = 'scoped memory for vautoencoder_forward.11']
    %12 = vsyncpa [#allocation4], 0
    %13 = vsyncpa [#allocation6], 0
    // Predicated region
    $region2: #{vautoencoder_forward.11} parent=1 // pred_check
      _
    $region3: #{vautoencoder_forward.11} parent=1 // pred_check_branch
      %15 = sbr.rel (0) target = $region5
    $region4: #{vautoencoder_forward.11} parent=1 // pred_region
      _
    $region5: #{vautoencoder_forward.11} parent=1 // pred_fallthru
      _
    // Predicated region
    $region6: #{vautoencoder_forward.11} parent=1 // pred_check
      _
    $region7: #{vautoencoder_forward.11} parent=1 // pred_check_branch
      %17 = sbr.rel (0) target = $region9
    $region8: #{vautoencoder_forward.11} parent=1 // pred_region
      _
    $region9: #{vautoencoder_forward.11} parent=1 // pred_fallthru
      _
    // Predicated region
    $region10: #{vautoencoder_forward.11} parent=1 // pred_check
      _
    $region11: #{vautoencoder_forward.11} parent=1 // pred_check_branch
      %19 = sbr.rel (0) target = $region13
    $region12: #{vautoencoder_forward.11} parent=1 // pred_region
      _
    $region13: #{vautoencoder_forward.11} parent=1 // pred_fallthru
      _
    // Predicated region
    $region14: #{vautoencoder_forward.11} parent=1 // pred_check
      _
    $region15: #{vautoencoder_forward.11} parent=1 // pred_check_branch
      %21 = sbr.rel (0) target = $region17
    $region16: #{vautoencoder_forward.11} parent=1 // pred_region
      _
    $region17: #{vautoencoder_forward.11} parent=1 // pred_fallthru
      _
    %p23 = scmp.eq.s32.totalorder 0, 0
    // Predicated region
    $region18: #{vautoencoder_forward.11} parent=1 // pred_check
      %p24 = pneg %p23
    $region19: #{vautoencoder_forward.11} parent=1 // pred_check_branch
      %26 = sbr.rel (%p24) target = $region21
    $region20: #{vautoencoder_forward.11} parent=1 // pred_region
      %vm27 = vcmask 517120
      %28 = vst.msk [vmem:[#allocation2] sm:$0x3] %vm27, 0.0
    $region21: #{vautoencoder_forward.11} parent=1 // pred_fallthru
      _
    %v29 = vld [vmem:[#allocation2] sm:$0x3]
    %v30 = vld [vmem:[%s0] sm:$0x3]
    %v31 = vld [vmem:[%s1] sm:$0xf]
    %v32 = vld [vmem:[%s1 + $0x4] sm:$0xf]
    %v33 = vld [vmem:[%s1 + $0x8] sm:$0xf]
    %v34 = vld [vmem:[%s1 + $0xc] sm:$0xf]
    %v35 = vld [vmem:[%s1 + $0x10] sm:$0xf]
    %v36 = vld [vmem:[%s1 + $0x14] sm:$0xf]
    %v37 = vld [vmem:[%s1 + $0x18] sm:$0xf]
    %v38 = vld [vmem:[%s1 + $0x1c] sm:$0xf]
    %v39 = vld [vmem:[%s1 + $0x20] sm:$0xf]
    %v40 = vld [vmem:[%s1 + $0x24] sm:$0xf]
    %v41 = vld [vmem:[%s1 + $0x28] sm:$0xf]
    %v42 = vld [vmem:[%s1 + $0x2c] sm:$0xf]
    %v43 = vld [vmem:[%s1 + $0x30] sm:$0xf]
    %v44 = vld [vmem:[%s1 + $0x34] sm:$0xf]
    %v45 = vld [vmem:[%s1 + $0x38] sm:$0xf]
    %v46 = vld [vmem:[%s1 + $0x3c] sm:$0xf]
    %v47 = vld [vmem:[%s1 + $0x40] sm:$0xf]
    %v48 = vld [vmem:[%s1 + $0x44] sm:$0xf]
    %v49 = vld [vmem:[%s1 + $0x48] sm:$0xf]
    %v50 = vld [vmem:[%s1 + $0x4c] sm:$0xf]
    %v51 = vld [vmem:[%s1 + $0x50] sm:$0xf]
    %v52 = vld [vmem:[%s1 + $0x54] sm:$0xf]
    %v53 = vld [vmem:[%s1 + $0x58] sm:$0xf]
    %v54 = vld [vmem:[%s1 + $0x5c] sm:$0xf]
    %v55 = vld [vmem:[%s1 + $0x60] sm:$0xf]
    %v56 = vld [vmem:[%s1 + $0x64] sm:$0xf]
    %v57 = vld [vmem:[%s1 + $0x68] sm:$0xf]
    %v58 = vld [vmem:[%s1 + $0x6c] sm:$0xf]
    %v59 = vld [vmem:[%s1 + $0x70] sm:$0xf]
    %v60 = vld [vmem:[%s1 + $0x74] sm:$0xf]
    %v61 = vld [vmem:[%s1 + $0x78] sm:$0xf]
    %v62 = vld [vmem:[%s1 + $0x7c] sm:$0xf]
    %v65 = vunpack.c.l.s4 1966171168
    %v66 = vunpack.c.0.s8 %v65
    %v67 = vlaneseq
    %v68 = vshrl.u32 %v67, 7
    %v69 = vsub.s32 %v66, %v68
    %v70 = vrot.slane %v30, %v69
    %v71 = vcombine.high %v70, %v70
    %v73 = vunpack.c.l.s4 1966171168
    %v74 = vunpack.c.0.s8 %v73
    %v75 = vlaneseq
    %v76 = vshrl.u32 %v75, 7
    %v77 = vsub.s32 %v74, %v76
    %v78 = vrot.slane %v70, %v77
    %v80 = vunpack.c.l.s4 1966171168
    %v81 = vunpack.c.0.s8 %v80
    %v82 = vlaneseq
    %v83 = vshrl.u32 %v82, 7
    %v84 = vsub.s32 %v81, %v83
    %v85 = vrot.slane %v71, %v84
    %v120 = vunpack.c.l.b16 %v31
    %v121 = vunpack.c.l.b16 %v32
    %v122 = vunpack.c.l.b16 %v33
    %v123 = vunpack.c.l.b16 %v34
    %v124 = vunpack.c.l.b16 %v35
    %v125 = vunpack.c.l.b16 %v36
    %v126 = vunpack.c.l.b16 %v37
    %v127 = vunpack.c.l.b16 %v38
    %v128 = vunpack.c.l.b16 %v39
    %v129 = vunpack.c.l.b16 %v40
    %v130 = vunpack.c.l.b16 %v41
    %v131 = vunpack.c.l.b16 %v42
    %v132 = vunpack.c.l.b16 %v43
    %v133 = vunpack.c.l.b16 %v44
    %v134 = vunpack.c.l.b16 %v45
    %v135 = vunpack.c.l.b16 %v46
    %v136 = vunpack.c.l.b16 %v47
    %v137 = vunpack.c.l.b16 %v48
    %v138 = vunpack.c.l.b16 %v49
    %v139 = vunpack.c.l.b16 %v50
    %v140 = vunpack.c.l.b16 %v51
    %v141 = vunpack.c.l.b16 %v52
    %v142 = vunpack.c.l.b16 %v53
    %v143 = vunpack.c.l.b16 %v54
    %v144 = vunpack.c.l.b16 %v55
    %v145 = vunpack.c.l.b16 %v56
    %v146 = vunpack.c.l.b16 %v57
    %v147 = vunpack.c.l.b16 %v58
    %v148 = vunpack.c.l.b16 %v59
    %v149 = vunpack.c.l.b16 %v60
    %v150 = vunpack.c.l.b16 %v61
    %v151 = vunpack.c.l.b16 %v62
    %v152 = vpack.c.b16 %v121, %v120
    %v153 = vpack.c.b16 %v123, %v122
    %v154 = vpack.c.b16 %v125, %v124
    %v155 = vpack.c.b16 %v127, %v126
    %v156 = vpack.c.b16 %v129, %v128
    %v157 = vpack.c.b16 %v131, %v130
    %v158 = vpack.c.b16 %v133, %v132
    %v159 = vpack.c.b16 %v135, %v134
    %v160 = vpack.c.b16 %v137, %v136
    %v161 = vpack.c.b16 %v139, %v138
    %v162 = vpack.c.b16 %v141, %v140
    %v163 = vpack.c.b16 %v143, %v142
    %v164 = vpack.c.b16 %v145, %v144
    %v165 = vpack.c.b16 %v147, %v146
    %v166 = vpack.c.b16 %v149, %v148
    %v167 = vpack.c.b16 %v151, %v150
    %184 = vmatprep.subr.bf16.mxu0 0
    %185 = vmatpush1.bf16.msra.mxu0 %v152
    %186 = vmatprep.subr.bf16.mxu0 0
    %187 = vmatpush1.bf16.msra.mxu0 %v153
    %188 = vmatprep.subr.bf16.mxu0 0
    %189 = vmatpush1.bf16.msra.mxu0 %v154
    %190 = vmatprep.subr.bf16.mxu0 0
    %191 = vmatpush1.bf16.msra.mxu0 %v155
    %192 = vmatprep.subr.bf16.mxu0 0
    %193 = vmatpush1.bf16.msra.mxu0 %v156
    %194 = vmatprep.subr.bf16.mxu0 0
    %195 = vmatpush1.bf16.msra.mxu0 %v157
    %196 = vmatprep.subr.bf16.mxu0 0
    %197 = vmatpush1.bf16.msra.mxu0 %v158
    %198 = vmatprep.subr.bf16.mxu0 0
    %199 = vmatpush1.bf16.msra.mxu0 %v159
    %200 = vmatprep.subr.bf16.mxu0 0
    %201 = vmatpush1.bf16.msra.mxu0 %v160
    %202 = vmatprep.subr.bf16.mxu0 0
    %203 = vmatpush1.bf16.msra.mxu0 %v161
    %204 = vmatprep.subr.bf16.mxu0 0
    %205 = vmatpush1.bf16.msra.mxu0 %v162
    %206 = vmatprep.subr.bf16.mxu0 0
    %207 = vmatpush1.bf16.msra.mxu0 %v163
    %208 = vmatprep.subr.bf16.mxu0 0
    %209 = vmatpush1.bf16.msra.mxu0 %v164
    %210 = vmatprep.subr.bf16.mxu0 0
    %211 = vmatpush1.bf16.msra.mxu0 %v165
    %212 = vmatprep.subr.bf16.mxu0 0
    %213 = vmatpush1.bf16.msra.mxu0 %v166
    %214 = vmatprep.subr.bf16.mxu0 0
    %215 = vmatpush1.bf16.msra.mxu0 %v167
    %216 = vmatprep.mubr.bf16.mxu0 %v85
    %217 = vmatmul.mubr.bf16.gmra.mrb[0].mxu0 %v78
    %v218 = vpop.f32.mrb[0].mxu0
    %v219 = vadd.f32 0.0, %v218
    %v220 = vpop.f32.mrb[0].mxu0
    %v221 = vpop.f32.mrb[0].mxu0
    %v222 = vpop.f32.mrb[0].mxu0
    %223 = vdwg.mxu0
    %v224 = vadd.f32 %v29, %v219
    %vm225 = vcmask 517120
    %226 = vst.msk [vmem:[#allocation2] sm:$0x3] %vm225, %v224
    // Predicated region
    $region22: #{vautoencoder_forward.11} parent=1 // pred_check
      %p227 = pneg %p23
    $region23: #{vautoencoder_forward.11} parent=1 // pred_check_branch
      %229 = sbr.rel (%p227) target = $region25
    $region24: #{vautoencoder_forward.11} parent=1 // pred_region
      %v230 = vld [vmem:[#allocation2] sm:$0x3]
      %v231 = vld [vmem:[%s2] sm:$0x1]
      %v233 = vlaneseq
      %v234 = vshrl.u32 %v233, 7
      %v235 = vsub.s32 0, %v234
      %v236 = vrot.slane %v231, %v235
      %v238 = vadd.f32 %v230, %v236
      %v239 = vld [vmem:[%s3] sm:$0x3]
      %v240 = vmul.f32 %v238, -1.5
      %v241 = vmul.f32 %v240, 1.442695
      %v242 = vpow.pop %v241
      %244 = vrot.lane.b32.xlu0 %v242, 96
      %v245 = vpop.permute.xlu0 %244
      %v247 = vmul.f32 %v239, %v245
      %v248 = vadd.f32 %v238, %v247
      %vm249 = vcmask 254976
      %250 = vst.msk [vmem:[#allocation3] sm:$0x3] %vm249, %v238
      %252 = vrot.lane.b32.xlu0 %v238, 96
      %v253 = vpop.permute.xlu0 %252
      %255 = vst.msk [vmem:[#allocation5] sm:$0x3] %vm249, %v253
      %v256 = vpack.c.bf16 %v248, %v248
      %vm257 = vcmask 253952
      %258 = vst.msk [vmem:[%s6] sm:$0x1] %vm257, %v256
    $region25: #{vautoencoder_forward.11} parent=1 // pred_fallthru
      _
    // Predicated region
    $region26: #{vautoencoder_forward.11} parent=1 // pred_check
      _
    $region27: #{vautoencoder_forward.11} parent=1 // pred_check_branch
      %260 = sbr.rel (0) target = $region29
    $region28: #{vautoencoder_forward.11} parent=1 // pred_region
      %s262 = ssub.s32 32, 32
      %263 = vsyncadd [#allocation4], %s262
      %s265 = sshll.u32 [#allocation3], 4
      %s266 = int_to_ptr.vmem [resolvable:$true] %s265
      %268 = dma.vmem_to_hbm [thread:$0]  %s266, 32, %s4, [#allocation4]
    $region29: #{vautoencoder_forward.11} parent=1 // pred_fallthru
      _
    // Predicated region
    $region30: #{vautoencoder_forward.11} parent=1 // pred_check
      _
    $region31: #{vautoencoder_forward.11} parent=1 // pred_check_branch
      %270 = sbr.rel (0) target = $region33
    $region32: #{vautoencoder_forward.11} parent=1 // pred_region
      %s272 = ssub.s32 32, 32
      %273 = vsyncadd [#allocation6], %s272
      %s275 = sshll.u32 [#allocation5], 4
      %s276 = int_to_ptr.vmem [resolvable:$true] %s275
      %278 = dma.vmem_to_hbm [thread:$0]  %s276, 32, %s5, [#allocation6]
    $region33: #{vautoencoder_forward.11} parent=1 // pred_fallthru
      _
    // Predicated region
    $region34: #{vautoencoder_forward.11} parent=1 // pred_check
      _
    $region35: #{vautoencoder_forward.11} parent=1 // pred_check_branch
      %280 = sbr.rel (0) target = $region37
    $region36: #{vautoencoder_forward.11} parent=1 // pred_region
      _
    $region37: #{vautoencoder_forward.11} parent=1 // pred_fallthru
      _
    // Predicated region
    $region38: #{vautoencoder_forward.11} parent=1 // pred_check
      _
    $region39: #{vautoencoder_forward.11} parent=1 // pred_check_branch
      %282 = sbr.rel (0) target = $region41
    $region40: #{vautoencoder_forward.11} parent=1 // pred_region
      %283 = dma.done [#allocation4], 32
    $region41: #{vautoencoder_forward.11} parent=1 // pred_fallthru
      _
    // Predicated region
    $region42: #{vautoencoder_forward.11} parent=1 // pred_check
      _
    $region43: #{vautoencoder_forward.11} parent=1 // pred_check_branch
      %285 = sbr.rel (0) target = $region45
    $region44: #{vautoencoder_forward.11} parent=1 // pred_region
      %286 = dma.done [#allocation6], 32
    $region45: #{vautoencoder_forward.11} parent=1 // pred_fallthru
      _
    // Predicated region
    $region46: #{vautoencoder_forward.11} parent=1 // pred_check
      _
    $region47: #{vautoencoder_forward.11} parent=1 // pred_check_branch
      %288 = sbr.rel (0) target = $region49
    $region48: #{vautoencoder_forward.11} parent=1 // pred_region
      _
    $region49: #{vautoencoder_forward.11} parent=1 // pred_fallthru
      _
    %289 = vsyncpa [#allocation4], 1
    %290 = vsyncpa [#allocation6], 1

// kernel: vautoencoder_forward.13
$region0: #{vautoencoder_forward.13}
  #allocation0 [shape = 'u32[]', space=smem, size = 0x4, offset = 0x4, fixed_abs, tag = 'smem constant byte address 0x4 - core index']
  #allocation1 [shape = 'u32[144,128]{1,0:T(1,128)}', space=vmem, size = 0x12000, scoped, tag = 'internal scratch']
  #allocation2 [shape = 'f32[8,128]{1,0:T(8,128)}', space=vmem, size = 0x1000, scoped, tag = 'scratch operand']
  %s0 = inlined_call_operand.vmem [shape: bf16[8,256], index: 0, kind: input, shape index: {}]
  %s1 = inlined_call_operand.vmem [shape: bf16[256,128], index: 1, kind: input, shape index: {}]
  %s2 = inlined_call_operand.vmem [shape: f32[1,128], index: 2, kind: input, shape index: {}]
  %s3 = inlined_call_operand.vmem [shape: bf16[8,128], index: 3, kind: output, shape index: {}]
  %s4 = sld [smem:[#allocation0]]
  $region30: #{vautoencoder_forward.13} parent=0
    _
  %s6 = ssub.s32 1, %s4
  %s7 = scalar_select 0, %s6, %s4
  // Predicated region
  $region2: #{vautoencoder_forward.13} parent=0 // pred_check
    _
  $region3: #{vautoencoder_forward.13} parent=0 // pred_check_branch
    %9 = sbr.rel (0) target = $region5
  $region4: #{vautoencoder_forward.13} parent=0 // pred_region
    _
  $region5: #{vautoencoder_forward.13} parent=0 // pred_fallthru
    _
  // Predicated region
  $region6: #{vautoencoder_forward.13} parent=0 // pred_check
    _
  $region7: #{vautoencoder_forward.13} parent=0 // pred_check_branch
    %11 = sbr.rel (0) target = $region9
  $region8: #{vautoencoder_forward.13} parent=0 // pred_region
    _
  $region9: #{vautoencoder_forward.13} parent=0 // pred_fallthru
    _
  // Predicated region
  $region10: #{vautoencoder_forward.13} parent=0 // pred_check
    _
  $region11: #{vautoencoder_forward.13} parent=0 // pred_check_branch
    %13 = sbr.rel (0) target = $region13
  $region12: #{vautoencoder_forward.13} parent=0 // pred_region
    _
  $region13: #{vautoencoder_forward.13} parent=0 // pred_fallthru
    _
  %p15 = scmp.eq.s32.totalorder 0, 0
  // Predicated region
  $region14: #{vautoencoder_forward.13} parent=0 // pred_check
    %p16 = pneg %p15
  $region15: #{vautoencoder_forward.13} parent=0 // pred_check_branch
    %18 = sbr.rel (%p16) target = $region17
  $region16: #{vautoencoder_forward.13} parent=0 // pred_region
    %19 = vst [vmem:[#allocation2] sm:$0xff] 0.0
  $region17: #{vautoencoder_forward.13} parent=0 // pred_fallthru
    _
  %v20 = vld [vmem:[#allocation2] sm:$0xff]
  %v21 = vld [vmem:[%s0] sm:$0xff]
  %v22 = vld [vmem:[%s1] sm:$0xf]
  %v23 = vld [vmem:[%s1 + $0x4] sm:$0xf]
  %v24 = vld [vmem:[%s1 + $0x8] sm:$0xf]
  %v25 = vld [vmem:[%s1 + $0xc] sm:$0xf]
  %v26 = vld [vmem:[%s1 + $0x10] sm:$0xf]
  %v27 = vld [vmem:[%s1 + $0x14] sm:$0xf]
  %v28 = vld [vmem:[%s1 + $0x18] sm:$0xf]
  %v29 = vld [vmem:[%s1 + $0x1c] sm:$0xf]
  %v30 = vld [vmem:[%s1 + $0x20] sm:$0xf]
  %v31 = vld [vmem:[%s1 + $0x24] sm:$0xf]
  %v32 = vld [vmem:[%s1 + $0x28] sm:$0xf]
  %v33 = vld [vmem:[%s1 + $0x2c] sm:$0xf]
  %v34 = vld [vmem:[%s1 + $0x30] sm:$0xf]
  %v35 = vld [vmem:[%s1 + $0x34] sm:$0xf]
  %v36 = vld [vmem:[%s1 + $0x38] sm:$0xf]
  %v37 = vld [vmem:[%s1 + $0x3c] sm:$0xf]
  %v38 = vld [vmem:[%s1 + $0x40] sm:$0xf]
  %v39 = vld [vmem:[%s1 + $0x44] sm:$0xf]
  %v40 = vld [vmem:[%s1 + $0x48] sm:$0xf]
  %v41 = vld [vmem:[%s1 + $0x4c] sm:$0xf]
  %v42 = vld [vmem:[%s1 + $0x50] sm:$0xf]
  %v43 = vld [vmem:[%s1 + $0x54] sm:$0xf]
  %v44 = vld [vmem:[%s1 + $0x58] sm:$0xf]
  %v45 = vld [vmem:[%s1 + $0x5c] sm:$0xf]
  %v46 = vld [vmem:[%s1 + $0x60] sm:$0xf]
  %v47 = vld [vmem:[%s1 + $0x64] sm:$0xf]
  %v48 = vld [vmem:[%s1 + $0x68] sm:$0xf]
  %v49 = vld [vmem:[%s1 + $0x6c] sm:$0xf]
  %v50 = vld [vmem:[%s1 + $0x70] sm:$0xf]
  %v51 = vld [vmem:[%s1 + $0x74] sm:$0xf]
  %v52 = vld [vmem:[%s1 + $0x78] sm:$0xf]
  %v53 = vld [vmem:[%s1 + $0x7c] sm:$0xf]
  %v55 = vunpack.c.l.b16 %v21
  %v56 = vunpack.c.h.b16 %v21
  %v57 = vpack.c.b16 %v55, %v55
  %v58 = vpack.c.b16 %v56, %v56
  %v93 = vunpack.c.l.b16 %v22
  %v94 = vunpack.c.l.b16 %v23
  %v95 = vunpack.c.l.b16 %v24
  %v96 = vunpack.c.l.b16 %v25
  %v97 = vunpack.c.l.b16 %v26
  %v98 = vunpack.c.l.b16 %v27
  %v99 = vunpack.c.l.b16 %v28
  %v100 = vunpack.c.l.b16 %v29
  %v101 = vunpack.c.l.b16 %v30
  %v102 = vunpack.c.l.b16 %v31
  %v103 = vunpack.c.l.b16 %v32
  %v104 = vunpack.c.l.b16 %v33
  %v105 = vunpack.c.l.b16 %v34
  %v106 = vunpack.c.l.b16 %v35
  %v107 = vunpack.c.l.b16 %v36
  %v108 = vunpack.c.l.b16 %v37
  %v109 = vunpack.c.l.b16 %v38
  %v110 = vunpack.c.l.b16 %v39
  %v111 = vunpack.c.l.b16 %v40
  %v112 = vunpack.c.l.b16 %v41
  %v113 = vunpack.c.l.b16 %v42
  %v114 = vunpack.c.l.b16 %v43
  %v115 = vunpack.c.l.b16 %v44
  %v116 = vunpack.c.l.b16 %v45
  %v117 = vunpack.c.l.b16 %v46
  %v118 = vunpack.c.l.b16 %v47
  %v119 = vunpack.c.l.b16 %v48
  %v120 = vunpack.c.l.b16 %v49
  %v121 = vunpack.c.l.b16 %v50
  %v122 = vunpack.c.l.b16 %v51
  %v123 = vunpack.c.l.b16 %v52
  %v124 = vunpack.c.l.b16 %v53
  %v125 = vpack.c.b16 %v94, %v93
  %v126 = vpack.c.b16 %v96, %v95
  %v127 = vpack.c.b16 %v98, %v97
  %v128 = vpack.c.b16 %v100, %v99
  %v129 = vpack.c.b16 %v102, %v101
  %v130 = vpack.c.b16 %v104, %v103
  %v131 = vpack.c.b16 %v106, %v105
  %v132 = vpack.c.b16 %v108, %v107
  %v133 = vpack.c.b16 %v110, %v109
  %v134 = vpack.c.b16 %v112, %v111
  %v135 = vpack.c.b16 %v114, %v113
  %v136 = vpack.c.b16 %v116, %v115
  %v137 = vpack.c.b16 %v118, %v117
  %v138 = vpack.c.b16 %v120, %v119
  %v139 = vpack.c.b16 %v122, %v121
  %v140 = vpack.c.b16 %v124, %v123
  %157 = vmatprep.subr.bf16.mxu0 0
  %158 = vmatpush1.bf16.msra.mxu0 %v125
  %159 = vmatprep.subr.bf16.mxu0 0
  %160 = vmatpush1.bf16.msra.mxu0 %v126
  %161 = vmatprep.subr.bf16.mxu0 0
  %162 = vmatpush1.bf16.msra.mxu0 %v127
  %163 = vmatprep.subr.bf16.mxu0 0
  %164 = vmatpush1.bf16.msra.mxu0 %v128
  %165 = vmatprep.subr.bf16.mxu0 0
  %166 = vmatpush1.bf16.msra.mxu0 %v129
  %167 = vmatprep.subr.bf16.mxu0 0
  %168 = vmatpush1.bf16.msra.mxu0 %v130
  %169 = vmatprep.subr.bf16.mxu0 0
  %170 = vmatpush1.bf16.msra.mxu0 %v131
  %171 = vmatprep.subr.bf16.mxu0 0
  %172 = vmatpush1.bf16.msra.mxu0 %v132
  %173 = vmatprep.subr.bf16.mxu0 0
  %174 = vmatpush1.bf16.msra.mxu0 %v133
  %175 = vmatprep.subr.bf16.mxu0 0
  %176 = vmatpush1.bf16.msra.mxu0 %v134
  %177 = vmatprep.subr.bf16.mxu0 0
  %178 = vmatpush1.bf16.msra.mxu0 %v135
  %179 = vmatprep.subr.bf16.mxu0 0
  %180 = vmatpush1.bf16.msra.mxu0 %v136
  %181 = vmatprep.subr.bf16.mxu0 0
  %182 = vmatpush1.bf16.msra.mxu0 %v137
  %183 = vmatprep.subr.bf16.mxu0 0
  %184 = vmatpush1.bf16.msra.mxu0 %v138
  %185 = vmatprep.subr.bf16.mxu0 0
  %186 = vmatpush1.bf16.msra.mxu0 %v139
  %187 = vmatprep.subr.bf16.mxu0 0
  %188 = vmatpush1.bf16.msra.mxu0 %v140
  %189 = vmatprep.mubr.bf16.mxu0 %v58
  %190 = vmatmul.mubr.bf16.gmra.mrb[0].mxu0 %v57
  %v191 = vpop.f32.mrb[0].mxu0
  %v192 = vadd.f32 0.0, %v191
  %v193 = vpop.f32.mrb[0].mxu0
  %v194 = vpop.f32.mrb[0].mxu0
  %v195 = vpop.f32.mrb[0].mxu0
  %196 = vdwg.mxu0
  %v197 = vadd.f32 %v20, %v192
  %198 = vst [vmem:[#allocation2] sm:$0xff] %v197
  // Predicated region
  $region18: #{vautoencoder_forward.13} parent=0 // pred_check
    %p199 = pneg %p15
  $region19: #{vautoencoder_forward.13} parent=0 // pred_check_branch
    %201 = sbr.rel (%p199) target = $region21
  $region20: #{vautoencoder_forward.13} parent=0 // pred_region
    %v202 = vld [vmem:[#allocation2] sm:$0xff]
    %v203 = vld [vmem:[%s2] sm:$0x1]
    %v205 = vlaneseq
    %v206 = vshrl.u32 %v205, 7
    %v207 = vsub.s32 0, %v206
    %v208 = vrot.slane %v203, %v207
    %v210 = vadd.f32 %v202, %v208
    %v211 = vmax.f32 %v210, 0.0
    %v212 = vpack.c.bf16 %v211, %v211
    %213 = vst [vmem:[%s3] sm:$0xf] %v212
  $region21: #{vautoencoder_forward.13} parent=0 // pred_fallthru
    _
  // Predicated region
  $region22: #{vautoencoder_forward.13} parent=0 // pred_check
    _
  $region23: #{vautoencoder_forward.13} parent=0 // pred_check_branch
    %215 = sbr.rel (0) target = $region25
  $region24: #{vautoencoder_forward.13} parent=0 // pred_region
    _
  $region25: #{vautoencoder_forward.13} parent=0 // pred_fallthru
    _
  // Predicated region
  $region26: #{vautoencoder_forward.13} parent=0 // pred_check
    _
  $region27: #{vautoencoder_forward.13} parent=0 // pred_check_branch
    %217 = sbr.rel (0) target = $region29
  $region28: #{vautoencoder_forward.13} parent=0 // pred_region
    _
  $region29: #{vautoencoder_forward.13} parent=0 // pred_fallthru
    _

// kernel: vautoencoder_forward.14
$region0: #{vautoencoder_forward.14}
  #allocation0 [shape = 'u32[]', space=smem, size = 0x4, offset = 0x4, fixed_abs, tag = 'smem constant byte address 0x4 - core index']
  #allocation1 [shape = 'u32[144,128]{1,0:T(1,128)}', space=vmem, size = 0x12000, scoped, tag = 'internal scratch']
  #allocation2 [shape = 'f32[16,64]{1,0:T(8,128)}', space=vmem, size = 0x2000, scoped, tag = 'scratch operand']
  %s0 = inlined_call_operand.vmem [shape: bf16[32,128], index: 0, kind: input, shape index: {}]
  %s1 = inlined_call_operand.vmem [shape: bf16[128,64], index: 1, kind: input, shape index: {}]
  %s2 = inlined_call_operand.vmem [shape: f32[1,64], index: 2, kind: input, shape index: {}]
  %s3 = inlined_call_operand.vmem [shape: bf16[32,64], index: 3, kind: output, shape index: {}]
  %s4 = sld [smem:[#allocation0]]
  $region53: #{vautoencoder_forward.14} parent=0
    _
  %s6 = ssub.s32 1, %s4
  %s7 = scalar_select 0, %s6, %s4
  loop: start=0, step=1, limit=4
  $region2: #{vautoencoder_forward.14} parent=0 // loop_pre_header
    _
  $region3: #{vautoencoder_forward.14} parent=0 // loop_header
    %s9 = sphi 0, %s13
    %p10 = scmp.ge.s32.totalorder %s9, 4
    %s16 = sphi 0, %s28
    %s17 = sphi 0, %s24
    %s18 = sphi 0, %s16
    %s19 = sphi 0, %s17
    %s20 = sphi 0, %s18
    %s21 = sphi 0, %s19
    %s33 = sphi 0, %s35
    %s36 = sphi 0, %s33
    %s37 = sphi 0, %s36
    %s53 = sphi 0, %s37
    %s59 = sphi 0, %s61
    %s62 = sphi 0, %s59
    %s63 = sphi 0, %s62
    %s79 = sphi 0, %s63
    %s83 = sphi 0, %s83
    %s85 = sphi 0, %s83
    %s86 = sphi 0, %s85
    %s100 = sphi 0, %s86
    %s106 = sphi 0, %s108
    %s109 = sphi 0, %s106
    %s110 = sphi 0, %s109
    %s126 = sphi 0, %s110
  $region4: #{vautoencoder_forward.14} parent=0 // loop_header_branch
    %12 = sbr.rel (%p10) target = $region8
  $region5: #{vautoencoder_forward.14} parent=0 // loop_body
    %s14 = ssub.s32 %s9, 1
    %s15 = ssub.s32 %s9, 2
    %s22 = sadd.s32 1, %s17
    %p23 = scmp.ge.s32.totalorder %s22, 1
    %s24 = scalar_select %p23, 0, %s22
    %s25 = sadd.s32 1, %s16
    %s26 = scalar_select %p23, %s25, %s16
    %p27 = scmp.ge.s32.totalorder %s26, 2
    %s28 = scalar_select %p27, 0, %s26
    %s29 = ssub.s32 %s16, %s28
    %s30 = ssub.s32 %s17, %s24
    %s31 = sor.u32 %s29, %s30
    %p32 = scmp.eq.s32.totalorder %s31, 0
    %s34 = sadd.s32 %s33, 1
    %s35 = scalar_select %p32, %s33, %s34
    %p38 = pneg %p32
    %p39 = scmp.eq.s32.totalorder %s9, 1
    %p40 = por %p38, %p39
    %p41 = scmp.ne.s32.totalorder %s33, %s36
    %p42 = scmp.eq.s32.totalorder %s9, 0
    %p43 = por %p41, %p42
    %p44 = scmp.ne.s32.totalorder %s33, %s36
    %p45 = scmp.eq.s32.totalorder %s14, 1
    %p46 = por %p44, %p45
    %p47 = scmp.ne.s32.totalorder %s36, %s37
    %p48 = scmp.eq.s32.totalorder %s14, 0
    %p49 = por %p47, %p48
    %p50 = scmp.ne.s32.totalorder %s36, %s37
    %p51 = scmp.eq.s32.totalorder %s15, 1
    %p52 = por %p50, %p51
    %p54 = scmp.ne.s32.totalorder %s37, %s53
    %p55 = scmp.eq.s32.totalorder %s15, 0
    %p56 = por %p54, %p55
    %s57 = ssub.s32 %s17, %s24
    %p58 = scmp.eq.s32.totalorder %s57, 0
    %s60 = sadd.s32 %s59, 1
    %s61 = scalar_select %p58, %s59, %s60
    %p64 = pneg %p58
    %p65 = scmp.eq.s32.totalorder %s9, 1
    %p66 = por %p64, %p65
    %p67 = scmp.ne.s32.totalorder %s59, %s62
    %p68 = scmp.eq.s32.totalorder %s9, 0
    %p69 = por %p67, %p68
    %p70 = scmp.ne.s32.totalorder %s59, %s62
    %p71 = scmp.eq.s32.totalorder %s14, 1
    %p72 = por %p70, %p71
    %p73 = scmp.ne.s32.totalorder %s62, %s63
    %p74 = scmp.eq.s32.totalorder %s14, 0
    %p75 = por %p73, %p74
    %p76 = scmp.ne.s32.totalorder %s62, %s63
    %p77 = scmp.eq.s32.totalorder %s15, 1
    %p78 = por %p76, %p77
    %p80 = scmp.ne.s32.totalorder %s63, %s79
    %p81 = scmp.eq.s32.totalorder %s15, 0
    %p82 = por %p80, %p81
    %s84 = sadd.s32 %s83, 1
    %p87 = scmp.eq.s32.totalorder %s9, 1
    %p88 = scmp.ne.s32.totalorder %s83, %s85
    %p89 = scmp.eq.s32.totalorder %s9, 0
    %p90 = por %p88, %p89
    %p91 = scmp.ne.s32.totalorder %s83, %s85
    %p92 = scmp.eq.s32.totalorder %s14, 1
    %p93 = por %p91, %p92
    %p94 = scmp.ne.s32.totalorder %s85, %s86
    %p95 = scmp.eq.s32.totalorder %s14, 0
    %p96 = por %p94, %p95
    %p97 = scmp.ne.s32.totalorder %s85, %s86
    %p98 = scmp.eq.s32.totalorder %s15, 1
    %p99 = por %p97, %p98
    %p101 = scmp.ne.s32.totalorder %s86, %s100
    %p102 = scmp.eq.s32.totalorder %s15, 0
    %p103 = por %p101, %p102
    %s104 = ssub.s32 %s16, %s28
    %p105 = scmp.eq.s32.totalorder %s104, 0
    %s107 = sadd.s32 %s106, 1
    %s108 = scalar_select %p105, %s106, %s107
    %p111 = pneg %p105
    %p112 = scmp.eq.s32.totalorder %s9, 1
    %p113 = por %p111, %p112
    %p114 = scmp.ne.s32.totalorder %s106, %s109
    %p115 = scmp.eq.s32.totalorder %s9, 0
    %p116 = por %p114, %p115
    %p117 = scmp.ne.s32.totalorder %s106, %s109
    %p118 = scmp.eq.s32.totalorder %s14, 1
    %p119 = por %p117, %p118
    %p120 = scmp.ne.s32.totalorder %s109, %s110
    %p121 = scmp.eq.s32.totalorder %s14, 0
    %p122 = por %p120, %p121
    %p123 = scmp.ne.s32.totalorder %s109, %s110
    %p124 = scmp.eq.s32.totalorder %s15, 1
    %p125 = por %p123, %p124
    %p127 = scmp.ne.s32.totalorder %s110, %s126
    %p128 = scmp.eq.s32.totalorder %s15, 0
    %p129 = por %p127, %p128
    %p130 = scmp.le.s32.totalorder 1, %s9
    %p131 = scmp.lt.s32.totalorder %s9, 3
    %p132 = pnand %p130, %p131
    %p133 = pneg %p132
    // Predicated region
    $region9: #{vautoencoder_forward.14} parent=5 // pred_check
      _
    $region10: #{vautoencoder_forward.14} parent=5 // pred_check_branch
      %135 = sbr.rel (%p132) target = $region12
    $region11: #{vautoencoder_forward.14} parent=5 // pred_region
      %s136 = ssub.s32 %s9, 1
      // Predicated region
      $region13: #{vautoencoder_forward.14} parent=11 // pred_check
        %p137 = pneg %p75
      $region14: #{vautoencoder_forward.14} parent=11 // pred_check_branch
        %139 = sbr.rel (%p137) target = $region16
      $region15: #{vautoencoder_forward.14} parent=11 // pred_region
        %s140 = smul.u32 16, %s19
        %p141 = scmp.lt.s32.totalorder %s140, 15
        %s142 = scalar_select %p141, %s140, 15
        %s143 = smul.addr %s142, 4
        %s144 = scalar_lea.vmem %s1, %s143
        %s145 = smul.u32 16, %s19
      $region16: #{vautoencoder_forward.14} parent=11 // pred_fallthru
        _
      // Predicated region
      $region17: #{vautoencoder_forward.14} parent=11 // pred_check
        %p146 = pneg %p96
      $region18: #{vautoencoder_forward.14} parent=11 // pred_check_branch
        %148 = sbr.rel (%p146) target = $region20
      $region19: #{vautoencoder_forward.14} parent=11 // pred_region
        _
      $region20: #{vautoencoder_forward.14} parent=11 // pred_fallthru
        _
    $region12: #{vautoencoder_forward.14} parent=5 // pred_fallthru
      _
    %p149 = scmp.lt.s32.totalorder %s9, 2
    // Predicated region
    $region21: #{vautoencoder_forward.14} parent=5 // pred_check
      %p150 = pneg %p149
    $region22: #{vautoencoder_forward.14} parent=5 // pred_check_branch
      %152 = sbr.rel (%p150) target = $region24
    $region23: #{vautoencoder_forward.14} parent=5 // pred_region
      // Predicated region
      $region25: #{vautoencoder_forward.14} parent=23 // pred_check
        %p153 = pneg %p43
      $region26: #{vautoencoder_forward.14} parent=23 // pred_check_branch
        %155 = sbr.rel (%p153) target = $region28
      $region27: #{vautoencoder_forward.14} parent=23 // pred_region
        %s156 = smul.u32 2, %s16
        %p157 = scmp.lt.s32.totalorder %s156, 3
        %s158 = scalar_select %p157, %s156, 3
        %p159 = scmp.lt.s32.totalorder %s17, 0
        %s160 = scalar_select %p159, %s17, 0
        %s161 = sadd.s32 %s160, %s158
        %s162 = smul.addr %s161, 4
        %s163 = scalar_lea.vmem %s0, %s162
        %s164 = smul.u32 2, %s16
      $region28: #{vautoencoder_forward.14} parent=23 // pred_fallthru
        _
    $region24: #{vautoencoder_forward.14} parent=5 // pred_fallthru
      _
    %p165 = scmp.le.s32.totalorder 1, %s9
    %p166 = scmp.lt.s32.totalorder %s9, 3
    %p167 = pnand %p165, %p166
    %p168 = pneg %p167
    // Predicated region
    $region29: #{vautoencoder_forward.14} parent=5 // pred_check
      _
    $region30: #{vautoencoder_forward.14} parent=5 // pred_check_branch
      %170 = sbr.rel (%p167) target = $region32
    $region31: #{vautoencoder_forward.14} parent=5 // pred_region
      %s171 = ssub.s32 %s9, 1
      %s172 = smul.u32 2, %s18
      %p173 = scmp.lt.s32.totalorder %s172, 3
      %s174 = scalar_select %p173, %s172, 3
      %p175 = scmp.lt.s32.totalorder %s19, 0
      %s176 = scalar_select %p175, %s19, 0
      %s177 = sadd.s32 %s176, %s174
      %s178 = smul.addr %s177, 4
      %s179 = scalar_lea.vmem %s0, %s178
      %p180 = pneg %p49
      %p181 = pneg %p46
      %s182 = smul.u32 16, %s19
      %p183 = scmp.lt.s32.totalorder %s182, 15
      %s184 = scalar_select %p183, %s182, 15
      %s185 = smul.addr %s184, 4
      %s186 = scalar_lea.vmem %s1, %s185
      %p187 = pneg %p75
      %p188 = pneg %p72
      %p189 = pneg %p96
      %p190 = pneg %p93
      %p191 = pneg %p122
      %p192 = pneg %p119
      %s193 = smul.u32 2, %s18
      %p194 = scmp.lt.s32.totalorder %s193, 3
      %s195 = scalar_select %p194, %s193, 3
      %s196 = smul.addr %s195, 4
      %s197 = scalar_lea.vmem %s3, %s196
      %s198 = smul.u32 2, %s18
      %p199 = scmp.lt.s32.totalorder %s198, 3
      %s200 = scalar_select %p199, %s198, 3
      %p201 = scmp.lt.s32.totalorder %s19, 0
      %s202 = scalar_select %p201, %s19, 0
      %s203 = sadd.s32 %s202, %s200
      %s204 = smul.addr %s203, 4
      %s205 = scalar_lea.vmem %s0, %s204
      %s206 = smul.u32 2, %s18
      %s207 = smul.u32 16, %s19
      %p208 = scmp.lt.s32.totalorder %s207, 15
      %s209 = scalar_select %p208, %s207, 15
      %s210 = smul.addr %s209, 4
      %s211 = scalar_lea.vmem %s1, %s210
      %s212 = smul.u32 16, %s19
      %s213 = smul.u32 2, %s18
      %p214 = scmp.lt.s32.totalorder %s213, 3
      %s215 = scalar_select %p214, %s213, 3
      %s216 = smul.addr %s215, 4
      %s217 = scalar_lea.vmem %s3, %s216
      %s218 = smul.u32 2, %s18
      %p220 = scmp.eq.s32.totalorder %s19, 0
      // Predicated region
      $region33: #{vautoencoder_forward.14} parent=31 // pred_check
        %p221 = pneg %p220
      $region34: #{vautoencoder_forward.14} parent=31 // pred_check_branch
        %223 = sbr.rel (%p221) target = $region36
      $region35: #{vautoencoder_forward.14} parent=31 // pred_region
        %vm224 = vcmask 523264
        %225 = vst.msk [vmem:[#allocation2] sm:$0xff] %vm224, 0.0
        %226 = vst.msk [vmem:[#allocation2 + $0x8] sm:$0xff] %vm224, 0.0
      $region36: #{vautoencoder_forward.14} parent=31 // pred_fallthru
        _
      %v227 = vld [vmem:[#allocation2] sm:$0xff]
      %v228 = vld [vmem:[#allocation2 + $0x8] sm:$0xff]
      %v229 = vld [vmem:[%s205] sm:$0xf]
      %v230 = vld [vmem:[%s205 + $0x4] sm:$0xf]
      %v231 = vld [vmem:[%s211] sm:$0xf]
      %v232 = vld [vmem:[%s211 + $0x4] sm:$0xf]
      %v233 = vld [vmem:[%s211 + $0x8] sm:$0xf]
      %v234 = vld [vmem:[%s211 + $0xc] sm:$0xf]
      %v235 = vld [vmem:[%s211 + $0x10] sm:$0xf]
      %v236 = vld [vmem:[%s211 + $0x14] sm:$0xf]
      %v237 = vld [vmem:[%s211 + $0x18] sm:$0xf]
      %v238 = vld [vmem:[%s211 + $0x1c] sm:$0xf]
      %v239 = vld [vmem:[%s211 + $0x20] sm:$0xf]
      %v240 = vld [vmem:[%s211 + $0x24] sm:$0xf]
      %v241 = vld [vmem:[%s211 + $0x28] sm:$0xf]
      %v242 = vld [vmem:[%s211 + $0x2c] sm:$0xf]
      %v243 = vld [vmem:[%s211 + $0x30] sm:$0xf]
      %v244 = vld [vmem:[%s211 + $0x34] sm:$0xf]
      %v245 = vld [vmem:[%s211 + $0x38] sm:$0xf]
      %v246 = vld [vmem:[%s211 + $0x3c] sm:$0xf]
      %v249 = vunpack.c.l.b16 %v229
      %v250 = vunpack.c.l.b16 %v230
      %v251 = vpack.c.b16 %v250, %v249
      %v269 = vunpack.c.l.b16 %v231
      %v270 = vunpack.c.l.b16 %v232
      %v271 = vunpack.c.l.b16 %v233
      %v272 = vunpack.c.l.b16 %v234
      %v273 = vunpack.c.l.b16 %v235
      %v274 = vunpack.c.l.b16 %v236
      %v275 = vunpack.c.l.b16 %v237
      %v276 = vunpack.c.l.b16 %v238
      %v277 = vunpack.c.l.b16 %v239
      %v278 = vunpack.c.l.b16 %v240
      %v279 = vunpack.c.l.b16 %v241
      %v280 = vunpack.c.l.b16 %v242
      %v281 = vunpack.c.l.b16 %v243
      %v282 = vunpack.c.l.b16 %v244
      %v283 = vunpack.c.l.b16 %v245
      %v284 = vunpack.c.l.b16 %v246
      %v285 = vpack.c.b16 %v270, %v269
      %v286 = vpack.c.b16 %v272, %v271
      %v287 = vpack.c.b16 %v274, %v273
      %v288 = vpack.c.b16 %v276, %v275
      %v289 = vpack.c.b16 %v278, %v277
      %v290 = vpack.c.b16 %v280, %v279
      %v291 = vpack.c.b16 %v282, %v281
      %v292 = vpack.c.b16 %v284, %v283
      %301 = vmatprep.subr.bf16.mxu0 0
      %302 = vmatpush1.bf16.msra.mxu0 %v285
      %303 = vmatprep.subr.bf16.mxu0 0
      %304 = vmatpush1.bf16.msra.mxu0 %v286
      %305 = vmatprep.subr.bf16.mxu0 0
      %306 = vmatpush1.bf16.msra.mxu0 %v287
      %307 = vmatprep.subr.bf16.mxu0 0
      %308 = vmatpush1.bf16.msra.mxu0 %v288
      %309 = vmatprep.subr.bf16.mxu0 0
      %310 = vmatpush1.bf16.msra.mxu0 %v289
      %311 = vmatprep.subr.bf16.mxu0 0
      %312 = vmatpush1.bf16.msra.mxu0 %v290
      %313 = vmatprep.subr.bf16.mxu0 0
      %314 = vmatpush1.bf16.msra.mxu0 %v291
      %315 = vmatprep.subr.bf16.mxu0 0
      %316 = vmatpush1.bf16.msra.mxu0 %v292
      %317 = vmatprep.subr.bf16.mxu0 0
      %318 = vmatpush1.bf16.msra.mxu0 0
      %319 = vmatprep.subr.bf16.mxu0 0
      %320 = vmatpush1.bf16.msra.mxu0 0
      %321 = vmatprep.subr.bf16.mxu0 0
      %322 = vmatpush1.bf16.msra.mxu0 0
      %323 = vmatprep.subr.bf16.mxu0 0
      %324 = vmatpush1.bf16.msra.mxu0 0
      %325 = vmatprep.subr.bf16.mxu0 0
      %326 = vmatpush1.bf16.msra.mxu0 0
      %327 = vmatprep.subr.bf16.mxu0 0
      %328 = vmatpush1.bf16.msra.mxu0 0
      %329 = vmatprep.subr.bf16.mxu0 0
      %330 = vmatpush1.bf16.msra.mxu0 0
      %331 = vmatprep.subr.bf16.mxu0 0
      %332 = vmatpush1.bf16.msra.mxu0 0
      %333 = vmatprep.mubr.bf16.mxu0 0
      %334 = vmatmul.mubr.bf16.gmra.mrb[0].mxu0 %v251
      %v335 = vpop.f32.mrb[0].mxu0
      %v336 = vadd.f32 0.0, %v335
      %v337 = vpop.f32.mrb[0].mxu0
      %v338 = vpop.f32.mrb[0].mxu0
      %v339 = vadd.f32 0.0, %v338
      %v340 = vpop.f32.mrb[0].mxu0
      %341 = vdwg.mxu0
      %v342 = vadd.f32 %v227, %v336
      %v343 = vadd.f32 %v228, %v339
      %vm344 = vcmask 523264
      %345 = vst.msk [vmem:[#allocation2] sm:$0xff] %vm344, %v342
      %346 = vst.msk [vmem:[#allocation2 + $0x8] sm:$0xff] %vm344, %v343
      // Predicated region
      $region37: #{vautoencoder_forward.14} parent=31 // pred_check
        %p347 = pneg %p220
      $region38: #{vautoencoder_forward.14} parent=31 // pred_check_branch
        %349 = sbr.rel (%p347) target = $region40
      $region39: #{vautoencoder_forward.14} parent=31 // pred_region
        %v350 = vld [vmem:[#allocation2] sm:$0xff]
        %v351 = vld [vmem:[#allocation2 + $0x8] sm:$0xff]
        %v352 = vld [vmem:[%s2] sm:$0x1]
        %v354 = vlaneseq
        %v355 = vshrl.u32 %v354, 7
        %v356 = vsub.s32 0, %v355
        %v357 = vrot.slane %v352, %v356
        %v359 = vadd.f32 %v350, %v357
        %v360 = vadd.f32 %v351, %v357
        %v361 = vmax.f32 %v359, 0.0
        %v362 = vmax.f32 %v360, 0.0
        %v363 = vpack.c.bf16 %v362, %v361
        %v365 = vunpack.c.l.b16 %v363
        %v366 = vunpack.c.h.b16 %v363
        %v367 = vpack.c.b16 %v365, %v365
        %v368 = vpack.c.b16 %v366, %v366
        %vm371 = vcmask 519168
        %372 = vst.msk [vmem:[%s217] sm:$0xf] %vm371, %v367
        %373 = vst.msk [vmem:[%s217 + $0x4] sm:$0xf] %vm371, %v368
      $region40: #{vautoencoder_forward.14} parent=31 // pred_fallthru
        _
      %s374 = smul.u32 2, %s18
      %p375 = scmp.lt.s32.totalorder %s374, 3
      %s376 = scalar_select %p375, %s374, 3
      %s377 = smul.addr %s376, 4
      %s378 = scalar_lea.vmem %s3, %s377
      // Predicated region
      $region41: #{vautoencoder_forward.14} parent=31 // pred_check
        %p379 = pneg %p119
      $region42: #{vautoencoder_forward.14} parent=31 // pred_check_branch
        %381 = sbr.rel (%p379) target = $region44
      $region43: #{vautoencoder_forward.14} parent=31 // pred_region
        %s382 = smul.u32 2, %s18
      $region44: #{vautoencoder_forward.14} parent=31 // pred_fallthru
        _
    $region32: #{vautoencoder_forward.14} parent=5 // pred_fallthru
      _
    %p383 = scmp.le.s32.totalorder 2, %s9
    // Predicated region
    $region45: #{vautoencoder_forward.14} parent=5 // pred_check
      %p384 = pneg %p383
    $region46: #{vautoencoder_forward.14} parent=5 // pred_check_branch
      %386 = sbr.rel (%p384) target = $region48
    $region47: #{vautoencoder_forward.14} parent=5 // pred_region
      %s387 = ssub.s32 %s9, 2
      // Predicated region
      $region49: #{vautoencoder_forward.14} parent=47 // pred_check
        %p388 = pneg %p125
      $region50: #{vautoencoder_forward.14} parent=47 // pred_check_branch
        %390 = sbr.rel (%p388) target = $region52
      $region51: #{vautoencoder_forward.14} parent=47 // pred_region
        %s391 = smul.u32 2, %s20
        %p392 = scmp.lt.s32.totalorder %s391, 3
        %s393 = scalar_select %p392, %s391, 3
        %s394 = smul.addr %s393, 4
        %s395 = scalar_lea.vmem %s3, %s394
      $region52: #{vautoencoder_forward.14} parent=47 // pred_fallthru
        _
    $region48: #{vautoencoder_forward.14} parent=5 // pred_fallthru
      _
  $region6: #{vautoencoder_forward.14} parent=0 // loop_footer
    %s13 = sadd.s32 1, %s9
  $region7: #{vautoencoder_forward.14} parent=0 // loop_footer_branch
    %8 = sbr.rel target = $region3
  $region8: #{vautoencoder_forward.14} parent=0 // loop_exit
    _

// kernel: vautoencoder_forward.15
$region0: #{vautoencoder_forward.15}
  #allocation0 [shape = 'u32[]', space=smem, size = 0x4, offset = 0x4, fixed_abs, tag = 'smem constant byte address 0x4 - core index']
  #allocation1 [shape = 'u32[144,128]{1,0:T(1,128)}', space=vmem, size = 0x12000, scoped, tag = 'internal scratch']
  %s0 = inlined_call_operand.vmem [shape: bf16[16,64], index: 0, kind: input, shape index: {}]
  %s1 = inlined_call_operand.vmem [shape: bf16[64,128], index: 1, kind: input, shape index: {}]
  %s2 = inlined_call_operand.vmem [shape: f32[16,1], index: 2, kind: input, shape index: {}]
  %s3 = inlined_call_operand.vmem [shape: f32[16,128], index: 3, kind: output, shape index: {}]
  %s4 = sld [smem:[#allocation0]]
  $region22: #{vautoencoder_forward.15} parent=0
    _
  %s6 = ssub.s32 1, %s4
  %s7 = scalar_select 0, %s6, %s4
  // Predicated region
  $region2: #{vautoencoder_forward.15} parent=0 // pred_check
    _
  $region3: #{vautoencoder_forward.15} parent=0 // pred_check_branch
    %9 = sbr.rel (0) target = $region5
  $region4: #{vautoencoder_forward.15} parent=0 // pred_region
    _
  $region5: #{vautoencoder_forward.15} parent=0 // pred_fallthru
    _
  // Predicated region
  $region6: #{vautoencoder_forward.15} parent=0 // pred_check
    _
  $region7: #{vautoencoder_forward.15} parent=0 // pred_check_branch
    %11 = sbr.rel (0) target = $region9
  $region8: #{vautoencoder_forward.15} parent=0 // pred_region
    _
  $region9: #{vautoencoder_forward.15} parent=0 // pred_fallthru
    _
  // Predicated region
  $region10: #{vautoencoder_forward.15} parent=0 // pred_check
    _
  $region11: #{vautoencoder_forward.15} parent=0 // pred_check_branch
    %13 = sbr.rel (0) target = $region13
  $region12: #{vautoencoder_forward.15} parent=0 // pred_region
    _
  $region13: #{vautoencoder_forward.15} parent=0 // pred_fallthru
    _
  %v15 = vld [vmem:[%s0] sm:$0xf]
  %v16 = vld [vmem:[%s0 + $0x4] sm:$0xf]
  %v17 = vld [vmem:[%s1] sm:$0xf]
  %v18 = vld [vmem:[%s1 + $0x4] sm:$0xf]
  %v19 = vld [vmem:[%s1 + $0x8] sm:$0xf]
  %v20 = vld [vmem:[%s1 + $0xc] sm:$0xf]
  %v21 = vld [vmem:[%s1 + $0x10] sm:$0xf]
  %v22 = vld [vmem:[%s1 + $0x14] sm:$0xf]
  %v23 = vld [vmem:[%s1 + $0x18] sm:$0xf]
  %v24 = vld [vmem:[%s1 + $0x1c] sm:$0xf]
  %v25 = vld [vmem:[%s2] sm:$0xff]
  %v26 = vld [vmem:[%s2 + $0x8] sm:$0xff]
  %28 = vset.pattern.permute.xlu0 0
  %29 = vperm.xlu0 %28, %v25
  %v30 = vpop.permute.xlu0 %29
  %33 = vset.pattern.permute.xlu0 0
  %34 = vperm.xlu0 %33, %v26
  %v35 = vpop.permute.xlu0 %34
  %v39 = vunpack.c.l.b16 %v15
  %v40 = vunpack.c.l.b16 %v16
  %v41 = vpack.c.b16 %v40, %v39
  %v50 = vunpack.c.l.b16 %v17
  %v51 = vunpack.c.l.b16 %v18
  %v52 = vunpack.c.l.b16 %v19
  %v53 = vunpack.c.l.b16 %v20
  %v54 = vunpack.c.l.b16 %v21
  %v55 = vunpack.c.l.b16 %v22
  %v56 = vunpack.c.l.b16 %v23
  %v57 = vunpack.c.l.b16 %v24
  %v58 = vpack.c.b16 %v51, %v50
  %v59 = vpack.c.b16 %v53, %v52
  %v60 = vpack.c.b16 %v55, %v54
  %v61 = vpack.c.b16 %v57, %v56
  %vm66 = vcmask 523264
  %v68 = vsel %vm66, %v41, 0
  %70 = vmatprep.subr.bf16.mxu0 0
  %71 = vmatpush1.bf16.msra.mxu0 %v58
  %72 = vmatprep.subr.bf16.mxu0 0
  %73 = vmatpush1.bf16.msra.mxu0 %v59
  %74 = vmatprep.subr.bf16.mxu0 0
  %75 = vmatpush1.bf16.msra.mxu0 %v60
  %76 = vmatprep.subr.bf16.mxu0 0
  %77 = vmatpush1.bf16.msra.mxu0 %v61
  %78 = vmatprep.subr.bf16.mxu0 0
  %79 = vmatpush1.bf16.msra.mxu0 0
  %80 = vmatprep.subr.bf16.mxu0 0
  %81 = vmatpush1.bf16.msra.mxu0 0
  %82 = vmatprep.subr.bf16.mxu0 0
  %83 = vmatpush1.bf16.msra.mxu0 0
  %84 = vmatprep.subr.bf16.mxu0 0
  %85 = vmatpush1.bf16.msra.mxu0 0
  %86 = vmatprep.subr.bf16.mxu0 0
  %87 = vmatpush1.bf16.msra.mxu0 0
  %88 = vmatprep.subr.bf16.mxu0 0
  %89 = vmatpush1.bf16.msra.mxu0 0
  %90 = vmatprep.subr.bf16.mxu0 0
  %91 = vmatpush1.bf16.msra.mxu0 0
  %92 = vmatprep.subr.bf16.mxu0 0
  %93 = vmatpush1.bf16.msra.mxu0 0
  %94 = vmatprep.subr.bf16.mxu0 0
  %95 = vmatpush1.bf16.msra.mxu0 0
  %96 = vmatprep.subr.bf16.mxu0 0
  %97 = vmatpush1.bf16.msra.mxu0 0
  %98 = vmatprep.subr.bf16.mxu0 0
  %99 = vmatpush1.bf16.msra.mxu0 0
  %100 = vmatprep.subr.bf16.mxu0 0
  %101 = vmatpush1.bf16.msra.mxu0 0
  %102 = vmatprep.mubr.bf16.mxu0 0
  %103 = vmatmul.mubr.bf16.gmra.mrb[0].mxu0 %v68
  %v104 = vpop.f32.mrb[0].mxu0
  %v105 = vadd.f32 %v30, %v104
  %v106 = vpop.f32.mrb[0].mxu0
  %v107 = vpop.f32.mrb[0].mxu0
  %v108 = vadd.f32 %v35, %v107
  %v109 = vpop.f32.mrb[0].mxu0
  %110 = vdwg.mxu0
  %111 = vst [vmem:[%s3] sm:$0xff] %v105
  %112 = vst [vmem:[%s3 + $0x8] sm:$0xff] %v108
  // Predicated region
  $region14: #{vautoencoder_forward.15} parent=0 // pred_check
    _
  $region15: #{vautoencoder_forward.15} parent=0 // pred_check_branch
    %114 = sbr.rel (0) target = $region17
  $region16: #{vautoencoder_forward.15} parent=0 // pred_region
    _
  $region17: #{vautoencoder_forward.15} parent=0 // pred_fallthru
    _
  // Predicated region
  $region18: #{vautoencoder_forward.15} parent=0 // pred_check
    _
  $region19: #{vautoencoder_forward.15} parent=0 // pred_check_branch
    %116 = sbr.rel (0) target = $region21
  $region20: #{vautoencoder_forward.15} parent=0 // pred_region
    _
  $region21: #{vautoencoder_forward.15} parent=0 // pred_fallthru
    _

</llo_original>
